<compile_context>
chip_gen: v5e
topology: v5e:2x2
jax: 0.10.0
libtpu: 0.0.40
codegen_flags: <defaults>
</compile_context>

<pallas_src>
import math

import jax
import jax.numpy as jnp
from jax.experimental import pallas as pl
from jax.experimental.pallas import tpu as pltpu


def _rpad(n, m=8):
    return ((n + m - 1) // m) * m


def _pad2d(a, rows, cols):
    r, c = a.shape
    return jnp.pad(a, ((0, rows - r), (0, cols - c)))


# ----------------------------------------------------------------------------
# Fused Pallas kernel
# ----------------------------------------------------------------------------
def _make_fused_kernel(B, T, H, Hp, lstm_in_pads, tail_rows):
    """LSTM stack -> (ReLU -> Linear)*tail -> pred = t0*exp(t1), one kernel."""
    num_layers = len(lstm_in_pads)
    tail_length = len(tail_rows)
    G = 4 * Hp

    def kernel(*refs):
        x_ref = refs[0]                                  # (T, B, in_pad0)
        lstm_refs = refs[1:1 + num_layers]               # packed per-layer params
        tail_ref = refs[1 + num_layers]                  # packed tail params
        o_ref = refs[2 + num_layers]                     # (B*T, 1)
        hs_ref = refs[3 + num_layers]                    # scratch (T, B, H)

        for layer in range(num_layers):
            p_ref = lstm_refs[layer]
            in_pad = lstm_in_pads[layer]

            # Static, 8-aligned row slices of the packed parameter block.
            wih = p_ref[0:in_pad, :]                     # (in_pad, 4Hp)
            whh = p_ref[in_pad:in_pad + Hp, :]           # (Hp, 4Hp), rows H:Hp are 0
            bias = p_ref[in_pad + Hp:in_pad + Hp + 1, :]  # (1, 4Hp)

            if layer == 0:
                seq = x_ref[...]                         # (T, B, in_pad)
            else:
                seq = hs_ref[...]                        # (T, B, H)
                if in_pad != H:                          # static; no-op here
                    seq = jnp.concatenate(
                        [seq, jnp.zeros((T, B, in_pad - H), jnp.float32)], axis=-1)

            # Hoisted input projection: ONE MXU call covering all T steps.
            xk = seq.reshape(T * B, in_pad)
            x_proj = jnp.dot(xk, wih, preferred_element_type=jnp.float32) + bias
            x_proj = x_proj.reshape(T, B, G)             # leading-index per-step access

            h = jnp.zeros((B, Hp), jnp.float32)
            c = jnp.zeros((B, Hp), jnp.float32)
            # Fully unrolled recurrence (static T). Only h @ whh + gate elementwise
            # math is on the serial path; all gate slices below are 128-lane aligned.
            for t in range(T):
                gates = x_proj[t] + jnp.dot(h, whh,
                                            preferred_element_type=jnp.float32)
                i_g = jax.nn.sigmoid(gates[:, 0 * Hp:1 * Hp])   # input gate
                f_g = jax.nn.sigmoid(gates[:, 1 * Hp:2 * Hp])   # forget gate
                g_g = jnp.tanh(gates[:, 2 * Hp:3 * Hp])         # cell candidate
                o_g = jax.nn.sigmoid(gates[:, 3 * Hp:4 * Hp])   # output gate
                c = f_g * c + i_g * g_g
                h = o_g * jnp.tanh(c)
                hs_ref[t] = h[:, :H]                     # cheap vst, off the dep chain

        # torch: lstm_out (B, T, H).reshape(-1, H) -> row index b*T + t.
        # Single t-major -> b-major relayout for the whole network.
        lstm_out = jnp.stack([hs_ref[t] for t in range(T)], axis=1).reshape(B * T, H)

        out = lstm_out
        off = 0
        for i in range(tail_length):
            rows = tail_rows[i]
            w = tail_ref[off:off + rows, :]              # (rows, col_w), zero-padded
            b = tail_ref[off + rows:off + rows + 1, :]   # (1, col_w)
            off += rows + 8
            a = jnp.maximum(out, 0.0)                    # ReLU precedes every Linear
            k = a.shape[1]
            if k < rows:                                 # static; no-op in this config
                a = jnp.concatenate(
                    [a, jnp.zeros((a.shape[0], rows - k), jnp.float32)], axis=-1)
            elif k > rows:
                a = a[:, :rows]
            out = jnp.dot(a, w, preferred_element_type=jnp.float32) + b

        # pred = tail[:, [0]] * exp(tail[:, [1]]) — fused epilogue, single HBM store.
        o_ref[...] = (out[:, 0:1] * jnp.exp(out[:, 1:2])).astype(o_ref.dtype)

    return kernel


# ----------------------------------------------------------------------------
# Host-side parameter packing
# ----------------------------------------------------------------------------
def _pack_lstm_layer(w_ih, w_hh, b_ih, b_hh, H, Hp, in_dim, in_pad):
    """Pack one layer's params into a single (in_pad + Hp + 8, 4*Hp) array.

    Gate k (PyTorch order i, f, g, o) occupies lane columns [k*Hp, k*Hp + H);
    all padding rows/columns are zero.
    """
    w_ih = jnp.asarray(w_ih, jnp.float32)                 # (4H, in)
    w_hh = jnp.asarray(w_hh, jnp.float32)                 # (4H, H)
    b = jnp.asarray(b_ih, jnp.float32) + jnp.asarray(b_hh, jnp.float32)

    wih_blocks, whh_blocks, b_blocks = [], [], []
    for k in range(4):
        wih_blocks.append(_pad2d(w_ih[k * H:(k + 1) * H, :].T, in_dim, Hp))
        whh_blocks.append(_pad2d(w_hh[k * H:(k + 1) * H, :].T, H, Hp))
        b_blocks.append(jnp.pad(b[k * H:(k + 1) * H], (0, Hp - H)))

    wih_p = _pad2d(jnp.concatenate(wih_blocks, axis=1), in_pad, 4 * Hp)
    whh_p = _pad2d(jnp.concatenate(whh_blocks, axis=1), Hp, 4 * Hp)
    bias_p = _pad2d(jnp.concatenate(b_blocks).reshape(1, 4 * Hp), 8, 4 * Hp)
    return jnp.concatenate([wih_p, whh_p, bias_p], axis=0)


def _pack_tail(tail_params, H, col_w):
    """Pack all tail (W, b) pairs into one (sum_i rows_i + 8*len, col_w) array."""
    blocks, rows_list = [], []
    for i, (w, bias) in enumerate(tail_params):
        w = jnp.asarray(w, jnp.float32)                   # (out, in)
        bias = jnp.asarray(bias, jnp.float32)
        rows = _rpad(H) if i == 0 else col_w
        blocks.append(_pad2d(w.T, rows, col_w))           # real at [:in, :out]
        blocks.append(_pad2d(bias.reshape(1, -1), 8, col_w))
        rows_list.append(rows)
    return jnp.concatenate(blocks, axis=0), rows_list


# ----------------------------------------------------------------------------
# Wrapper
# ----------------------------------------------------------------------------
def forward_pallas(x_in, lstm_params, tail_params):
    """x_in: (B, T, input_size), batch_first — same as the torch module."""
    x_in = jnp.asarray(x_in, jnp.float32)
    B, T, input_size = x_in.shape
    num_layers = len(lstm_params)
    H = jnp.asarray(lstm_params[0][1]).shape[1]           # w_hh: (4H, H)
    Hp = _rpad(H, 128)                                    # per-gate lane block width

    lstm_in_dims = [input_size] + [H] * (num_layers - 1)
    lstm_in_pads = [_rpad(d) for d in lstm_in_dims]

    col_w = _rpad(max(jnp.asarray(w).shape[0] for (w, _) in tail_params))

    # Input fed in (T, B, in_pad0) order so the per-step access inside the kernel is a
    # contiguous leading-index load; pad columns are zero (matching zero wih rows).
    x_p = jnp.swapaxes(x_in, 0, 1)
    if lstm_in_pads[0] != input_size:
        x_p = jnp.pad(x_p, ((0, 0), (0, 0), (0, lstm_in_pads[0] - input_size)))

    args = [x_p]
    for layer, (w_ih, w_hh, b_ih, b_hh) in enumerate(lstm_params):
        args.append(_pack_lstm_layer(w_ih, w_hh, b_ih, b_hh, H, Hp,
                                     lstm_in_dims[layer], lstm_in_pads[layer]))
    tail_packed, tail_rows = _pack_tail(tail_params, H, col_w)
    args.append(tail_packed)

    vmem_spec = pl.BlockSpec(memory_space=pltpu.MemorySpace.VMEM)
    kernel = _make_fused_kernel(B, T, H, Hp, lstm_in_pads, tail_rows)
    return pl.pallas_call(
        kernel,
        out_shape=jax.ShapeDtypeStruct((B * T, 1), jnp.float32),
        in_specs=[vmem_spec] * len(args),
        out_specs=vmem_spec,
        scratch_shapes=[pltpu.VMEM((T, B, H), jnp.float32)],
    )(*args)


# ----------------------------------------------------------------------------
# Pure-JAX reference (correctness check; original PyTorch gate order/layout)
# ----------------------------------------------------------------------------
def forward_ref(x_in, lstm_params, tail_params):
    B, T, _ = x_in.shape
    seq = x_in.astype(jnp.float32)
    for (w_ih, w_hh, b_ih, b_hh) in lstm_params:
        H = w_hh.shape[1]
        h0 = jnp.zeros((B, H), jnp.float32)
        c0 = jnp.zeros((B, H), jnp.float32)

        def step(carry, x_t, w_ih=w_ih, w_hh=w_hh, b_ih=b_ih, b_hh=b_hh, H=H):
            h, c = carry
            g = x_t @ w_ih.T + h @ w_hh.T + b_ih + b_hh
            i = jax.nn.sigmoid(g[:, :H])
            f = jax.nn.sigmoid(g[:, H:2 * H])
            gg = jnp.tanh(g[:, 2 * H:3 * H])
            o = jax.nn.sigmoid(g[:, 3 * H:])
            c = f * c + i * gg
            h = o * jnp.tanh(c)
            return (h, c), h

        _, hs = jax.lax.scan(step, (h0, c0), jnp.swapaxes(seq, 0, 1))
        seq = jnp.swapaxes(hs, 0, 1)

    out = seq.reshape(-1, seq.shape[-1])
    for (w, b) in tail_params:
        out = jnp.maximum(out, 0.0) @ w.T + b
    return out[:, 0:1] * jnp.exp(out[:, 1:2])


# ----------------------------------------------------------------------------
# Deterministic parameter init (PyTorch-style uniform bounds)
# ----------------------------------------------------------------------------
def init_params(key, input_size, hidden_size, num_layers, nn_inter_dim,
                tail_length, num_classes=2):
    lstm_params = []
    k_lstm = 1.0 / math.sqrt(hidden_size)
    for layer in range(num_layers):
        in_size = input_size if layer == 0 else hidden_size
        key, k1, k2, k3, k4 = jax.random.split(key, 5)
        w_ih = jax.random.uniform(k1, (4 * hidden_size, in_size),
                                  jnp.float32, -k_lstm, k_lstm)
        w_hh = jax.random.uniform(k2, (4 * hidden_size, hidden_size),
                                  jnp.float32, -k_lstm, k_lstm)
        b_ih = jax.random.uniform(k3, (4 * hidden_size,), jnp.float32, -k_lstm, k_lstm)
        b_hh = jax.random.uniform(k4, (4 * hidden_size,), jnp.float32, -k_lstm, k_lstm)
        lstm_params.append((w_ih, w_hh, b_ih, b_hh))

    tail_params = []
    for i_layer in range(tail_length):
        in_size = hidden_size if i_layer == 0 else nn_inter_dim
        out_size = num_classes if i_layer == tail_length - 1 else nn_inter_dim
        k_lin = 1.0 / math.sqrt(in_size)
        key, k1, k2 = jax.random.split(key, 3)
        w = jax.random.uniform(k1, (out_size, in_size), jnp.float32, -k_lin, k_lin)
        b = jax.random.uniform(k2, (out_size,), jnp.float32, -k_lin, k_lin)
        tail_params.append((w, b))
    return lstm_params, tail_params


if __name__ == "__main__":
    # Small shapes consistent with the module's forward.
    B, T = 2, 8
    input_size, hidden_size, num_layers = 4, 32, 2
    nn_inter_dim, tail_length = 16, 2

    key = jax.random.PRNGKey(0)
    key, k_x, k_p = jax.random.split(key, 3)
    x_in = jax.random.normal(k_x, (B, T, input_size), jnp.float32)

    lstm_params, tail_params = init_params(
        k_p, input_size, hidden_size, num_layers, nn_inter_dim, tail_length)

    # TODO(synk): the module's `predict()` autoregressive host loop (numpy concat of
    # predicted values) is host-side control flow and is not a kernel concern.
    pred = jax.jit(forward_pallas)(x_in, lstm_params, tail_params)
    pred = jax.block_until_ready(pred)

    ref = forward_ref(x_in, lstm_params, tail_params)
    assert pred.shape == (B * T, 1), pred.shape
    assert jnp.allclose(pred, ref, rtol=1e-3, atol=1e-3), (
        f"max err {jnp.max(jnp.abs(pred - ref))}")

    print("KERNEL_OK")
</pallas_src>

<mosaic_0001>
module attributes {stable_mosaic.version = 11 : i64} {
  func.func @kernel(%arg0: memref<8x2x8xf32, #tpu.memory_space<vmem>>, %arg1: memref<144x512xf32, #tpu.memory_space<vmem>>, %arg2: memref<168x512xf32, #tpu.memory_space<vmem>>, %arg3: memref<64x16xf32, #tpu.memory_space<vmem>>, %arg4: memref<16x1xf32, #tpu.memory_space<vmem>>, %arg5: memref<8x2x32xf32, #tpu.memory_space<vmem>>) attributes {dimension_semantics = [], scalar_prefetch = 0 : i64, scratch_operands = 1 : i64, tpu.core_type = #tpu.core_type<tc>} {
    %c0 = arith.constant 0 : index
    %c0_0 = arith.constant 0 : index
    %0 = vector.load %arg1[%c0, %c0_0] : memref<144x512xf32, #tpu.memory_space<vmem>>, vector<8x512xf32>
    %c8 = arith.constant 8 : index
    %c0_1 = arith.constant 0 : index
    %1 = vector.load %arg1[%c8, %c0_1] : memref<144x512xf32, #tpu.memory_space<vmem>>, vector<128x512xf32>
    %c136 = arith.constant 136 : index
    %c0_2 = arith.constant 0 : index
    %2 = vector.load %arg1[%c136, %c0_2] : memref<144x512xf32, #tpu.memory_space<vmem>>, vector<1x512xf32>
    %c0_3 = arith.constant 0 : index
    %c0_4 = arith.constant 0 : index
    %c0_5 = arith.constant 0 : index
    %3 = vector.load %arg0[%c0_3, %c0_4, %c0_5] : memref<8x2x8xf32, #tpu.memory_space<vmem>>, vector<8x2x8xf32>
    %4 = vector.shape_cast %3 : vector<8x2x8xf32> to vector<16x8xf32>
    %cst = arith.constant dense<0.000000e+00> : vector<16x512xf32>
    %5 = tpu.matmul %4, %0, %cst {dimension_numbers = #tpu.dot_dimension_numbers<[1], [0], [0], [1], [0, 0, 1, 1], [], []>} : vector<16x8xf32>, vector<8x512xf32>, vector<16x512xf32> -> vector<16x512xf32>
    %6 = vector.broadcast %2 : vector<1x512xf32> to vector<16x512xf32>
    %7 = arith.addf %5, %6 : vector<16x512xf32>
    %8 = vector.shape_cast %7 : vector<16x512xf32> to vector<8x2x512xf32>
    %cst_6 = arith.constant 0.000000e+00 : f32
    %9 = vector.broadcast %cst_6 : f32 to vector<2x128xf32>
    %cst_7 = arith.constant 0.000000e+00 : f32
    %10 = vector.broadcast %cst_7 : f32 to vector<2x128xf32>
    %11 = vector.extract_strided_slice %8 {offsets = [0, 0, 0], sizes = [1, 2, 512], strides = [1, 1, 1]} : vector<8x2x512xf32> to vector<1x2x512xf32>
    %12 = vector.shape_cast %11 : vector<1x2x512xf32> to vector<2x512xf32>
    %cst_8 = arith.constant dense<0.000000e+00> : vector<2x512xf32>
    %13 = tpu.matmul %9, %1, %cst_8 {dimension_numbers = #tpu.dot_dimension_numbers<[1], [0], [0], [1], [0, 0, 1, 1], [], []>} : vector<2x128xf32>, vector<128x512xf32>, vector<2x512xf32> -> vector<2x512xf32>
    %14 = arith.addf %12, %13 : vector<2x512xf32>
    %15 = vector.extract_strided_slice %14 {offsets = [0, 0], sizes = [2, 128], strides = [1, 1]} : vector<2x512xf32> to vector<2x128xf32>
    %16 = arith.negf %15 : vector<2x128xf32>
    %17 = math.exp %16 : vector<2x128xf32>
    %cst_9 = arith.constant 1.000000e+00 : f32
    %18 = vector.broadcast %cst_9 : f32 to vector<2x128xf32>
    %19 = arith.addf %18, %17 : vector<2x128xf32>
    %20 = arith.divf %18, %19 : vector<2x128xf32>
    %21 = vector.extract_strided_slice %14 {offsets = [0, 128], sizes = [2, 128], strides = [1, 1]} : vector<2x512xf32> to vector<2x128xf32>
    %22 = arith.negf %21 : vector<2x128xf32>
    %23 = math.exp %22 : vector<2x128xf32>
    %cst_10 = arith.constant 1.000000e+00 : f32
    %24 = vector.broadcast %cst_10 : f32 to vector<2x128xf32>
    %25 = arith.addf %24, %23 : vector<2x128xf32>
    %26 = arith.divf %24, %25 : vector<2x128xf32>
    %27 = vector.extract_strided_slice %14 {offsets = [0, 256], sizes = [2, 128], strides = [1, 1]} : vector<2x512xf32> to vector<2x128xf32>
    %28 = math.tanh %27 : vector<2x128xf32>
    %29 = vector.extract_strided_slice %14 {offsets = [0, 384], sizes = [2, 128], strides = [1, 1]} : vector<2x512xf32> to vector<2x128xf32>
    %30 = arith.negf %29 : vector<2x128xf32>
    %31 = math.exp %30 : vector<2x128xf32>
    %cst_11 = arith.constant 1.000000e+00 : f32
    %32 = vector.broadcast %cst_11 : f32 to vector<2x128xf32>
    %33 = arith.addf %32, %31 : vector<2x128xf32>
    %34 = arith.divf %32, %33 : vector<2x128xf32>
    %35 = arith.mulf %26, %10 : vector<2x128xf32>
    %36 = arith.mulf %20, %28 : vector<2x128xf32>
    %37 = arith.addf %35, %36 : vector<2x128xf32>
    %38 = math.tanh %37 : vector<2x128xf32>
    %39 = arith.mulf %34, %38 : vector<2x128xf32>
    %40 = vector.extract_strided_slice %39 {offsets = [0, 0], sizes = [2, 32], strides = [1, 1]} : vector<2x128xf32> to vector<2x32xf32>
    %c0_12 = arith.constant 0 : index
    %c0_13 = arith.constant 0 : index
    %c0_14 = arith.constant 0 : index
    %41 = vector.load %arg5[%c0_12, %c0_13, %c0_14] : memref<8x2x32xf32, #tpu.memory_space<vmem>>, vector<1x2x32xf32>
    %42 = vector.shape_cast %41 : vector<1x2x32xf32> to vector<2x32xf32>
    %43 = vector.shape_cast %40 : vector<2x32xf32> to vector<1x2x32xf32>
    tpu.vector_store %arg5[%c0_12, %c0_13, %c0_14], %43 {strides = array<i32>} : memref<8x2x32xf32, #tpu.memory_space<vmem>>, vector<1x2x32xf32>,
    %44 = vector.extract_strided_slice %8 {offsets = [1, 0, 0], sizes = [1, 2, 512], strides = [1, 1, 1]} : vector<8x2x512xf32> to vector<1x2x512xf32>
    %45 = vector.shape_cast %44 : vector<1x2x512xf32> to vector<2x512xf32>
    %cst_15 = arith.constant dense<0.000000e+00> : vector<2x512xf32>
    %46 = tpu.matmul %39, %1, %cst_15 {dimension_numbers = #tpu.dot_dimension_numbers<[1], [0], [0], [1], [0, 0, 1, 1], [], []>} : vector<2x128xf32>, vector<128x512xf32>, vector<2x512xf32> -> vector<2x512xf32>
    %47 = arith.addf %45, %46 : vector<2x512xf32>
    %48 = vector.extract_strided_slice %47 {offsets = [0, 0], sizes = [2, 128], strides = [1, 1]} : vector<2x512xf32> to vector<2x128xf32>
    %49 = arith.negf %48 : vector<2x128xf32>
    %50 = math.exp %49 : vector<2x128xf32>
    %cst_16 = arith.constant 1.000000e+00 : f32
    %51 = vector.broadcast %cst_16 : f32 to vector<2x128xf32>
    %52 = arith.addf %51, %50 : vector<2x128xf32>
    %53 = arith.divf %51, %52 : vector<2x128xf32>
    %54 = vector.extract_strided_slice %47 {offsets = [0, 128], sizes = [2, 128], strides = [1, 1]} : vector<2x512xf32> to vector<2x128xf32>
    %55 = arith.negf %54 : vector<2x128xf32>
    %56 = math.exp %55 : vector<2x128xf32>
    %cst_17 = arith.constant 1.000000e+00 : f32
    %57 = vector.broadcast %cst_17 : f32 to vector<2x128xf32>
    %58 = arith.addf %57, %56 : vector<2x128xf32>
    %59 = arith.divf %57, %58 : vector<2x128xf32>
    %60 = vector.extract_strided_slice %47 {offsets = [0, 256], sizes = [2, 128], strides = [1, 1]} : vector<2x512xf32> to vector<2x128xf32>
    %61 = math.tanh %60 : vector<2x128xf32>
    %62 = vector.extract_strided_slice %47 {offsets = [0, 384], sizes = [2, 128], strides = [1, 1]} : vector<2x512xf32> to vector<2x128xf32>
    %63 = arith.negf %62 : vector<2x128xf32>
    %64 = math.exp %63 : vector<2x128xf32>
    %cst_18 = arith.constant 1.000000e+00 : f32
    %65 = vector.broadcast %cst_18 : f32 to vector<2x128xf32>
    %66 = arith.addf %65, %64 : vector<2x128xf32>
    %67 = arith.divf %65, %66 : vector<2x128xf32>
    %68 = arith.mulf %59, %37 : vector<2x128xf32>
    %69 = arith.mulf %53, %61 : vector<2x128xf32>
    %70 = arith.addf %68, %69 : vector<2x128xf32>
    %71 = math.tanh %70 : vector<2x128xf32>
    %72 = arith.mulf %67, %71 : vector<2x128xf32>
    %73 = vector.extract_strided_slice %72 {offsets = [0, 0], sizes = [2, 32], strides = [1, 1]} : vector<2x128xf32> to vector<2x32xf32>
    %c1 = arith.constant 1 : index
    %c0_19 = arith.constant 0 : index
    %c0_20 = arith.constant 0 : index
    %74 = vector.load %arg5[%c1, %c0_19, %c0_20] : memref<8x2x32xf32, #tpu.memory_space<vmem>>, vector<1x2x32xf32>
    %75 = vector.shape_cast %74 : vector<1x2x32xf32> to vector<2x32xf32>
    %76 = vector.shape_cast %73 : vector<2x32xf32> to vector<1x2x32xf32>
    tpu.vector_store %arg5[%c1, %c0_19, %c0_20], %76 {strides = array<i32>} : memref<8x2x32xf32, #tpu.memory_space<vmem>>, vector<1x2x32xf32>,
    %77 = vector.extract_strided_slice %8 {offsets = [2, 0, 0], sizes = [1, 2, 512], strides = [1, 1, 1]} : vector<8x2x512xf32> to vector<1x2x512xf32>
    %78 = vector.shape_cast %77 : vector<1x2x512xf32> to vector<2x512xf32>
    %cst_21 = arith.constant dense<0.000000e+00> : vector<2x512xf32>
    %79 = tpu.matmul %72, %1, %cst_21 {dimension_numbers = #tpu.dot_dimension_numbers<[1], [0], [0], [1], [0, 0, 1, 1], [], []>} : vector<2x128xf32>, vector<128x512xf32>, vector<2x512xf32> -> vector<2x512xf32>
    %80 = arith.addf %78, %79 : vector<2x512xf32>
    %81 = vector.extract_strided_slice %80 {offsets = [0, 0], sizes = [2, 128], strides = [1, 1]} : vector<2x512xf32> to vector<2x128xf32>
    %82 = arith.negf %81 : vector<2x128xf32>
    %83 = math.exp %82 : vector<2x128xf32>
    %cst_22 = arith.constant 1.000000e+00 : f32
    %84 = vector.broadcast %cst_22 : f32 to vector<2x128xf32>
    %85 = arith.addf %84, %83 : vector<2x128xf32>
    %86 = arith.divf %84, %85 : vector<2x128xf32>
    %87 = vector.extract_strided_slice %80 {offsets = [0, 128], sizes = [2, 128], strides = [1, 1]} : vector<2x512xf32> to vector<2x128xf32>
    %88 = arith.negf %87 : vector<2x128xf32>
    %89 = math.exp %88 : vector<2x128xf32>
    %cst_23 = arith.constant 1.000000e+00 : f32
    %90 = vector.broadcast %cst_23 : f32 to vector<2x128xf32>
    %91 = arith.addf %90, %89 : vector<2x128xf32>
    %92 = arith.divf %90, %91 : vector<2x128xf32>
    %93 = vector.extract_strided_slice %80 {offsets = [0, 256], sizes = [2, 128], strides = [1, 1]} : vector<2x512xf32> to vector<2x128xf32>
    %94 = math.tanh %93 : vector<2x128xf32>
    %95 = vector.extract_strided_slice %80 {offsets = [0, 384], sizes = [2, 128], strides = [1, 1]} : vector<2x512xf32> to vector<2x128xf32>
    %96 = arith.negf %95 : vector<2x128xf32>
    %97 = math.exp %96 : vector<2x128xf32>
    %cst_24 = arith.constant 1.000000e+00 : f32
    %98 = vector.broadcast %cst_24 : f32 to vector<2x128xf32>
    %99 = arith.addf %98, %97 : vector<2x128xf32>
    %100 = arith.divf %98, %99 : vector<2x128xf32>
    %101 = arith.mulf %92, %70 : vector<2x128xf32>
    %102 = arith.mulf %86, %94 : vector<2x128xf32>
    %103 = arith.addf %101, %102 : vector<2x128xf32>
    %104 = math.tanh %103 : vector<2x128xf32>
    %105 = arith.mulf %100, %104 : vector<2x128xf32>
    %106 = vector.extract_strided_slice %105 {offsets = [0, 0], sizes = [2, 32], strides = [1, 1]} : vector<2x128xf32> to vector<2x32xf32>
    %c2 = arith.constant 2 : index
    %c0_25 = arith.constant 0 : index
    %c0_26 = arith.constant 0 : index
    %107 = vector.load %arg5[%c2, %c0_25, %c0_26] : memref<8x2x32xf32, #tpu.memory_space<vmem>>, vector<1x2x32xf32>
    %108 = vector.shape_cast %107 : vector<1x2x32xf32> to vector<2x32xf32>
    %109 = vector.shape_cast %106 : vector<2x32xf32> to vector<1x2x32xf32>
    tpu.vector_store %arg5[%c2, %c0_25, %c0_26], %109 {strides = array<i32>} : memref<8x2x32xf32, #tpu.memory_space<vmem>>, vector<1x2x32xf32>,
    %110 = vector.extract_strided_slice %8 {offsets = [3, 0, 0], sizes = [1, 2, 512], strides = [1, 1, 1]} : vector<8x2x512xf32> to vector<1x2x512xf32>
    %111 = vector.shape_cast %110 : vector<1x2x512xf32> to vector<2x512xf32>
    %cst_27 = arith.constant dense<0.000000e+00> : vector<2x512xf32>
    %112 = tpu.matmul %105, %1, %cst_27 {dimension_numbers = #tpu.dot_dimension_numbers<[1], [0], [0], [1], [0, 0, 1, 1], [], []>} : vector<2x128xf32>, vector<128x512xf32>, vector<2x512xf32> -> vector<2x512xf32>
    %113 = arith.addf %111, %112 : vector<2x512xf32>
    %114 = vector.extract_strided_slice %113 {offsets = [0, 0], sizes = [2, 128], strides = [1, 1]} : vector<2x512xf32> to vector<2x128xf32>
    %115 = arith.negf %114 : vector<2x128xf32>
    %116 = math.exp %115 : vector<2x128xf32>
    %cst_28 = arith.constant 1.000000e+00 : f32
    %117 = vector.broadcast %cst_28 : f32 to vector<2x128xf32>
    %118 = arith.addf %117, %116 : vector<2x128xf32>
    %119 = arith.divf %117, %118 : vector<2x128xf32>
    %120 = vector.extract_strided_slice %113 {offsets = [0, 128], sizes = [2, 128], strides = [1, 1]} : vector<2x512xf32> to vector<2x128xf32>
    %121 = arith.negf %120 : vector<2x128xf32>
    %122 = math.exp %121 : vector<2x128xf32>
    %cst_29 = arith.constant 1.000000e+00 : f32
    %123 = vector.broadcast %cst_29 : f32 to vector<2x128xf32>
    %124 = arith.addf %123, %122 : vector<2x128xf32>
    %125 = arith.divf %123, %124 : vector<2x128xf32>
    %126 = vector.extract_strided_slice %113 {offsets = [0, 256], sizes = [2, 128], strides = [1, 1]} : vector<2x512xf32> to vector<2x128xf32>
    %127 = math.tanh %126 : vector<2x128xf32>
    %128 = vector.extract_strided_slice %113 {offsets = [0, 384], sizes = [2, 128], strides = [1, 1]} : vector<2x512xf32> to vector<2x128xf32>
    %129 = arith.negf %128 : vector<2x128xf32>
    %130 = math.exp %129 : vector<2x128xf32>
    %cst_30 = arith.constant 1.000000e+00 : f32
    %131 = vector.broadcast %cst_30 : f32 to vector<2x128xf32>
    %132 = arith.addf %131, %130 : vector<2x128xf32>
    %133 = arith.divf %131, %132 : vector<2x128xf32>
    %134 = arith.mulf %125, %103 : vector<2x128xf32>
    %135 = arith.mulf %119, %127 : vector<2x128xf32>
    %136 = arith.addf %134, %135 : vector<2x128xf32>
    %137 = math.tanh %136 : vector<2x128xf32>
    %138 = arith.mulf %133, %137 : vector<2x128xf32>
    %139 = vector.extract_strided_slice %138 {offsets = [0, 0], sizes = [2, 32], strides = [1, 1]} : vector<2x128xf32> to vector<2x32xf32>
    %c3 = arith.constant 3 : index
    %c0_31 = arith.constant 0 : index
    %c0_32 = arith.constant 0 : index
    %140 = vector.load %arg5[%c3, %c0_31, %c0_32] : memref<8x2x32xf32, #tpu.memory_space<vmem>>, vector<1x2x32xf32>
    %141 = vector.shape_cast %140 : vector<1x2x32xf32> to vector<2x32xf32>
    %142 = vector.shape_cast %139 : vector<2x32xf32> to vector<1x2x32xf32>
    tpu.vector_store %arg5[%c3, %c0_31, %c0_32], %142 {strides = array<i32>} : memref<8x2x32xf32, #tpu.memory_space<vmem>>, vector<1x2x32xf32>,
    %143 = vector.extract_strided_slice %8 {offsets = [4, 0, 0], sizes = [1, 2, 512], strides = [1, 1, 1]} : vector<8x2x512xf32> to vector<1x2x512xf32>
    %144 = vector.shape_cast %143 : vector<1x2x512xf32> to vector<2x512xf32>
    %cst_33 = arith.constant dense<0.000000e+00> : vector<2x512xf32>
    %145 = tpu.matmul %138, %1, %cst_33 {dimension_numbers = #tpu.dot_dimension_numbers<[1], [0], [0], [1], [0, 0, 1, 1], [], []>} : vector<2x128xf32>, vector<128x512xf32>, vector<2x512xf32> -> vector<2x512xf32>
    %146 = arith.addf %144, %145 : vector<2x512xf32>
    %147 = vector.extract_strided_slice %146 {offsets = [0, 0], sizes = [2, 128], strides = [1, 1]} : vector<2x512xf32> to vector<2x128xf32>
    %148 = arith.negf %147 : vector<2x128xf32>
    %149 = math.exp %148 : vector<2x128xf32>
    %cst_34 = arith.constant 1.000000e+00 : f32
    %150 = vector.broadcast %cst_34 : f32 to vector<2x128xf32>
    %151 = arith.addf %150, %149 : vector<2x128xf32>
    %152 = arith.divf %150, %151 : vector<2x128xf32>
    %153 = vector.extract_strided_slice %146 {offsets = [0, 128], sizes = [2, 128], strides = [1, 1]} : vector<2x512xf32> to vector<2x128xf32>
    %154 = arith.negf %153 : vector<2x128xf32>
    %155 = math.exp %154 : vector<2x128xf32>
    %cst_35 = arith.constant 1.000000e+00 : f32
    %156 = vector.broadcast %cst_35 : f32 to vector<2x128xf32>
    %157 = arith.addf %156, %155 : vector<2x128xf32>
    %158 = arith.divf %156, %157 : vector<2x128xf32>
    %159 = vector.extract_strided_slice %146 {offsets = [0, 256], sizes = [2, 128], strides = [1, 1]} : vector<2x512xf32> to vector<2x128xf32>
    %160 = math.tanh %159 : vector<2x128xf32>
    %161 = vector.extract_strided_slice %146 {offsets = [0, 384], sizes = [2, 128], strides = [1, 1]} : vector<2x512xf32> to vector<2x128xf32>
    %162 = arith.negf %161 : vector<2x128xf32>
    %163 = math.exp %162 : vector<2x128xf32>
    %cst_36 = arith.constant 1.000000e+00 : f32
    %164 = vector.broadcast %cst_36 : f32 to vector<2x128xf32>
    %165 = arith.addf %164, %163 : vector<2x128xf32>
    %166 = arith.divf %164, %165 : vector<2x128xf32>
    %167 = arith.mulf %158, %136 : vector<2x128xf32>
    %168 = arith.mulf %152, %160 : vector<2x128xf32>
    %169 = arith.addf %167, %168 : vector<2x128xf32>
    %170 = math.tanh %169 : vector<2x128xf32>
    %171 = arith.mulf %166, %170 : vector<2x128xf32>
    %172 = vector.extract_strided_slice %171 {offsets = [0, 0], sizes = [2, 32], strides = [1, 1]} : vector<2x128xf32> to vector<2x32xf32>
    %c4 = arith.constant 4 : index
    %c0_37 = arith.constant 0 : index
    %c0_38 = arith.constant 0 : index
    %173 = vector.load %arg5[%c4, %c0_37, %c0_38] : memref<8x2x32xf32, #tpu.memory_space<vmem>>, vector<1x2x32xf32>
    %174 = vector.shape_cast %173 : vector<1x2x32xf32> to vector<2x32xf32>
    %175 = vector.shape_cast %172 : vector<2x32xf32> to vector<1x2x32xf32>
    tpu.vector_store %arg5[%c4, %c0_37, %c0_38], %175 {strides = array<i32>} : memref<8x2x32xf32, #tpu.memory_space<vmem>>, vector<1x2x32xf32>,
    %176 = vector.extract_strided_slice %8 {offsets = [5, 0, 0], sizes = [1, 2, 512], strides = [1, 1, 1]} : vector<8x2x512xf32> to vector<1x2x512xf32>
    %177 = vector.shape_cast %176 : vector<1x2x512xf32> to vector<2x512xf32>
    %cst_39 = arith.constant dense<0.000000e+00> : vector<2x512xf32>
    %178 = tpu.matmul %171, %1, %cst_39 {dimension_numbers = #tpu.dot_dimension_numbers<[1], [0], [0], [1], [0, 0, 1, 1], [], []>} : vector<2x128xf32>, vector<128x512xf32>, vector<2x512xf32> -> vector<2x512xf32>
    %179 = arith.addf %177, %178 : vector<2x512xf32>
    %180 = vector.extract_strided_slice %179 {offsets = [0, 0], sizes = [2, 128], strides = [1, 1]} : vector<2x512xf32> to vector<2x128xf32>
    %181 = arith.negf %180 : vector<2x128xf32>
    %182 = math.exp %181 : vector<2x128xf32>
    %cst_40 = arith.constant 1.000000e+00 : f32
    %183 = vector.broadcast %cst_40 : f32 to vector<2x128xf32>
    %184 = arith.addf %183, %182 : vector<2x128xf32>
    %185 = arith.divf %183, %184 : vector<2x128xf32>
    %186 = vector.extract_strided_slice %179 {offsets = [0, 128], sizes = [2, 128], strides = [1, 1]} : vector<2x512xf32> to vector<2x128xf32>
    %187 = arith.negf %186 : vector<2x128xf32>
    %188 = math.exp %187 : vector<2x128xf32>
    %cst_41 = arith.constant 1.000000e+00 : f32
    %189 = vector.broadcast %cst_41 : f32 to vector<2x128xf32>
    %190 = arith.addf %189, %188 : vector<2x128xf32>
    %191 = arith.divf %189, %190 : vector<2x128xf32>
    %192 = vector.extract_strided_slice %179 {offsets = [0, 256], sizes = [2, 128], strides = [1, 1]} : vector<2x512xf32> to vector<2x128xf32>
    %193 = math.tanh %192 : vector<2x128xf32>
    %194 = vector.extract_strided_slice %179 {offsets = [0, 384], sizes = [2, 128], strides = [1, 1]} : vector<2x512xf32> to vector<2x128xf32>
    %195 = arith.negf %194 : vector<2x128xf32>
    %196 = math.exp %195 : vector<2x128xf32>
    %cst_42 = arith.constant 1.000000e+00 : f32
    %197 = vector.broadcast %cst_42 : f32 to vector<2x128xf32>
    %198 = arith.addf %197, %196 : vector<2x128xf32>
    %199 = arith.divf %197, %198 : vector<2x128xf32>
    %200 = arith.mulf %191, %169 : vector<2x128xf32>
    %201 = arith.mulf %185, %193 : vector<2x128xf32>
    %202 = arith.addf %200, %201 : vector<2x128xf32>
    %203 = math.tanh %202 : vector<2x128xf32>
    %204 = arith.mulf %199, %203 : vector<2x128xf32>
    %205 = vector.extract_strided_slice %204 {offsets = [0, 0], sizes = [2, 32], strides = [1, 1]} : vector<2x128xf32> to vector<2x32xf32>
    %c5 = arith.constant 5 : index
    %c0_43 = arith.constant 0 : index
    %c0_44 = arith.constant 0 : index
    %206 = vector.load %arg5[%c5, %c0_43, %c0_44] : memref<8x2x32xf32, #tpu.memory_space<vmem>>, vector<1x2x32xf32>
    %207 = vector.shape_cast %206 : vector<1x2x32xf32> to vector<2x32xf32>
    %208 = vector.shape_cast %205 : vector<2x32xf32> to vector<1x2x32xf32>
    tpu.vector_store %arg5[%c5, %c0_43, %c0_44], %208 {strides = array<i32>} : memref<8x2x32xf32, #tpu.memory_space<vmem>>, vector<1x2x32xf32>,
    %209 = vector.extract_strided_slice %8 {offsets = [6, 0, 0], sizes = [1, 2, 512], strides = [1, 1, 1]} : vector<8x2x512xf32> to vector<1x2x512xf32>
    %210 = vector.shape_cast %209 : vector<1x2x512xf32> to vector<2x512xf32>
    %cst_45 = arith.constant dense<0.000000e+00> : vector<2x512xf32>
    %211 = tpu.matmul %204, %1, %cst_45 {dimension_numbers = #tpu.dot_dimension_numbers<[1], [0], [0], [1], [0, 0, 1, 1], [], []>} : vector<2x128xf32>, vector<128x512xf32>, vector<2x512xf32> -> vector<2x512xf32>
    %212 = arith.addf %210, %211 : vector<2x512xf32>
    %213 = vector.extract_strided_slice %212 {offsets = [0, 0], sizes = [2, 128], strides = [1, 1]} : vector<2x512xf32> to vector<2x128xf32>
    %214 = arith.negf %213 : vector<2x128xf32>
    %215 = math.exp %214 : vector<2x128xf32>
    %cst_46 = arith.constant 1.000000e+00 : f32
    %216 = vector.broadcast %cst_46 : f32 to vector<2x128xf32>
    %217 = arith.addf %216, %215 : vector<2x128xf32>
    %218 = arith.divf %216, %217 : vector<2x128xf32>
    %219 = vector.extract_strided_slice %212 {offsets = [0, 128], sizes = [2, 128], strides = [1, 1]} : vector<2x512xf32> to vector<2x128xf32>
    %220 = arith.negf %219 : vector<2x128xf32>
    %221 = math.exp %220 : vector<2x128xf32>
    %cst_47 = arith.constant 1.000000e+00 : f32
    %222 = vector.broadcast %cst_47 : f32 to vector<2x128xf32>
    %223 = arith.addf %222, %221 : vector<2x128xf32>
    %224 = arith.divf %222, %223 : vector<2x128xf32>
    %225 = vector.extract_strided_slice %212 {offsets = [0, 256], sizes = [2, 128], strides = [1, 1]} : vector<2x512xf32> to vector<2x128xf32>
    %226 = math.tanh %225 : vector<2x128xf32>
    %227 = vector.extract_strided_slice %212 {offsets = [0, 384], sizes = [2, 128], strides = [1, 1]} : vector<2x512xf32> to vector<2x128xf32>
    %228 = arith.negf %227 : vector<2x128xf32>
    %229 = math.exp %228 : vector<2x128xf32>
    %cst_48 = arith.constant 1.000000e+00 : f32
    %230 = vector.broadcast %cst_48 : f32 to vector<2x128xf32>
    %231 = arith.addf %230, %229 : vector<2x128xf32>
    %232 = arith.divf %230, %231 : vector<2x128xf32>
    %233 = arith.mulf %224, %202 : vector<2x128xf32>
    %234 = arith.mulf %218, %226 : vector<2x128xf32>
    %235 = arith.addf %233, %234 : vector<2x128xf32>
    %236 = math.tanh %235 : vector<2x128xf32>
    %237 = arith.mulf %232, %236 : vector<2x128xf32>
    %238 = vector.extract_strided_slice %237 {offsets = [0, 0], sizes = [2, 32], strides = [1, 1]} : vector<2x128xf32> to vector<2x32xf32>
    %c6 = arith.constant 6 : index
    %c0_49 = arith.constant 0 : index
    %c0_50 = arith.constant 0 : index
    %239 = vector.load %arg5[%c6, %c0_49, %c0_50] : memref<8x2x32xf32, #tpu.memory_space<vmem>>, vector<1x2x32xf32>
    %240 = vector.shape_cast %239 : vector<1x2x32xf32> to vector<2x32xf32>
    %241 = vector.shape_cast %238 : vector<2x32xf32> to vector<1x2x32xf32>
    tpu.vector_store %arg5[%c6, %c0_49, %c0_50], %241 {strides = array<i32>} : memref<8x2x32xf32, #tpu.memory_space<vmem>>, vector<1x2x32xf32>,
    %242 = vector.extract_strided_slice %8 {offsets = [7, 0, 0], sizes = [1, 2, 512], strides = [1, 1, 1]} : vector<8x2x512xf32> to vector<1x2x512xf32>
    %243 = vector.shape_cast %242 : vector<1x2x512xf32> to vector<2x512xf32>
    %cst_51 = arith.constant dense<0.000000e+00> : vector<2x512xf32>
    %244 = tpu.matmul %237, %1, %cst_51 {dimension_numbers = #tpu.dot_dimension_numbers<[1], [0], [0], [1], [0, 0, 1, 1], [], []>} : vector<2x128xf32>, vector<128x512xf32>, vector<2x512xf32> -> vector<2x512xf32>
    %245 = arith.addf %243, %244 : vector<2x512xf32>
    %246 = vector.extract_strided_slice %245 {offsets = [0, 0], sizes = [2, 128], strides = [1, 1]} : vector<2x512xf32> to vector<2x128xf32>
    %247 = arith.negf %246 : vector<2x128xf32>
    %248 = math.exp %247 : vector<2x128xf32>
    %cst_52 = arith.constant 1.000000e+00 : f32
    %249 = vector.broadcast %cst_52 : f32 to vector<2x128xf32>
    %250 = arith.addf %249, %248 : vector<2x128xf32>
    %251 = arith.divf %249, %250 : vector<2x128xf32>
    %252 = vector.extract_strided_slice %245 {offsets = [0, 128], sizes = [2, 128], strides = [1, 1]} : vector<2x512xf32> to vector<2x128xf32>
    %253 = arith.negf %252 : vector<2x128xf32>
    %254 = math.exp %253 : vector<2x128xf32>
    %cst_53 = arith.constant 1.000000e+00 : f32
    %255 = vector.broadcast %cst_53 : f32 to vector<2x128xf32>
    %256 = arith.addf %255, %254 : vector<2x128xf32>
    %257 = arith.divf %255, %256 : vector<2x128xf32>
    %258 = vector.extract_strided_slice %245 {offsets = [0, 256], sizes = [2, 128], strides = [1, 1]} : vector<2x512xf32> to vector<2x128xf32>
    %259 = math.tanh %258 : vector<2x128xf32>
    %260 = vector.extract_strided_slice %245 {offsets = [0, 384], sizes = [2, 128], strides = [1, 1]} : vector<2x512xf32> to vector<2x128xf32>
    %261 = arith.negf %260 : vector<2x128xf32>
    %262 = math.exp %261 : vector<2x128xf32>
    %cst_54 = arith.constant 1.000000e+00 : f32
    %263 = vector.broadcast %cst_54 : f32 to vector<2x128xf32>
    %264 = arith.addf %263, %262 : vector<2x128xf32>
    %265 = arith.divf %263, %264 : vector<2x128xf32>
    %266 = arith.mulf %257, %235 : vector<2x128xf32>
    %267 = arith.mulf %251, %259 : vector<2x128xf32>
    %268 = arith.addf %266, %267 : vector<2x128xf32>
    %269 = math.tanh %268 : vector<2x128xf32>
    %270 = arith.mulf %265, %269 : vector<2x128xf32>
    %271 = vector.extract_strided_slice %270 {offsets = [0, 0], sizes = [2, 32], strides = [1, 1]} : vector<2x128xf32> to vector<2x32xf32>
    %c7 = arith.constant 7 : index
    %c0_55 = arith.constant 0 : index
    %c0_56 = arith.constant 0 : index
    %272 = vector.load %arg5[%c7, %c0_55, %c0_56] : memref<8x2x32xf32, #tpu.memory_space<vmem>>, vector<1x2x32xf32>
    %273 = vector.shape_cast %272 : vector<1x2x32xf32> to vector<2x32xf32>
    %274 = vector.shape_cast %271 : vector<2x32xf32> to vector<1x2x32xf32>
    tpu.vector_store %arg5[%c7, %c0_55, %c0_56], %274 {strides = array<i32>} : memref<8x2x32xf32, #tpu.memory_space<vmem>>, vector<1x2x32xf32>,
    %c0_57 = arith.constant 0 : index
    %c0_58 = arith.constant 0 : index
    %275 = vector.load %arg2[%c0_57, %c0_58] : memref<168x512xf32, #tpu.memory_space<vmem>>, vector<32x512xf32>
    %c32 = arith.constant 32 : index
    %c0_59 = arith.constant 0 : index
    %276 = vector.load %arg2[%c32, %c0_59] : memref<168x512xf32, #tpu.memory_space<vmem>>, vector<128x512xf32>
    %c160 = arith.constant 160 : index
    %c0_60 = arith.constant 0 : index
    %277 = vector.load %arg2[%c160, %c0_60] : memref<168x512xf32, #tpu.memory_space<vmem>>, vector<1x512xf32>
    %c0_61 = arith.constant 0 : index
    %c0_62 = arith.constant 0 : index
    %c0_63 = arith.constant 0 : index
    %278 = vector.load %arg5[%c0_61, %c0_62, %c0_63] : memref<8x2x32xf32, #tpu.memory_space<vmem>>, vector<8x2x32xf32>
    %279 = vector.shape_cast %278 : vector<8x2x32xf32> to vector<16x32xf32>
    %cst_64 = arith.constant dense<0.000000e+00> : vector<16x512xf32>
    %280 = tpu.matmul %279, %275, %cst_64 {dimension_numbers = #tpu.dot_dimension_numbers<[1], [0], [0], [1], [0, 0, 1, 1], [], []>} : vector<16x32xf32>, vector<32x512xf32>, vector<16x512xf32> -> vector<16x512xf32>
    %281 = vector.broadcast %277 : vector<1x512xf32> to vector<16x512xf32>
    %282 = arith.addf %280, %281 : vector<16x512xf32>
    %283 = vector.shape_cast %282 : vector<16x512xf32> to vector<8x2x512xf32>
    %cst_65 = arith.constant 0.000000e+00 : f32
    %284 = vector.broadcast %cst_65 : f32 to vector<2x128xf32>
    %cst_66 = arith.constant 0.000000e+00 : f32
    %285 = vector.broadcast %cst_66 : f32 to vector<2x128xf32>
    %286 = vector.extract_strided_slice %283 {offsets = [0, 0, 0], sizes = [1, 2, 512], strides = [1, 1, 1]} : vector<8x2x512xf32> to vector<1x2x512xf32>
    %287 = vector.shape_cast %286 : vector<1x2x512xf32> to vector<2x512xf32>
    %cst_67 = arith.constant dense<0.000000e+00> : vector<2x512xf32>
    %288 = tpu.matmul %284, %276, %cst_67 {dimension_numbers = #tpu.dot_dimension_numbers<[1], [0], [0], [1], [0, 0, 1, 1], [], []>} : vector<2x128xf32>, vector<128x512xf32>, vector<2x512xf32> -> vector<2x512xf32>
    %289 = arith.addf %287, %288 : vector<2x512xf32>
    %290 = vector.extract_strided_slice %289 {offsets = [0, 0], sizes = [2, 128], strides = [1, 1]} : vector<2x512xf32> to vector<2x128xf32>
    %291 = arith.negf %290 : vector<2x128xf32>
    %292 = math.exp %291 : vector<2x128xf32>
    %cst_68 = arith.constant 1.000000e+00 : f32
    %293 = vector.broadcast %cst_68 : f32 to vector<2x128xf32>
    %294 = arith.addf %293, %292 : vector<2x128xf32>
    %295 = arith.divf %293, %294 : vector<2x128xf32>
    %296 = vector.extract_strided_slice %289 {offsets = [0, 128], sizes = [2, 128], strides = [1, 1]} : vector<2x512xf32> to vector<2x128xf32>
    %297 = arith.negf %296 : vector<2x128xf32>
    %298 = math.exp %297 : vector<2x128xf32>
    %cst_69 = arith.constant 1.000000e+00 : f32
    %299 = vector.broadcast %cst_69 : f32 to vector<2x128xf32>
    %300 = arith.addf %299, %298 : vector<2x128xf32>
    %301 = arith.divf %299, %300 : vector<2x128xf32>
    %302 = vector.extract_strided_slice %289 {offsets = [0, 256], sizes = [2, 128], strides = [1, 1]} : vector<2x512xf32> to vector<2x128xf32>
    %303 = math.tanh %302 : vector<2x128xf32>
    %304 = vector.extract_strided_slice %289 {offsets = [0, 384], sizes = [2, 128], strides = [1, 1]} : vector<2x512xf32> to vector<2x128xf32>
    %305 = arith.negf %304 : vector<2x128xf32>
    %306 = math.exp %305 : vector<2x128xf32>
    %cst_70 = arith.constant 1.000000e+00 : f32
    %307 = vector.broadcast %cst_70 : f32 to vector<2x128xf32>
    %308 = arith.addf %307, %306 : vector<2x128xf32>
    %309 = arith.divf %307, %308 : vector<2x128xf32>
    %310 = arith.mulf %301, %285 : vector<2x128xf32>
    %311 = arith.mulf %295, %303 : vector<2x128xf32>
    %312 = arith.addf %310, %311 : vector<2x128xf32>
    %313 = math.tanh %312 : vector<2x128xf32>
    %314 = arith.mulf %309, %313 : vector<2x128xf32>
    %315 = vector.extract_strided_slice %314 {offsets = [0, 0], sizes = [2, 32], strides = [1, 1]} : vector<2x128xf32> to vector<2x32xf32>
    %c0_71 = arith.constant 0 : index
    %c0_72 = arith.constant 0 : index
    %c0_73 = arith.constant 0 : index
    %316 = vector.load %arg5[%c0_71, %c0_72, %c0_73] : memref<8x2x32xf32, #tpu.memory_space<vmem>>, vector<1x2x32xf32>
    %317 = vector.shape_cast %316 : vector<1x2x32xf32> to vector<2x32xf32>
    %318 = vector.shape_cast %315 : vector<2x32xf32> to vector<1x2x32xf32>
    tpu.vector_store %arg5[%c0_71, %c0_72, %c0_73], %318 {strides = array<i32>} : memref<8x2x32xf32, #tpu.memory_space<vmem>>, vector<1x2x32xf32>,
    %319 = vector.extract_strided_slice %283 {offsets = [1, 0, 0], sizes = [1, 2, 512], strides = [1, 1, 1]} : vector<8x2x512xf32> to vector<1x2x512xf32>
    %320 = vector.shape_cast %319 : vector<1x2x512xf32> to vector<2x512xf32>
    %cst_74 = arith.constant dense<0.000000e+00> : vector<2x512xf32>
    %321 = tpu.matmul %314, %276, %cst_74 {dimension_numbers = #tpu.dot_dimension_numbers<[1], [0], [0], [1], [0, 0, 1, 1], [], []>} : vector<2x128xf32>, vector<128x512xf32>, vector<2x512xf32> -> vector<2x512xf32>
    %322 = arith.addf %320, %321 : vector<2x512xf32>
    %323 = vector.extract_strided_slice %322 {offsets = [0, 0], sizes = [2, 128], strides = [1, 1]} : vector<2x512xf32> to vector<2x128xf32>
    %324 = arith.negf %323 : vector<2x128xf32>
    %325 = math.exp %324 : vector<2x128xf32>
    %cst_75 = arith.constant 1.000000e+00 : f32
    %326 = vector.broadcast %cst_75 : f32 to vector<2x128xf32>
    %327 = arith.addf %326, %325 : vector<2x128xf32>
    %328 = arith.divf %326, %327 : vector<2x128xf32>
    %329 = vector.extract_strided_slice %322 {offsets = [0, 128], sizes = [2, 128], strides = [1, 1]} : vector<2x512xf32> to vector<2x128xf32>
    %330 = arith.negf %329 : vector<2x128xf32>
    %331 = math.exp %330 : vector<2x128xf32>
    %cst_76 = arith.constant 1.000000e+00 : f32
    %332 = vector.broadcast %cst_76 : f32 to vector<2x128xf32>
    %333 = arith.addf %332, %331 : vector<2x128xf32>
    %334 = arith.divf %332, %333 : vector<2x128xf32>
    %335 = vector.extract_strided_slice %322 {offsets = [0, 256], sizes = [2, 128], strides = [1, 1]} : vector<2x512xf32> to vector<2x128xf32>
    %336 = math.tanh %335 : vector<2x128xf32>
    %337 = vector.extract_strided_slice %322 {offsets = [0, 384], sizes = [2, 128], strides = [1, 1]} : vector<2x512xf32> to vector<2x128xf32>
    %338 = arith.negf %337 : vector<2x128xf32>
    %339 = math.exp %338 : vector<2x128xf32>
    %cst_77 = arith.constant 1.000000e+00 : f32
    %340 = vector.broadcast %cst_77 : f32 to vector<2x128xf32>
    %341 = arith.addf %340, %339 : vector<2x128xf32>
    %342 = arith.divf %340, %341 : vector<2x128xf32>
    %343 = arith.mulf %334, %312 : vector<2x128xf32>
    %344 = arith.mulf %328, %336 : vector<2x128xf32>
    %345 = arith.addf %343, %344 : vector<2x128xf32>
    %346 = math.tanh %345 : vector<2x128xf32>
    %347 = arith.mulf %342, %346 : vector<2x128xf32>
    %348 = vector.extract_strided_slice %347 {offsets = [0, 0], sizes = [2, 32], strides = [1, 1]} : vector<2x128xf32> to vector<2x32xf32>
    %c1_78 = arith.constant 1 : index
    %c0_79 = arith.constant 0 : index
    %c0_80 = arith.constant 0 : index
    %349 = vector.load %arg5[%c1_78, %c0_79, %c0_80] : memref<8x2x32xf32, #tpu.memory_space<vmem>>, vector<1x2x32xf32>
    %350 = vector.shape_cast %349 : vector<1x2x32xf32> to vector<2x32xf32>
    %351 = vector.shape_cast %348 : vector<2x32xf32> to vector<1x2x32xf32>
    tpu.vector_store %arg5[%c1_78, %c0_79, %c0_80], %351 {strides = array<i32>} : memref<8x2x32xf32, #tpu.memory_space<vmem>>, vector<1x2x32xf32>,
    %352 = vector.extract_strided_slice %283 {offsets = [2, 0, 0], sizes = [1, 2, 512], strides = [1, 1, 1]} : vector<8x2x512xf32> to vector<1x2x512xf32>
    %353 = vector.shape_cast %352 : vector<1x2x512xf32> to vector<2x512xf32>
    %cst_81 = arith.constant dense<0.000000e+00> : vector<2x512xf32>
    %354 = tpu.matmul %347, %276, %cst_81 {dimension_numbers = #tpu.dot_dimension_numbers<[1], [0], [0], [1], [0, 0, 1, 1], [], []>} : vector<2x128xf32>, vector<128x512xf32>, vector<2x512xf32> -> vector<2x512xf32>
    %355 = arith.addf %353, %354 : vector<2x512xf32>
    %356 = vector.extract_strided_slice %355 {offsets = [0, 0], sizes = [2, 128], strides = [1, 1]} : vector<2x512xf32> to vector<2x128xf32>
    %357 = arith.negf %356 : vector<2x128xf32>
    %358 = math.exp %357 : vector<2x128xf32>
    %cst_82 = arith.constant 1.000000e+00 : f32
    %359 = vector.broadcast %cst_82 : f32 to vector<2x128xf32>
    %360 = arith.addf %359, %358 : vector<2x128xf32>
    %361 = arith.divf %359, %360 : vector<2x128xf32>
    %362 = vector.extract_strided_slice %355 {offsets = [0, 128], sizes = [2, 128], strides = [1, 1]} : vector<2x512xf32> to vector<2x128xf32>
    %363 = arith.negf %362 : vector<2x128xf32>
    %364 = math.exp %363 : vector<2x128xf32>
    %cst_83 = arith.constant 1.000000e+00 : f32
    %365 = vector.broadcast %cst_83 : f32 to vector<2x128xf32>
    %366 = arith.addf %365, %364 : vector<2x128xf32>
    %367 = arith.divf %365, %366 : vector<2x128xf32>
    %368 = vector.extract_strided_slice %355 {offsets = [0, 256], sizes = [2, 128], strides = [1, 1]} : vector<2x512xf32> to vector<2x128xf32>
    %369 = math.tanh %368 : vector<2x128xf32>
    %370 = vector.extract_strided_slice %355 {offsets = [0, 384], sizes = [2, 128], strides = [1, 1]} : vector<2x512xf32> to vector<2x128xf32>
    %371 = arith.negf %370 : vector<2x128xf32>
    %372 = math.exp %371 : vector<2x128xf32>
    %cst_84 = arith.constant 1.000000e+00 : f32
    %373 = vector.broadcast %cst_84 : f32 to vector<2x128xf32>
    %374 = arith.addf %373, %372 : vector<2x128xf32>
    %375 = arith.divf %373, %374 : vector<2x128xf32>
    %376 = arith.mulf %367, %345 : vector<2x128xf32>
    %377 = arith.mulf %361, %369 : vector<2x128xf32>
    %378 = arith.addf %376, %377 : vector<2x128xf32>
    %379 = math.tanh %378 : vector<2x128xf32>
    %380 = arith.mulf %375, %379 : vector<2x128xf32>
    %381 = vector.extract_strided_slice %380 {offsets = [0, 0], sizes = [2, 32], strides = [1, 1]} : vector<2x128xf32> to vector<2x32xf32>
    %c2_85 = arith.constant 2 : index
    %c0_86 = arith.constant 0 : index
    %c0_87 = arith.constant 0 : index
    %382 = vector.load %arg5[%c2_85, %c0_86, %c0_87] : memref<8x2x32xf32, #tpu.memory_space<vmem>>, vector<1x2x32xf32>
    %383 = vector.shape_cast %382 : vector<1x2x32xf32> to vector<2x32xf32>
    %384 = vector.shape_cast %381 : vector<2x32xf32> to vector<1x2x32xf32>
    tpu.vector_store %arg5[%c2_85, %c0_86, %c0_87], %384 {strides = array<i32>} : memref<8x2x32xf32, #tpu.memory_space<vmem>>, vector<1x2x32xf32>,
    %385 = vector.extract_strided_slice %283 {offsets = [3, 0, 0], sizes = [1, 2, 512], strides = [1, 1, 1]} : vector<8x2x512xf32> to vector<1x2x512xf32>
    %386 = vector.shape_cast %385 : vector<1x2x512xf32> to vector<2x512xf32>
    %cst_88 = arith.constant dense<0.000000e+00> : vector<2x512xf32>
    %387 = tpu.matmul %380, %276, %cst_88 {dimension_numbers = #tpu.dot_dimension_numbers<[1], [0], [0], [1], [0, 0, 1, 1], [], []>} : vector<2x128xf32>, vector<128x512xf32>, vector<2x512xf32> -> vector<2x512xf32>
    %388 = arith.addf %386, %387 : vector<2x512xf32>
    %389 = vector.extract_strided_slice %388 {offsets = [0, 0], sizes = [2, 128], strides = [1, 1]} : vector<2x512xf32> to vector<2x128xf32>
    %390 = arith.negf %389 : vector<2x128xf32>
    %391 = math.exp %390 : vector<2x128xf32>
    %cst_89 = arith.constant 1.000000e+00 : f32
    %392 = vector.broadcast %cst_89 : f32 to vector<2x128xf32>
    %393 = arith.addf %392, %391 : vector<2x128xf32>
    %394 = arith.divf %392, %393 : vector<2x128xf32>
    %395 = vector.extract_strided_slice %388 {offsets = [0, 128], sizes = [2, 128], strides = [1, 1]} : vector<2x512xf32> to vector<2x128xf32>
    %396 = arith.negf %395 : vector<2x128xf32>
    %397 = math.exp %396 : vector<2x128xf32>
    %cst_90 = arith.constant 1.000000e+00 : f32
    %398 = vector.broadcast %cst_90 : f32 to vector<2x128xf32>
    %399 = arith.addf %398, %397 : vector<2x128xf32>
    %400 = arith.divf %398, %399 : vector<2x128xf32>
    %401 = vector.extract_strided_slice %388 {offsets = [0, 256], sizes = [2, 128], strides = [1, 1]} : vector<2x512xf32> to vector<2x128xf32>
    %402 = math.tanh %401 : vector<2x128xf32>
    %403 = vector.extract_strided_slice %388 {offsets = [0, 384], sizes = [2, 128], strides = [1, 1]} : vector<2x512xf32> to vector<2x128xf32>
    %404 = arith.negf %403 : vector<2x128xf32>
    %405 = math.exp %404 : vector<2x128xf32>
    %cst_91 = arith.constant 1.000000e+00 : f32
    %406 = vector.broadcast %cst_91 : f32 to vector<2x128xf32>
    %407 = arith.addf %406, %405 : vector<2x128xf32>
    %408 = arith.divf %406, %407 : vector<2x128xf32>
    %409 = arith.mulf %400, %378 : vector<2x128xf32>
    %410 = arith.mulf %394, %402 : vector<2x128xf32>
    %411 = arith.addf %409, %410 : vector<2x128xf32>
    %412 = math.tanh %411 : vector<2x128xf32>
    %413 = arith.mulf %408, %412 : vector<2x128xf32>
    %414 = vector.extract_strided_slice %413 {offsets = [0, 0], sizes = [2, 32], strides = [1, 1]} : vector<2x128xf32> to vector<2x32xf32>
    %c3_92 = arith.constant 3 : index
    %c0_93 = arith.constant 0 : index
    %c0_94 = arith.constant 0 : index
    %415 = vector.load %arg5[%c3_92, %c0_93, %c0_94] : memref<8x2x32xf32, #tpu.memory_space<vmem>>, vector<1x2x32xf32>
    %416 = vector.shape_cast %415 : vector<1x2x32xf32> to vector<2x32xf32>
    %417 = vector.shape_cast %414 : vector<2x32xf32> to vector<1x2x32xf32>
    tpu.vector_store %arg5[%c3_92, %c0_93, %c0_94], %417 {strides = array<i32>} : memref<8x2x32xf32, #tpu.memory_space<vmem>>, vector<1x2x32xf32>,
    %418 = vector.extract_strided_slice %283 {offsets = [4, 0, 0], sizes = [1, 2, 512], strides = [1, 1, 1]} : vector<8x2x512xf32> to vector<1x2x512xf32>
    %419 = vector.shape_cast %418 : vector<1x2x512xf32> to vector<2x512xf32>
    %cst_95 = arith.constant dense<0.000000e+00> : vector<2x512xf32>
    %420 = tpu.matmul %413, %276, %cst_95 {dimension_numbers = #tpu.dot_dimension_numbers<[1], [0], [0], [1], [0, 0, 1, 1], [], []>} : vector<2x128xf32>, vector<128x512xf32>, vector<2x512xf32> -> vector<2x512xf32>
    %421 = arith.addf %419, %420 : vector<2x512xf32>
    %422 = vector.extract_strided_slice %421 {offsets = [0, 0], sizes = [2, 128], strides = [1, 1]} : vector<2x512xf32> to vector<2x128xf32>
    %423 = arith.negf %422 : vector<2x128xf32>
    %424 = math.exp %423 : vector<2x128xf32>
    %cst_96 = arith.constant 1.000000e+00 : f32
    %425 = vector.broadcast %cst_96 : f32 to vector<2x128xf32>
    %426 = arith.addf %425, %424 : vector<2x128xf32>
    %427 = arith.divf %425, %426 : vector<2x128xf32>
    %428 = vector.extract_strided_slice %421 {offsets = [0, 128], sizes = [2, 128], strides = [1, 1]} : vector<2x512xf32> to vector<2x128xf32>
    %429 = arith.negf %428 : vector<2x128xf32>
    %430 = math.exp %429 : vector<2x128xf32>
    %cst_97 = arith.constant 1.000000e+00 : f32
    %431 = vector.broadcast %cst_97 : f32 to vector<2x128xf32>
    %432 = arith.addf %431, %430 : vector<2x128xf32>
    %433 = arith.divf %431, %432 : vector<2x128xf32>
    %434 = vector.extract_strided_slice %421 {offsets = [0, 256], sizes = [2, 128], strides = [1, 1]} : vector<2x512xf32> to vector<2x128xf32>
    %435 = math.tanh %434 : vector<2x128xf32>
    %436 = vector.extract_strided_slice %421 {offsets = [0, 384], sizes = [2, 128], strides = [1, 1]} : vector<2x512xf32> to vector<2x128xf32>
    %437 = arith.negf %436 : vector<2x128xf32>
    %438 = math.exp %437 : vector<2x128xf32>
    %cst_98 = arith.constant 1.000000e+00 : f32
    %439 = vector.broadcast %cst_98 : f32 to vector<2x128xf32>
    %440 = arith.addf %439, %438 : vector<2x128xf32>
    %441 = arith.divf %439, %440 : vector<2x128xf32>
    %442 = arith.mulf %433, %411 : vector<2x128xf32>
    %443 = arith.mulf %427, %435 : vector<2x128xf32>
    %444 = arith.addf %442, %443 : vector<2x128xf32>
    %445 = math.tanh %444 : vector<2x128xf32>
    %446 = arith.mulf %441, %445 : vector<2x128xf32>
    %447 = vector.extract_strided_slice %446 {offsets = [0, 0], sizes = [2, 32], strides = [1, 1]} : vector<2x128xf32> to vector<2x32xf32>
    %c4_99 = arith.constant 4 : index
    %c0_100 = arith.constant 0 : index
    %c0_101 = arith.constant 0 : index
    %448 = vector.load %arg5[%c4_99, %c0_100, %c0_101] : memref<8x2x32xf32, #tpu.memory_space<vmem>>, vector<1x2x32xf32>
    %449 = vector.shape_cast %448 : vector<1x2x32xf32> to vector<2x32xf32>
    %450 = vector.shape_cast %447 : vector<2x32xf32> to vector<1x2x32xf32>
    tpu.vector_store %arg5[%c4_99, %c0_100, %c0_101], %450 {strides = array<i32>} : memref<8x2x32xf32, #tpu.memory_space<vmem>>, vector<1x2x32xf32>,
    %451 = vector.extract_strided_slice %283 {offsets = [5, 0, 0], sizes = [1, 2, 512], strides = [1, 1, 1]} : vector<8x2x512xf32> to vector<1x2x512xf32>
    %452 = vector.shape_cast %451 : vector<1x2x512xf32> to vector<2x512xf32>
    %cst_102 = arith.constant dense<0.000000e+00> : vector<2x512xf32>
    %453 = tpu.matmul %446, %276, %cst_102 {dimension_numbers = #tpu.dot_dimension_numbers<[1], [0], [0], [1], [0, 0, 1, 1], [], []>} : vector<2x128xf32>, vector<128x512xf32>, vector<2x512xf32> -> vector<2x512xf32>
    %454 = arith.addf %452, %453 : vector<2x512xf32>
    %455 = vector.extract_strided_slice %454 {offsets = [0, 0], sizes = [2, 128], strides = [1, 1]} : vector<2x512xf32> to vector<2x128xf32>
    %456 = arith.negf %455 : vector<2x128xf32>
    %457 = math.exp %456 : vector<2x128xf32>
    %cst_103 = arith.constant 1.000000e+00 : f32
    %458 = vector.broadcast %cst_103 : f32 to vector<2x128xf32>
    %459 = arith.addf %458, %457 : vector<2x128xf32>
    %460 = arith.divf %458, %459 : vector<2x128xf32>
    %461 = vector.extract_strided_slice %454 {offsets = [0, 128], sizes = [2, 128], strides = [1, 1]} : vector<2x512xf32> to vector<2x128xf32>
    %462 = arith.negf %461 : vector<2x128xf32>
    %463 = math.exp %462 : vector<2x128xf32>
    %cst_104 = arith.constant 1.000000e+00 : f32
    %464 = vector.broadcast %cst_104 : f32 to vector<2x128xf32>
    %465 = arith.addf %464, %463 : vector<2x128xf32>
    %466 = arith.divf %464, %465 : vector<2x128xf32>
    %467 = vector.extract_strided_slice %454 {offsets = [0, 256], sizes = [2, 128], strides = [1, 1]} : vector<2x512xf32> to vector<2x128xf32>
    %468 = math.tanh %467 : vector<2x128xf32>
    %469 = vector.extract_strided_slice %454 {offsets = [0, 384], sizes = [2, 128], strides = [1, 1]} : vector<2x512xf32> to vector<2x128xf32>
    %470 = arith.negf %469 : vector<2x128xf32>
    %471 = math.exp %470 : vector<2x128xf32>
    %cst_105 = arith.constant 1.000000e+00 : f32
    %472 = vector.broadcast %cst_105 : f32 to vector<2x128xf32>
    %473 = arith.addf %472, %471 : vector<2x128xf32>
    %474 = arith.divf %472, %473 : vector<2x128xf32>
    %475 = arith.mulf %466, %444 : vector<2x128xf32>
    %476 = arith.mulf %460, %468 : vector<2x128xf32>
    %477 = arith.addf %475, %476 : vector<2x128xf32>
    %478 = math.tanh %477 : vector<2x128xf32>
    %479 = arith.mulf %474, %478 : vector<2x128xf32>
    %480 = vector.extract_strided_slice %479 {offsets = [0, 0], sizes = [2, 32], strides = [1, 1]} : vector<2x128xf32> to vector<2x32xf32>
    %c5_106 = arith.constant 5 : index
    %c0_107 = arith.constant 0 : index
    %c0_108 = arith.constant 0 : index
    %481 = vector.load %arg5[%c5_106, %c0_107, %c0_108] : memref<8x2x32xf32, #tpu.memory_space<vmem>>, vector<1x2x32xf32>
    %482 = vector.shape_cast %481 : vector<1x2x32xf32> to vector<2x32xf32>
    %483 = vector.shape_cast %480 : vector<2x32xf32> to vector<1x2x32xf32>
    tpu.vector_store %arg5[%c5_106, %c0_107, %c0_108], %483 {strides = array<i32>} : memref<8x2x32xf32, #tpu.memory_space<vmem>>, vector<1x2x32xf32>,
    %484 = vector.extract_strided_slice %283 {offsets = [6, 0, 0], sizes = [1, 2, 512], strides = [1, 1, 1]} : vector<8x2x512xf32> to vector<1x2x512xf32>
    %485 = vector.shape_cast %484 : vector<1x2x512xf32> to vector<2x512xf32>
    %cst_109 = arith.constant dense<0.000000e+00> : vector<2x512xf32>
    %486 = tpu.matmul %479, %276, %cst_109 {dimension_numbers = #tpu.dot_dimension_numbers<[1], [0], [0], [1], [0, 0, 1, 1], [], []>} : vector<2x128xf32>, vector<128x512xf32>, vector<2x512xf32> -> vector<2x512xf32>
    %487 = arith.addf %485, %486 : vector<2x512xf32>
    %488 = vector.extract_strided_slice %487 {offsets = [0, 0], sizes = [2, 128], strides = [1, 1]} : vector<2x512xf32> to vector<2x128xf32>
    %489 = arith.negf %488 : vector<2x128xf32>
    %490 = math.exp %489 : vector<2x128xf32>
    %cst_110 = arith.constant 1.000000e+00 : f32
    %491 = vector.broadcast %cst_110 : f32 to vector<2x128xf32>
    %492 = arith.addf %491, %490 : vector<2x128xf32>
    %493 = arith.divf %491, %492 : vector<2x128xf32>
    %494 = vector.extract_strided_slice %487 {offsets = [0, 128], sizes = [2, 128], strides = [1, 1]} : vector<2x512xf32> to vector<2x128xf32>
    %495 = arith.negf %494 : vector<2x128xf32>
    %496 = math.exp %495 : vector<2x128xf32>
    %cst_111 = arith.constant 1.000000e+00 : f32
    %497 = vector.broadcast %cst_111 : f32 to vector<2x128xf32>
    %498 = arith.addf %497, %496 : vector<2x128xf32>
    %499 = arith.divf %497, %498 : vector<2x128xf32>
    %500 = vector.extract_strided_slice %487 {offsets = [0, 256], sizes = [2, 128], strides = [1, 1]} : vector<2x512xf32> to vector<2x128xf32>
    %501 = math.tanh %500 : vector<2x128xf32>
    %502 = vector.extract_strided_slice %487 {offsets = [0, 384], sizes = [2, 128], strides = [1, 1]} : vector<2x512xf32> to vector<2x128xf32>
    %503 = arith.negf %502 : vector<2x128xf32>
    %504 = math.exp %503 : vector<2x128xf32>
    %cst_112 = arith.constant 1.000000e+00 : f32
    %505 = vector.broadcast %cst_112 : f32 to vector<2x128xf32>
    %506 = arith.addf %505, %504 : vector<2x128xf32>
    %507 = arith.divf %505, %506 : vector<2x128xf32>
    %508 = arith.mulf %499, %477 : vector<2x128xf32>
    %509 = arith.mulf %493, %501 : vector<2x128xf32>
    %510 = arith.addf %508, %509 : vector<2x128xf32>
    %511 = math.tanh %510 : vector<2x128xf32>
    %512 = arith.mulf %507, %511 : vector<2x128xf32>
    %513 = vector.extract_strided_slice %512 {offsets = [0, 0], sizes = [2, 32], strides = [1, 1]} : vector<2x128xf32> to vector<2x32xf32>
    %c6_113 = arith.constant 6 : index
    %c0_114 = arith.constant 0 : index
    %c0_115 = arith.constant 0 : index
    %514 = vector.load %arg5[%c6_113, %c0_114, %c0_115] : memref<8x2x32xf32, #tpu.memory_space<vmem>>, vector<1x2x32xf32>
    %515 = vector.shape_cast %514 : vector<1x2x32xf32> to vector<2x32xf32>
    %516 = vector.shape_cast %513 : vector<2x32xf32> to vector<1x2x32xf32>
    tpu.vector_store %arg5[%c6_113, %c0_114, %c0_115], %516 {strides = array<i32>} : memref<8x2x32xf32, #tpu.memory_space<vmem>>, vector<1x2x32xf32>,
    %517 = vector.extract_strided_slice %283 {offsets = [7, 0, 0], sizes = [1, 2, 512], strides = [1, 1, 1]} : vector<8x2x512xf32> to vector<1x2x512xf32>
    %518 = vector.shape_cast %517 : vector<1x2x512xf32> to vector<2x512xf32>
    %cst_116 = arith.constant dense<0.000000e+00> : vector<2x512xf32>
    %519 = tpu.matmul %512, %276, %cst_116 {dimension_numbers = #tpu.dot_dimension_numbers<[1], [0], [0], [1], [0, 0, 1, 1], [], []>} : vector<2x128xf32>, vector<128x512xf32>, vector<2x512xf32> -> vector<2x512xf32>
    %520 = arith.addf %518, %519 : vector<2x512xf32>
    %521 = vector.extract_strided_slice %520 {offsets = [0, 0], sizes = [2, 128], strides = [1, 1]} : vector<2x512xf32> to vector<2x128xf32>
    %522 = arith.negf %521 : vector<2x128xf32>
    %523 = math.exp %522 : vector<2x128xf32>
    %cst_117 = arith.constant 1.000000e+00 : f32
    %524 = vector.broadcast %cst_117 : f32 to vector<2x128xf32>
    %525 = arith.addf %524, %523 : vector<2x128xf32>
    %526 = arith.divf %524, %525 : vector<2x128xf32>
    %527 = vector.extract_strided_slice %520 {offsets = [0, 128], sizes = [2, 128], strides = [1, 1]} : vector<2x512xf32> to vector<2x128xf32>
    %528 = arith.negf %527 : vector<2x128xf32>
    %529 = math.exp %528 : vector<2x128xf32>
    %cst_118 = arith.constant 1.000000e+00 : f32
    %530 = vector.broadcast %cst_118 : f32 to vector<2x128xf32>
    %531 = arith.addf %530, %529 : vector<2x128xf32>
    %532 = arith.divf %530, %531 : vector<2x128xf32>
    %533 = vector.extract_strided_slice %520 {offsets = [0, 256], sizes = [2, 128], strides = [1, 1]} : vector<2x512xf32> to vector<2x128xf32>
    %534 = math.tanh %533 : vector<2x128xf32>
    %535 = vector.extract_strided_slice %520 {offsets = [0, 384], sizes = [2, 128], strides = [1, 1]} : vector<2x512xf32> to vector<2x128xf32>
    %536 = arith.negf %535 : vector<2x128xf32>
    %537 = math.exp %536 : vector<2x128xf32>
    %cst_119 = arith.constant 1.000000e+00 : f32
    %538 = vector.broadcast %cst_119 : f32 to vector<2x128xf32>
    %539 = arith.addf %538, %537 : vector<2x128xf32>
    %540 = arith.divf %538, %539 : vector<2x128xf32>
    %541 = arith.mulf %532, %510 : vector<2x128xf32>
    %542 = arith.mulf %526, %534 : vector<2x128xf32>
    %543 = arith.addf %541, %542 : vector<2x128xf32>
    %544 = math.tanh %543 : vector<2x128xf32>
    %545 = arith.mulf %540, %544 : vector<2x128xf32>
    %546 = vector.extract_strided_slice %545 {offsets = [0, 0], sizes = [2, 32], strides = [1, 1]} : vector<2x128xf32> to vector<2x32xf32>
    %c7_120 = arith.constant 7 : index
    %c0_121 = arith.constant 0 : index
    %c0_122 = arith.constant 0 : index
    %547 = vector.load %arg5[%c7_120, %c0_121, %c0_122] : memref<8x2x32xf32, #tpu.memory_space<vmem>>, vector<1x2x32xf32>
    %548 = vector.shape_cast %547 : vector<1x2x32xf32> to vector<2x32xf32>
    %549 = vector.shape_cast %546 : vector<2x32xf32> to vector<1x2x32xf32>
    tpu.vector_store %arg5[%c7_120, %c0_121, %c0_122], %549 {strides = array<i32>} : memref<8x2x32xf32, #tpu.memory_space<vmem>>, vector<1x2x32xf32>,
    %c0_123 = arith.constant 0 : index
    %c0_124 = arith.constant 0 : index
    %c0_125 = arith.constant 0 : index
    %550 = vector.load %arg5[%c0_123, %c0_124, %c0_125] : memref<8x2x32xf32, #tpu.memory_space<vmem>>, vector<1x2x32xf32>
    %551 = vector.shape_cast %550 : vector<1x2x32xf32> to vector<2x32xf32>
    %c1_126 = arith.constant 1 : index
    %c0_127 = arith.constant 0 : index
    %c0_128 = arith.constant 0 : index
    %552 = vector.load %arg5[%c1_126, %c0_127, %c0_128] : memref<8x2x32xf32, #tpu.memory_space<vmem>>, vector<1x2x32xf32>
    %553 = vector.shape_cast %552 : vector<1x2x32xf32> to vector<2x32xf32>
    %c2_129 = arith.constant 2 : index
    %c0_130 = arith.constant 0 : index
    %c0_131 = arith.constant 0 : index
    %554 = vector.load %arg5[%c2_129, %c0_130, %c0_131] : memref<8x2x32xf32, #tpu.memory_space<vmem>>, vector<1x2x32xf32>
    %555 = vector.shape_cast %554 : vector<1x2x32xf32> to vector<2x32xf32>
    %c3_132 = arith.constant 3 : index
    %c0_133 = arith.constant 0 : index
    %c0_134 = arith.constant 0 : index
    %556 = vector.load %arg5[%c3_132, %c0_133, %c0_134] : memref<8x2x32xf32, #tpu.memory_space<vmem>>, vector<1x2x32xf32>
    %557 = vector.shape_cast %556 : vector<1x2x32xf32> to vector<2x32xf32>
    %c4_135 = arith.constant 4 : index
    %c0_136 = arith.constant 0 : index
    %c0_137 = arith.constant 0 : index
    %558 = vector.load %arg5[%c4_135, %c0_136, %c0_137] : memref<8x2x32xf32, #tpu.memory_space<vmem>>, vector<1x2x32xf32>
    %559 = vector.shape_cast %558 : vector<1x2x32xf32> to vector<2x32xf32>
    %c5_138 = arith.constant 5 : index
    %c0_139 = arith.constant 0 : index
    %c0_140 = arith.constant 0 : index
    %560 = vector.load %arg5[%c5_138, %c0_139, %c0_140] : memref<8x2x32xf32, #tpu.memory_space<vmem>>, vector<1x2x32xf32>
    %561 = vector.shape_cast %560 : vector<1x2x32xf32> to vector<2x32xf32>
    %c6_141 = arith.constant 6 : index
    %c0_142 = arith.constant 0 : index
    %c0_143 = arith.constant 0 : index
    %562 = vector.load %arg5[%c6_141, %c0_142, %c0_143] : memref<8x2x32xf32, #tpu.memory_space<vmem>>, vector<1x2x32xf32>
    %563 = vector.shape_cast %562 : vector<1x2x32xf32> to vector<2x32xf32>
    %c7_144 = arith.constant 7 : index
    %c0_145 = arith.constant 0 : index
    %c0_146 = arith.constant 0 : index
    %564 = vector.load %arg5[%c7_144, %c0_145, %c0_146] : memref<8x2x32xf32, #tpu.memory_space<vmem>>, vector<1x2x32xf32>
    %565 = vector.shape_cast %564 : vector<1x2x32xf32> to vector<2x32xf32>
    %566 = vector.shape_cast %551 : vector<2x32xf32> to vector<2x1x32xf32>
    %567 = vector.shape_cast %553 : vector<2x32xf32> to vector<2x1x32xf32>
    %568 = vector.shape_cast %555 : vector<2x32xf32> to vector<2x1x32xf32>
    %569 = vector.shape_cast %557 : vector<2x32xf32> to vector<2x1x32xf32>
    %570 = vector.shape_cast %559 : vector<2x32xf32> to vector<2x1x32xf32>
    %571 = vector.shape_cast %561 : vector<2x32xf32> to vector<2x1x32xf32>
    %572 = vector.shape_cast %563 : vector<2x32xf32> to vector<2x1x32xf32>
    %573 = vector.shape_cast %565 : vector<2x32xf32> to vector<2x1x32xf32>
    %574 = tpu.concatenate %566, %567, %568, %569, %570, %571, %572, %573 in 1 : vector<2x1x32xf32>, vector<2x1x32xf32>, vector<2x1x32xf32>, vector<2x1x32xf32>, vector<2x1x32xf32>, vector<2x1x32xf32>, vector<2x1x32xf32>, vector<2x1x32xf32> -> vector<2x8x32xf32>
    %575 = vector.shape_cast %574 : vector<2x8x32xf32> to vector<16x32xf32>
    %c0_147 = arith.constant 0 : index
    %c0_148 = arith.constant 0 : index
    %576 = vector.load %arg3[%c0_147, %c0_148] : memref<64x16xf32, #tpu.memory_space<vmem>>, vector<32x16xf32>
    %c32_149 = arith.constant 32 : index
    %c0_150 = arith.constant 0 : index
    %577 = vector.load %arg3[%c32_149, %c0_150] : memref<64x16xf32, #tpu.memory_space<vmem>>, vector<1x16xf32>
    %cst_151 = arith.constant 0.000000e+00 : f32
    %578 = vector.broadcast %cst_151 : f32 to vector<16x32xf32>
    %579 = arith.maximumf %575, %578 : vector<16x32xf32>
    %cst_152 = arith.constant dense<0.000000e+00> : vector<16x16xf32>
    %580 = tpu.matmul %579, %576, %cst_152 {dimension_numbers = #tpu.dot_dimension_numbers<[1], [0], [0], [1], [0, 0, 1, 1], [], []>} : vector<16x32xf32>, vector<32x16xf32>, vector<16x16xf32> -> vector<16x16xf32>
    %581 = vector.broadcast %577 : vector<1x16xf32> to vector<16x16xf32>
    %582 = arith.addf %580, %581 : vector<16x16xf32>
    %c40 = arith.constant 40 : index
    %c0_153 = arith.constant 0 : index
    %583 = vector.load %arg3[%c40, %c0_153] : memref<64x16xf32, #tpu.memory_space<vmem>>, vector<16x16xf32>
    %c56 = arith.constant 56 : index
    %c0_154 = arith.constant 0 : index
    %584 = vector.load %arg3[%c56, %c0_154] : memref<64x16xf32, #tpu.memory_space<vmem>>, vector<1x16xf32>
    %cst_155 = arith.constant 0.000000e+00 : f32
    %585 = vector.broadcast %cst_155 : f32 to vector<16x16xf32>
    %586 = arith.maximumf %582, %585 : vector<16x16xf32>
    %cst_156 = arith.constant dense<0.000000e+00> : vector<16x16xf32>
    %587 = tpu.matmul %586, %583, %cst_156 {dimension_numbers = #tpu.dot_dimension_numbers<[1], [0], [0], [1], [0, 0, 1, 1], [], []>} : vector<16x16xf32>, vector<16x16xf32>, vector<16x16xf32> -> vector<16x16xf32>
    %588 = vector.broadcast %584 : vector<1x16xf32> to vector<16x16xf32>
    %589 = arith.addf %587, %588 : vector<16x16xf32>
    %590 = vector.extract_strided_slice %589 {offsets = [0, 0], sizes = [16, 1], strides = [1, 1]} : vector<16x16xf32> to vector<16x1xf32>
    %591 = vector.extract_strided_slice %589 {offsets = [0, 1], sizes = [16, 1], strides = [1, 1]} : vector<16x16xf32> to vector<16x1xf32>
    %592 = math.exp %591 : vector<16x1xf32>
    %593 = arith.mulf %590, %592 : vector<16x1xf32>
    %c0_157 = arith.constant 0 : index
    %c0_158 = arith.constant 0 : index
    %594 = vector.load %arg4[%c0_157, %c0_158] : memref<16x1xf32, #tpu.memory_space<vmem>>, vector<16x1xf32>
    tpu.vector_store %arg4[%c0_157, %c0_158], %593 {strides = array<i32>} : memref<16x1xf32, #tpu.memory_space<vmem>>, vector<16x1xf32>,
    return
  }
}

</mosaic_0001>

<llo_original>
// kernel: forward_pallas.1
$region0: #{forward_pallas.1}
  #allocation0 [shape = 'u32[]', space=smem, size = 0x4, offset = 0x4, fixed_abs, tag = 'smem constant byte address 0x4 - core index']
  #allocation1 [shape = 'u32[72,128]{1,0:T(1,128)}', space=vmem, size = 0x9000, scoped, tag = 'internal scratch']
  #allocation2 [shape = 'f32[8,2,32]{2,1,0:T(2,128)}', space=vmem, size = 0x2000, scoped, tag = 'scratch operand']
  %s0 = inlined_call_operand.vmem [shape: f32[8,2,8], index: 0, kind: input, shape index: {}]
  %s1 = inlined_call_operand.vmem [shape: f32[144,512], index: 1, kind: input, shape index: {}]
  %s2 = inlined_call_operand.vmem [shape: f32[168,512], index: 2, kind: input, shape index: {}]
  %s3 = inlined_call_operand.vmem [shape: f32[64,16], index: 3, kind: input, shape index: {}]
  %s4 = inlined_call_operand.vmem [shape: f32[16,1], index: 4, kind: output, shape index: {}]
  %s5 = sld [smem:[#allocation0]]
  $region26: #{forward_pallas.1} parent=0
    _
  %s7 = ssub.s32 1, %s5
  %s8 = scalar_select 0, %s7, %s5
  // Predicated region
  $region2: #{forward_pallas.1} parent=0 // pred_check
    _
  $region3: #{forward_pallas.1} parent=0 // pred_check_branch
    %10 = sbr.rel (0) target = $region5
  $region4: #{forward_pallas.1} parent=0 // pred_region
    _
  $region5: #{forward_pallas.1} parent=0 // pred_fallthru
    _
  // Predicated region
  $region6: #{forward_pallas.1} parent=0 // pred_check
    _
  $region7: #{forward_pallas.1} parent=0 // pred_check_branch
    %12 = sbr.rel (0) target = $region9
  $region8: #{forward_pallas.1} parent=0 // pred_region
    _
  $region9: #{forward_pallas.1} parent=0 // pred_fallthru
    _
  // Predicated region
  $region10: #{forward_pallas.1} parent=0 // pred_check
    _
  $region11: #{forward_pallas.1} parent=0 // pred_check_branch
    %14 = sbr.rel (0) target = $region13
  $region12: #{forward_pallas.1} parent=0 // pred_region
    _
  $region13: #{forward_pallas.1} parent=0 // pred_fallthru
    _
  // Predicated region
  $region14: #{forward_pallas.1} parent=0 // pred_check
    _
  $region15: #{forward_pallas.1} parent=0 // pred_check_branch
    %16 = sbr.rel (0) target = $region17
  $region16: #{forward_pallas.1} parent=0 // pred_region
    _
  $region17: #{forward_pallas.1} parent=0 // pred_fallthru
    _
  %v17 = vld [vmem:[%s1] sm:$0xff]
  %v18 = vld [vmem:[%s1 + $0x8] sm:$0xff]
  %v19 = vld [vmem:[%s1 + $0x10] sm:$0xff]
  %v20 = vld [vmem:[%s1 + $0x18] sm:$0xff]
  %v21 = vld [vmem:[%s1 + $0x20] sm:$0xff]
  %v22 = vld [vmem:[%s1 + $0x28] sm:$0xff]
  %v23 = vld [vmem:[%s1 + $0x30] sm:$0xff]
  %v24 = vld [vmem:[%s1 + $0x38] sm:$0xff]
  %v25 = vld [vmem:[%s1 + $0x40] sm:$0xff]
  %v26 = vld [vmem:[%s1 + $0x48] sm:$0xff]
  %v27 = vld [vmem:[%s1 + $0x50] sm:$0xff]
  %v28 = vld [vmem:[%s1 + $0x58] sm:$0xff]
  %v29 = vld [vmem:[%s1 + $0x60] sm:$0xff]
  %v30 = vld [vmem:[%s1 + $0x68] sm:$0xff]
  %v31 = vld [vmem:[%s1 + $0x70] sm:$0xff]
  %v32 = vld [vmem:[%s1 + $0x78] sm:$0xff]
  %v33 = vld [vmem:[%s1 + $0x80] sm:$0xff]
  %v34 = vld [vmem:[%s1 + $0x88] sm:$0xff]
  %v35 = vld [vmem:[%s1 + $0x90] sm:$0xff]
  %v36 = vld [vmem:[%s1 + $0x98] sm:$0xff]
  %v37 = vld [vmem:[%s1 + $0xa0] sm:$0xff]
  %v38 = vld [vmem:[%s1 + $0xa8] sm:$0xff]
  %v39 = vld [vmem:[%s1 + $0xb0] sm:$0xff]
  %v40 = vld [vmem:[%s1 + $0xb8] sm:$0xff]
  %v41 = vld [vmem:[%s1 + $0xc0] sm:$0xff]
  %v42 = vld [vmem:[%s1 + $0xc8] sm:$0xff]
  %v43 = vld [vmem:[%s1 + $0xd0] sm:$0xff]
  %v44 = vld [vmem:[%s1 + $0xd8] sm:$0xff]
  %v45 = vld [vmem:[%s1 + $0xe0] sm:$0xff]
  %v46 = vld [vmem:[%s1 + $0xe8] sm:$0xff]
  %v47 = vld [vmem:[%s1 + $0xf0] sm:$0xff]
  %v48 = vld [vmem:[%s1 + $0xf8] sm:$0xff]
  %v49 = vld [vmem:[%s1 + $0x100] sm:$0xff]
  %v50 = vld [vmem:[%s1 + $0x108] sm:$0xff]
  %v51 = vld [vmem:[%s1 + $0x110] sm:$0xff]
  %v52 = vld [vmem:[%s1 + $0x118] sm:$0xff]
  %v53 = vld [vmem:[%s1 + $0x120] sm:$0xff]
  %v54 = vld [vmem:[%s1 + $0x128] sm:$0xff]
  %v55 = vld [vmem:[%s1 + $0x130] sm:$0xff]
  %v56 = vld [vmem:[%s1 + $0x138] sm:$0xff]
  %v57 = vld [vmem:[%s1 + $0x140] sm:$0xff]
  %v58 = vld [vmem:[%s1 + $0x148] sm:$0xff]
  %v59 = vld [vmem:[%s1 + $0x150] sm:$0xff]
  %v60 = vld [vmem:[%s1 + $0x158] sm:$0xff]
  %v61 = vld [vmem:[%s1 + $0x160] sm:$0xff]
  %v62 = vld [vmem:[%s1 + $0x168] sm:$0xff]
  %v63 = vld [vmem:[%s1 + $0x170] sm:$0xff]
  %v64 = vld [vmem:[%s1 + $0x178] sm:$0xff]
  %v65 = vld [vmem:[%s1 + $0x180] sm:$0xff]
  %v66 = vld [vmem:[%s1 + $0x188] sm:$0xff]
  %v67 = vld [vmem:[%s1 + $0x190] sm:$0xff]
  %v68 = vld [vmem:[%s1 + $0x198] sm:$0xff]
  %v69 = vld [vmem:[%s1 + $0x1a0] sm:$0xff]
  %v70 = vld [vmem:[%s1 + $0x1a8] sm:$0xff]
  %v71 = vld [vmem:[%s1 + $0x1b0] sm:$0xff]
  %v72 = vld [vmem:[%s1 + $0x1b8] sm:$0xff]
  %v73 = vld [vmem:[%s1 + $0x1c0] sm:$0xff]
  %v74 = vld [vmem:[%s1 + $0x1c8] sm:$0xff]
  %v75 = vld [vmem:[%s1 + $0x1d0] sm:$0xff]
  %v76 = vld [vmem:[%s1 + $0x1d8] sm:$0xff]
  %v77 = vld [vmem:[%s1 + $0x1e0] sm:$0xff]
  %v78 = vld [vmem:[%s1 + $0x1e8] sm:$0xff]
  %v79 = vld [vmem:[%s1 + $0x1f0] sm:$0xff]
  %v80 = vld [vmem:[%s1 + $0x1f8] sm:$0xff]
  %v81 = vld [vmem:[%s1 + $0x200] sm:$0xff]
  %v82 = vld [vmem:[%s1 + $0x208] sm:$0xff]
  %v83 = vld [vmem:[%s1 + $0x210] sm:$0xff]
  %v84 = vld [vmem:[%s1 + $0x218] sm:$0xff]
  %s85 = scalar_lea.vmem %s1, 544
  %v86 = vld [vmem:[%s85] ss:$8 sm:$0xf]
  %v87 = vld [vmem:[%s0] sm:$0x3]
  %v88 = vld [vmem:[%s0 + $0x2] sm:$0x3]
  %v89 = vld [vmem:[%s0 + $0x4] sm:$0x3]
  %v90 = vld [vmem:[%s0 + $0x6] sm:$0x3]
  %v91 = vld [vmem:[%s0 + $0x8] sm:$0x3]
  %v92 = vld [vmem:[%s0 + $0xa] sm:$0x3]
  %v93 = vld [vmem:[%s0 + $0xc] sm:$0x3]
  %v94 = vld [vmem:[%s0 + $0xe] sm:$0x3]
  %v96 = vperm.slane %v86, 0
  %v97 = vperm.slane %v86, 1
  %v98 = vperm.slane %v86, 2
  %v99 = vperm.slane %v86, 3
  %112 = vst [vmem:[#allocation1] ss:$4 sm:$0xff] %v87
  %s113 = scalar_lea.vmem [#allocation1], 1
  %114 = vst [vmem:[%s113] ss:$4 sm:$0xff] %v88
  %s115 = scalar_lea.vmem [#allocation1], 2
  %116 = vst [vmem:[%s115] ss:$4 sm:$0xff] %v89
  %s117 = scalar_lea.vmem [#allocation1], 3
  %118 = vst [vmem:[%s117] ss:$4 sm:$0xff] %v90
  %s119 = scalar_lea.vmem [#allocation1], 32
  %120 = vst [vmem:[%s119] ss:$4 sm:$0xff] %v91
  %s121 = scalar_lea.vmem [#allocation1], 33
  %122 = vst [vmem:[%s121] ss:$4 sm:$0xff] %v92
  %s123 = scalar_lea.vmem [#allocation1], 34
  %124 = vst [vmem:[%s123] ss:$4 sm:$0xff] %v93
  %s125 = scalar_lea.vmem [#allocation1], 35
  %126 = vst [vmem:[%s125] ss:$4 sm:$0xff] %v94
  %v127 = vld.sshfl [vmem:[#allocation1] sm:$0xff pattern:$0x73625140]
  %v128 = vld.sshfl [vmem:[#allocation1 + $0x20] sm:$0xff pattern:$0x73625140]
  %vm129 = vcmask 64512
  %v130 = vsel %vm129, %v127, 0
  %v132 = vsel %vm129, %v128, 0
  %134 = vmatpush.msra.mxu0 0.0
  %135 = vmatpush.msra.mxu0 0.0
  %136 = vmatpush.msra.mxu0 0.0
  %137 = vmatpush.msra.mxu0 0.0
  %138 = vmatpush.msra.mxu0 0.0
  %139 = vmatpush.msra.mxu0 0.0
  %140 = vmatpush.msra.mxu0 0.0
  %141 = vmatpush.msra.mxu0 0.0
  %142 = vmatpush.msra.mxu0 0.0
  %143 = vmatpush.msra.mxu0 0.0
  %144 = vmatpush.msra.mxu0 0.0
  %145 = vmatpush.msra.mxu0 0.0
  %146 = vmatpush.msra.mxu0 0.0
  %147 = vmatpush.msra.mxu0 0.0
  %148 = vmatpush.msra.mxu0 0.0
  %149 = vmatpush.msra.mxu0 %v17
  %150 = vmatmul.f32.gmra.mxu0 %v130
  %v151 = vpop.f32.mrf.mxu0
  %v152 = vadd.f32 %v96, %v151
  %153 = vmatmul.f32.gmra.mxu0 %v132
  %v154 = vpop.f32.mrf.mxu0
  %v155 = vadd.f32 %v96, %v154
  %156 = vdwg.mxu0
  %157 = vmatpush.msra.mxu0 0.0
  %158 = vmatpush.msra.mxu0 0.0
  %159 = vmatpush.msra.mxu0 0.0
  %160 = vmatpush.msra.mxu0 0.0
  %161 = vmatpush.msra.mxu0 0.0
  %162 = vmatpush.msra.mxu0 0.0
  %163 = vmatpush.msra.mxu0 0.0
  %164 = vmatpush.msra.mxu0 0.0
  %165 = vmatpush.msra.mxu0 0.0
  %166 = vmatpush.msra.mxu0 0.0
  %167 = vmatpush.msra.mxu0 0.0
  %168 = vmatpush.msra.mxu0 0.0
  %169 = vmatpush.msra.mxu0 0.0
  %170 = vmatpush.msra.mxu0 0.0
  %171 = vmatpush.msra.mxu0 0.0
  %172 = vmatpush.msra.mxu0 %v18
  %173 = vmatmul.f32.gmra.mxu0 %v130
  %v174 = vpop.f32.mrf.mxu0
  %v175 = vadd.f32 %v97, %v174
  %176 = vmatmul.f32.gmra.mxu0 %v132
  %v177 = vpop.f32.mrf.mxu0
  %v178 = vadd.f32 %v97, %v177
  %179 = vdwg.mxu0
  %180 = vmatpush.msra.mxu0 0.0
  %181 = vmatpush.msra.mxu0 0.0
  %182 = vmatpush.msra.mxu0 0.0
  %183 = vmatpush.msra.mxu0 0.0
  %184 = vmatpush.msra.mxu0 0.0
  %185 = vmatpush.msra.mxu0 0.0
  %186 = vmatpush.msra.mxu0 0.0
  %187 = vmatpush.msra.mxu0 0.0
  %188 = vmatpush.msra.mxu0 0.0
  %189 = vmatpush.msra.mxu0 0.0
  %190 = vmatpush.msra.mxu0 0.0
  %191 = vmatpush.msra.mxu0 0.0
  %192 = vmatpush.msra.mxu0 0.0
  %193 = vmatpush.msra.mxu0 0.0
  %194 = vmatpush.msra.mxu0 0.0
  %195 = vmatpush.msra.mxu0 %v19
  %196 = vmatmul.f32.gmra.mxu0 %v130
  %v197 = vpop.f32.mrf.mxu0
  %v198 = vadd.f32 %v98, %v197
  %199 = vmatmul.f32.gmra.mxu0 %v132
  %v200 = vpop.f32.mrf.mxu0
  %v201 = vadd.f32 %v98, %v200
  %202 = vdwg.mxu0
  %203 = vmatpush.msra.mxu0 0.0
  %204 = vmatpush.msra.mxu0 0.0
  %205 = vmatpush.msra.mxu0 0.0
  %206 = vmatpush.msra.mxu0 0.0
  %207 = vmatpush.msra.mxu0 0.0
  %208 = vmatpush.msra.mxu0 0.0
  %209 = vmatpush.msra.mxu0 0.0
  %210 = vmatpush.msra.mxu0 0.0
  %211 = vmatpush.msra.mxu0 0.0
  %212 = vmatpush.msra.mxu0 0.0
  %213 = vmatpush.msra.mxu0 0.0
  %214 = vmatpush.msra.mxu0 0.0
  %215 = vmatpush.msra.mxu0 0.0
  %216 = vmatpush.msra.mxu0 0.0
  %217 = vmatpush.msra.mxu0 0.0
  %218 = vmatpush.msra.mxu0 %v20
  %219 = vmatmul.f32.gmra.mxu0 %v130
  %v220 = vpop.f32.mrf.mxu0
  %v221 = vadd.f32 %v99, %v220
  %222 = vmatmul.f32.gmra.mxu0 %v132
  %v223 = vpop.f32.mrf.mxu0
  %v224 = vadd.f32 %v99, %v223
  %225 = vdwg.mxu0
  %v234 = vrot.slane %v175, 6
  %v235 = vrot.slane %v198, 4
  %v236 = vrot.slane %v221, 2
  %v237 = vrot.slane %v178, 6
  %v238 = vrot.slane %v201, 4
  %v239 = vrot.slane %v224, 2
  %vm240 = vcmask 1041408
  %v241 = vsel %vm240, %v152, %v234
  %vm242 = vcmask 1045508
  %v243 = vsel %vm242, %v235, %v236
  %vm244 = vcmask 1043456
  %v245 = vsel %vm244, %v241, %v243
  %vm246 = vcmask 1043458
  %v247 = vsel %vm246, %v152, %v234
  %vm248 = vcmask 1045504
  %v249 = vsel %vm248, %v236, %v235
  %vm250 = vcmask 1045506
  %v251 = vsel %vm250, %v247, %v249
  %v252 = vrot.slane %v251, 2
  %v253 = vsel %vm242, %v152, %v234
  %v254 = vsel %vm240, %v235, %v236
  %v255 = vsel %vm244, %v254, %v253
  %v256 = vrot.slane %v255, 4
  %v257 = vsel %vm248, %v234, %v152
  %v258 = vsel %vm246, %v235, %v236
  %v259 = vsel %vm250, %v258, %v257
  %v260 = vrot.slane %v259, 6
  %v261 = vsel %vm240, %v155, %v237
  %v262 = vsel %vm242, %v238, %v239
  %v263 = vsel %vm244, %v261, %v262
  %v264 = vsel %vm246, %v155, %v237
  %v265 = vsel %vm248, %v239, %v238
  %v266 = vsel %vm250, %v264, %v265
  %v267 = vrot.slane %v266, 2
  %v268 = vsel %vm242, %v155, %v237
  %v269 = vsel %vm240, %v238, %v239
  %v270 = vsel %vm244, %v269, %v268
  %v271 = vrot.slane %v270, 4
  %v272 = vsel %vm248, %v237, %v155
  %v273 = vsel %vm246, %v238, %v239
  %v274 = vsel %vm250, %v273, %v272
  %v275 = vrot.slane %v274, 6
  %284 = vmatpush.msra.mxu0 %v81
  %285 = vmatpush.msra.mxu0 %v77
  %286 = vmatpush.msra.mxu0 %v73
  %287 = vmatpush.msra.mxu0 %v69
  %288 = vmatpush.msra.mxu0 %v65
  %289 = vmatpush.msra.mxu0 %v61
  %290 = vmatpush.msra.mxu0 %v57
  %291 = vmatpush.msra.mxu0 %v53
  %292 = vmatpush.msra.mxu0 %v49
  %293 = vmatpush.msra.mxu0 %v45
  %294 = vmatpush.msra.mxu0 %v41
  %295 = vmatpush.msra.mxu0 %v37
  %296 = vmatpush.msra.mxu0 %v33
  %297 = vmatpush.msra.mxu0 %v29
  %298 = vmatpush.msra.mxu0 %v25
  %299 = vmatpush.msra.mxu0 %v21
  %300 = vmatmul.f32.gmra.mxu0 0.0
  %v301 = vpop.f32.mrf.mxu0
  %v302 = vadd.f32 0.0, %v301
  %303 = vdwg.mxu0
  %304 = vmatpush.msra.mxu0 %v82
  %305 = vmatpush.msra.mxu0 %v78
  %306 = vmatpush.msra.mxu0 %v74
  %307 = vmatpush.msra.mxu0 %v70
  %308 = vmatpush.msra.mxu0 %v66
  %309 = vmatpush.msra.mxu0 %v62
  %310 = vmatpush.msra.mxu0 %v58
  %311 = vmatpush.msra.mxu0 %v54
  %312 = vmatpush.msra.mxu0 %v50
  %313 = vmatpush.msra.mxu0 %v46
  %314 = vmatpush.msra.mxu0 %v42
  %315 = vmatpush.msra.mxu0 %v38
  %316 = vmatpush.msra.mxu0 %v34
  %317 = vmatpush.msra.mxu0 %v30
  %318 = vmatpush.msra.mxu0 %v26
  %319 = vmatpush.msra.mxu0 %v22
  %320 = vmatmul.f32.gmra.mxu0 0.0
  %v321 = vpop.f32.mrf.mxu0
  %v322 = vadd.f32 0.0, %v321
  %323 = vdwg.mxu0
  %324 = vmatpush.msra.mxu0 %v83
  %325 = vmatpush.msra.mxu0 %v79
  %326 = vmatpush.msra.mxu0 %v75
  %327 = vmatpush.msra.mxu0 %v71
  %328 = vmatpush.msra.mxu0 %v67
  %329 = vmatpush.msra.mxu0 %v63
  %330 = vmatpush.msra.mxu0 %v59
  %331 = vmatpush.msra.mxu0 %v55
  %332 = vmatpush.msra.mxu0 %v51
  %333 = vmatpush.msra.mxu0 %v47
  %334 = vmatpush.msra.mxu0 %v43
  %335 = vmatpush.msra.mxu0 %v39
  %336 = vmatpush.msra.mxu0 %v35
  %337 = vmatpush.msra.mxu0 %v31
  %338 = vmatpush.msra.mxu0 %v27
  %339 = vmatpush.msra.mxu0 %v23
  %340 = vmatmul.f32.gmra.mxu0 0.0
  %v341 = vpop.f32.mrf.mxu0
  %v342 = vadd.f32 0.0, %v341
  %343 = vdwg.mxu0
  %344 = vmatpush.msra.mxu0 %v84
  %345 = vmatpush.msra.mxu0 %v80
  %346 = vmatpush.msra.mxu0 %v76
  %347 = vmatpush.msra.mxu0 %v72
  %348 = vmatpush.msra.mxu0 %v68
  %349 = vmatpush.msra.mxu0 %v64
  %350 = vmatpush.msra.mxu0 %v60
  %351 = vmatpush.msra.mxu0 %v56
  %352 = vmatpush.msra.mxu0 %v52
  %353 = vmatpush.msra.mxu0 %v48
  %354 = vmatpush.msra.mxu0 %v44
  %355 = vmatpush.msra.mxu0 %v40
  %356 = vmatpush.msra.mxu0 %v36
  %357 = vmatpush.msra.mxu0 %v32
  %358 = vmatpush.msra.mxu0 %v28
  %359 = vmatpush.msra.mxu0 %v24
  %360 = vmatmul.f32.gmra.mxu0 0.0
  %v361 = vpop.f32.mrf.mxu0
  %v362 = vadd.f32 0.0, %v361
  %363 = vdwg.mxu0
  %v368 = vrot.slane %v322, 6
  %v369 = vrot.slane %v342, 4
  %v370 = vrot.slane %v362, 2
  %v371 = vsel %vm240, %v302, %v368
  %v372 = vsel %vm242, %v369, %v370
  %v373 = vsel %vm244, %v371, %v372
  %v375 = vadd.f32 %v245, %v373
  %v376 = vxor.u32 %v375, 2147483648
  %v377 = vmul.f32 %v376, 1.442695
  %v378 = vpow.pop %v377
  %v379 = vadd.f32 %v378, 1.0
  %v380 = vrcp.pop %v379
  %v381 = vmul.f32 %v379, %v380
  %v382 = vsub.f32 1.0, %v381
  %v383 = vmul.f32 %v380, %v382
  %v384 = vadd.f32 %v380, %v383
  %vm385 = vweird.f32 %v379
  %vm386 = vweird.f32 %v380
  %vm387 = vmor %vm385, %vm386
  %v388 = vsel %vm387, %v380, %v384
  %v389 = vand.u32 2147483647, %v379
  %vm390 = vcmp.eq.f32.partialorder %v389, 8.507059e+37
  %v391 = vand.u32 %v379, 2147483648
  %v392 = vor.u32 1.1754944e-38, %v391
  %v393 = vsel %vm390, %v392, %v388
  %v394 = vmul.f32 1.0, %v393
  %v396 = vrot.slane %v375, 2
  %v398 = vxor.u32 %v396, 2147483648
  %v399 = vmul.f32 %v398, 1.442695
  %v400 = vpow.pop %v399
  %v401 = vadd.f32 %v400, 1.0
  %v402 = vrcp.pop %v401
  %v403 = vmul.f32 %v401, %v402
  %v404 = vsub.f32 1.0, %v403
  %v405 = vmul.f32 %v402, %v404
  %v406 = vadd.f32 %v402, %v405
  %vm407 = vweird.f32 %v401
  %vm408 = vweird.f32 %v402
  %vm409 = vmor %vm407, %vm408
  %v410 = vsel %vm409, %v402, %v406
  %v411 = vand.u32 2147483647, %v401
  %vm412 = vcmp.eq.f32.partialorder %v411, 8.507059e+37
  %v413 = vand.u32 %v401, 2147483648
  %v414 = vor.u32 1.1754944e-38, %v413
  %v415 = vsel %vm412, %v414, %v410
  %v416 = vmul.f32 1.0, %v415
  %v417 = vrot.slane %v375, 4
  %v419 = vtanh.pop %v417
  %v420 = vrot.slane %v375, 6
  %v422 = vxor.u32 %v420, 2147483648
  %v423 = vmul.f32 %v422, 1.442695
  %v424 = vpow.pop %v423
  %v425 = vadd.f32 %v424, 1.0
  %v426 = vrcp.pop %v425
  %v427 = vmul.f32 %v425, %v426
  %v428 = vsub.f32 1.0, %v427
  %v429 = vmul.f32 %v426, %v428
  %v430 = vadd.f32 %v426, %v429
  %vm431 = vweird.f32 %v425
  %vm432 = vweird.f32 %v426
  %vm433 = vmor %vm431, %vm432
  %v434 = vsel %vm433, %v426, %v430
  %v435 = vand.u32 2147483647, %v425
  %vm436 = vcmp.eq.f32.partialorder %v435, 8.507059e+37
  %v437 = vand.u32 %v425, 2147483648
  %v438 = vor.u32 1.1754944e-38, %v437
  %v439 = vsel %vm436, %v438, %v434
  %v440 = vmul.f32 1.0, %v439
  %v441 = vmul.f32 %v416, 0.0
  %v442 = vmul.f32 %v394, %v419
  %v443 = vadd.f32 %v441, %v442
  %v444 = vtanh.pop %v443
  %v445 = vmul.f32 %v440, %v444
  %vm446 = vcmask 254976
  %447 = vst.msk [vmem:[#allocation2] sm:$0x3] %vm446, %v445
  %448 = vmatpush.msra.mxu0 %v81
  %449 = vmatpush.msra.mxu0 %v77
  %450 = vmatpush.msra.mxu0 %v73
  %451 = vmatpush.msra.mxu0 %v69
  %452 = vmatpush.msra.mxu0 %v65
  %453 = vmatpush.msra.mxu0 %v61
  %454 = vmatpush.msra.mxu0 %v57
  %455 = vmatpush.msra.mxu0 %v53
  %456 = vmatpush.msra.mxu0 %v49
  %457 = vmatpush.msra.mxu0 %v45
  %458 = vmatpush.msra.mxu0 %v41
  %459 = vmatpush.msra.mxu0 %v37
  %460 = vmatpush.msra.mxu0 %v33
  %461 = vmatpush.msra.mxu0 %v29
  %462 = vmatpush.msra.mxu0 %v25
  %463 = vmatpush.msra.mxu0 %v21
  %464 = vmatmul.f32.gmra.mxu0 %v445
  %v465 = vpop.f32.mrf.mxu0
  %v466 = vadd.f32 0.0, %v465
  %467 = vdwg.mxu0
  %468 = vmatpush.msra.mxu0 %v82
  %469 = vmatpush.msra.mxu0 %v78
  %470 = vmatpush.msra.mxu0 %v74
  %471 = vmatpush.msra.mxu0 %v70
  %472 = vmatpush.msra.mxu0 %v66
  %473 = vmatpush.msra.mxu0 %v62
  %474 = vmatpush.msra.mxu0 %v58
  %475 = vmatpush.msra.mxu0 %v54
  %476 = vmatpush.msra.mxu0 %v50
  %477 = vmatpush.msra.mxu0 %v46
  %478 = vmatpush.msra.mxu0 %v42
  %479 = vmatpush.msra.mxu0 %v38
  %480 = vmatpush.msra.mxu0 %v34
  %481 = vmatpush.msra.mxu0 %v30
  %482 = vmatpush.msra.mxu0 %v26
  %483 = vmatpush.msra.mxu0 %v22
  %484 = vmatmul.f32.gmra.mxu0 %v445
  %v485 = vpop.f32.mrf.mxu0
  %v486 = vadd.f32 0.0, %v485
  %487 = vdwg.mxu0
  %488 = vmatpush.msra.mxu0 %v83
  %489 = vmatpush.msra.mxu0 %v79
  %490 = vmatpush.msra.mxu0 %v75
  %491 = vmatpush.msra.mxu0 %v71
  %492 = vmatpush.msra.mxu0 %v67
  %493 = vmatpush.msra.mxu0 %v63
  %494 = vmatpush.msra.mxu0 %v59
  %495 = vmatpush.msra.mxu0 %v55
  %496 = vmatpush.msra.mxu0 %v51
  %497 = vmatpush.msra.mxu0 %v47
  %498 = vmatpush.msra.mxu0 %v43
  %499 = vmatpush.msra.mxu0 %v39
  %500 = vmatpush.msra.mxu0 %v35
  %501 = vmatpush.msra.mxu0 %v31
  %502 = vmatpush.msra.mxu0 %v27
  %503 = vmatpush.msra.mxu0 %v23
  %504 = vmatmul.f32.gmra.mxu0 %v445
  %v505 = vpop.f32.mrf.mxu0
  %v506 = vadd.f32 0.0, %v505
  %507 = vdwg.mxu0
  %508 = vmatpush.msra.mxu0 %v84
  %509 = vmatpush.msra.mxu0 %v80
  %510 = vmatpush.msra.mxu0 %v76
  %511 = vmatpush.msra.mxu0 %v72
  %512 = vmatpush.msra.mxu0 %v68
  %513 = vmatpush.msra.mxu0 %v64
  %514 = vmatpush.msra.mxu0 %v60
  %515 = vmatpush.msra.mxu0 %v56
  %516 = vmatpush.msra.mxu0 %v52
  %517 = vmatpush.msra.mxu0 %v48
  %518 = vmatpush.msra.mxu0 %v44
  %519 = vmatpush.msra.mxu0 %v40
  %520 = vmatpush.msra.mxu0 %v36
  %521 = vmatpush.msra.mxu0 %v32
  %522 = vmatpush.msra.mxu0 %v28
  %523 = vmatpush.msra.mxu0 %v24
  %524 = vmatmul.f32.gmra.mxu0 %v445
  %v525 = vpop.f32.mrf.mxu0
  %v526 = vadd.f32 0.0, %v525
  %527 = vdwg.mxu0
  %v532 = vrot.slane %v486, 6
  %v533 = vrot.slane %v506, 4
  %v534 = vrot.slane %v526, 2
  %v535 = vsel %vm240, %v466, %v532
  %v536 = vsel %vm242, %v533, %v534
  %v537 = vsel %vm244, %v535, %v536
  %v539 = vadd.f32 %v252, %v537
  %v540 = vxor.u32 %v539, 2147483648
  %v541 = vmul.f32 %v540, 1.442695
  %v542 = vpow.pop %v541
  %v543 = vadd.f32 %v542, 1.0
  %v544 = vrcp.pop %v543
  %v545 = vmul.f32 %v543, %v544
  %v546 = vsub.f32 1.0, %v545
  %v547 = vmul.f32 %v544, %v546
  %v548 = vadd.f32 %v544, %v547
  %vm549 = vweird.f32 %v543
  %vm550 = vweird.f32 %v544
  %vm551 = vmor %vm549, %vm550
  %v552 = vsel %vm551, %v544, %v548
  %v553 = vand.u32 2147483647, %v543
  %vm554 = vcmp.eq.f32.partialorder %v553, 8.507059e+37
  %v555 = vand.u32 %v543, 2147483648
  %v556 = vor.u32 1.1754944e-38, %v555
  %v557 = vsel %vm554, %v556, %v552
  %v558 = vmul.f32 1.0, %v557
  %v560 = vrot.slane %v539, 2
  %v562 = vxor.u32 %v560, 2147483648
  %v563 = vmul.f32 %v562, 1.442695
  %v564 = vpow.pop %v563
  %v565 = vadd.f32 %v564, 1.0
  %v566 = vrcp.pop %v565
  %v567 = vmul.f32 %v565, %v566
  %v568 = vsub.f32 1.0, %v567
  %v569 = vmul.f32 %v566, %v568
  %v570 = vadd.f32 %v566, %v569
  %vm571 = vweird.f32 %v565
  %vm572 = vweird.f32 %v566
  %vm573 = vmor %vm571, %vm572
  %v574 = vsel %vm573, %v566, %v570
  %v575 = vand.u32 2147483647, %v565
  %vm576 = vcmp.eq.f32.partialorder %v575, 8.507059e+37
  %v577 = vand.u32 %v565, 2147483648
  %v578 = vor.u32 1.1754944e-38, %v577
  %v579 = vsel %vm576, %v578, %v574
  %v580 = vmul.f32 1.0, %v579
  %v581 = vrot.slane %v539, 4
  %v583 = vtanh.pop %v581
  %v584 = vrot.slane %v539, 6
  %v586 = vxor.u32 %v584, 2147483648
  %v587 = vmul.f32 %v586, 1.442695
  %v588 = vpow.pop %v587
  %v589 = vadd.f32 %v588, 1.0
  %v590 = vrcp.pop %v589
  %v591 = vmul.f32 %v589, %v590
  %v592 = vsub.f32 1.0, %v591
  %v593 = vmul.f32 %v590, %v592
  %v594 = vadd.f32 %v590, %v593
  %vm595 = vweird.f32 %v589
  %vm596 = vweird.f32 %v590
  %vm597 = vmor %vm595, %vm596
  %v598 = vsel %vm597, %v590, %v594
  %v599 = vand.u32 2147483647, %v589
  %vm600 = vcmp.eq.f32.partialorder %v599, 8.507059e+37
  %v601 = vand.u32 %v589, 2147483648
  %v602 = vor.u32 1.1754944e-38, %v601
  %v603 = vsel %vm600, %v602, %v598
  %v604 = vmul.f32 1.0, %v603
  %v605 = vmul.f32 %v580, %v443
  %v606 = vmul.f32 %v558, %v583
  %v607 = vadd.f32 %v605, %v606
  %v608 = vtanh.pop %v607
  %v609 = vmul.f32 %v604, %v608
  %s610 = scalar_lea.vmem [#allocation2], 2
  %611 = vst.msk [vmem:[%s610] sm:$0x3] %vm446, %v609
  %612 = vmatpush.msra.mxu0 %v81
  %613 = vmatpush.msra.mxu0 %v77
  %614 = vmatpush.msra.mxu0 %v73
  %615 = vmatpush.msra.mxu0 %v69
  %616 = vmatpush.msra.mxu0 %v65
  %617 = vmatpush.msra.mxu0 %v61
  %618 = vmatpush.msra.mxu0 %v57
  %619 = vmatpush.msra.mxu0 %v53
  %620 = vmatpush.msra.mxu0 %v49
  %621 = vmatpush.msra.mxu0 %v45
  %622 = vmatpush.msra.mxu0 %v41
  %623 = vmatpush.msra.mxu0 %v37
  %624 = vmatpush.msra.mxu0 %v33
  %625 = vmatpush.msra.mxu0 %v29
  %626 = vmatpush.msra.mxu0 %v25
  %627 = vmatpush.msra.mxu0 %v21
  %628 = vmatmul.f32.gmra.mxu0 %v609
  %v629 = vpop.f32.mrf.mxu0
  %v630 = vadd.f32 0.0, %v629
  %631 = vdwg.mxu0
  %632 = vmatpush.msra.mxu0 %v82
  %633 = vmatpush.msra.mxu0 %v78
  %634 = vmatpush.msra.mxu0 %v74
  %635 = vmatpush.msra.mxu0 %v70
  %636 = vmatpush.msra.mxu0 %v66
  %637 = vmatpush.msra.mxu0 %v62
  %638 = vmatpush.msra.mxu0 %v58
  %639 = vmatpush.msra.mxu0 %v54
  %640 = vmatpush.msra.mxu0 %v50
  %641 = vmatpush.msra.mxu0 %v46
  %642 = vmatpush.msra.mxu0 %v42
  %643 = vmatpush.msra.mxu0 %v38
  %644 = vmatpush.msra.mxu0 %v34
  %645 = vmatpush.msra.mxu0 %v30
  %646 = vmatpush.msra.mxu0 %v26
  %647 = vmatpush.msra.mxu0 %v22
  %648 = vmatmul.f32.gmra.mxu0 %v609
  %v649 = vpop.f32.mrf.mxu0
  %v650 = vadd.f32 0.0, %v649
  %651 = vdwg.mxu0
  %652 = vmatpush.msra.mxu0 %v83
  %653 = vmatpush.msra.mxu0 %v79
  %654 = vmatpush.msra.mxu0 %v75
  %655 = vmatpush.msra.mxu0 %v71
  %656 = vmatpush.msra.mxu0 %v67
  %657 = vmatpush.msra.mxu0 %v63
  %658 = vmatpush.msra.mxu0 %v59
  %659 = vmatpush.msra.mxu0 %v55
  %660 = vmatpush.msra.mxu0 %v51
  %661 = vmatpush.msra.mxu0 %v47
  %662 = vmatpush.msra.mxu0 %v43
  %663 = vmatpush.msra.mxu0 %v39
  %664 = vmatpush.msra.mxu0 %v35
  %665 = vmatpush.msra.mxu0 %v31
  %666 = vmatpush.msra.mxu0 %v27
  %667 = vmatpush.msra.mxu0 %v23
  %668 = vmatmul.f32.gmra.mxu0 %v609
  %v669 = vpop.f32.mrf.mxu0
  %v670 = vadd.f32 0.0, %v669
  %671 = vdwg.mxu0
  %672 = vmatpush.msra.mxu0 %v84
  %673 = vmatpush.msra.mxu0 %v80
  %674 = vmatpush.msra.mxu0 %v76
  %675 = vmatpush.msra.mxu0 %v72
  %676 = vmatpush.msra.mxu0 %v68
  %677 = vmatpush.msra.mxu0 %v64
  %678 = vmatpush.msra.mxu0 %v60
  %679 = vmatpush.msra.mxu0 %v56
  %680 = vmatpush.msra.mxu0 %v52
  %681 = vmatpush.msra.mxu0 %v48
  %682 = vmatpush.msra.mxu0 %v44
  %683 = vmatpush.msra.mxu0 %v40
  %684 = vmatpush.msra.mxu0 %v36
  %685 = vmatpush.msra.mxu0 %v32
  %686 = vmatpush.msra.mxu0 %v28
  %687 = vmatpush.msra.mxu0 %v24
  %688 = vmatmul.f32.gmra.mxu0 %v609
  %v689 = vpop.f32.mrf.mxu0
  %v690 = vadd.f32 0.0, %v689
  %691 = vdwg.mxu0
  %v696 = vrot.slane %v650, 6
  %v697 = vrot.slane %v670, 4
  %v698 = vrot.slane %v690, 2
  %v699 = vsel %vm240, %v630, %v696
  %v700 = vsel %vm242, %v697, %v698
  %v701 = vsel %vm244, %v699, %v700
  %v703 = vadd.f32 %v256, %v701
  %v704 = vxor.u32 %v703, 2147483648
  %v705 = vmul.f32 %v704, 1.442695
  %v706 = vpow.pop %v705
  %v707 = vadd.f32 %v706, 1.0
  %v708 = vrcp.pop %v707
  %v709 = vmul.f32 %v707, %v708
  %v710 = vsub.f32 1.0, %v709
  %v711 = vmul.f32 %v708, %v710
  %v712 = vadd.f32 %v708, %v711
  %vm713 = vweird.f32 %v707
  %vm714 = vweird.f32 %v708
  %vm715 = vmor %vm713, %vm714
  %v716 = vsel %vm715, %v708, %v712
  %v717 = vand.u32 2147483647, %v707
  %vm718 = vcmp.eq.f32.partialorder %v717, 8.507059e+37
  %v719 = vand.u32 %v707, 2147483648
  %v720 = vor.u32 1.1754944e-38, %v719
  %v721 = vsel %vm718, %v720, %v716
  %v722 = vmul.f32 1.0, %v721
  %v724 = vrot.slane %v703, 2
  %v726 = vxor.u32 %v724, 2147483648
  %v727 = vmul.f32 %v726, 1.442695
  %v728 = vpow.pop %v727
  %v729 = vadd.f32 %v728, 1.0
  %v730 = vrcp.pop %v729
  %v731 = vmul.f32 %v729, %v730
  %v732 = vsub.f32 1.0, %v731
  %v733 = vmul.f32 %v730, %v732
  %v734 = vadd.f32 %v730, %v733
  %vm735 = vweird.f32 %v729
  %vm736 = vweird.f32 %v730
  %vm737 = vmor %vm735, %vm736
  %v738 = vsel %vm737, %v730, %v734
  %v739 = vand.u32 2147483647, %v729
  %vm740 = vcmp.eq.f32.partialorder %v739, 8.507059e+37
  %v741 = vand.u32 %v729, 2147483648
  %v742 = vor.u32 1.1754944e-38, %v741
  %v743 = vsel %vm740, %v742, %v738
  %v744 = vmul.f32 1.0, %v743
  %v745 = vrot.slane %v703, 4
  %v747 = vtanh.pop %v745
  %v748 = vrot.slane %v703, 6
  %v750 = vxor.u32 %v748, 2147483648
  %v751 = vmul.f32 %v750, 1.442695
  %v752 = vpow.pop %v751
  %v753 = vadd.f32 %v752, 1.0
  %v754 = vrcp.pop %v753
  %v755 = vmul.f32 %v753, %v754
  %v756 = vsub.f32 1.0, %v755
  %v757 = vmul.f32 %v754, %v756
  %v758 = vadd.f32 %v754, %v757
  %vm759 = vweird.f32 %v753
  %vm760 = vweird.f32 %v754
  %vm761 = vmor %vm759, %vm760
  %v762 = vsel %vm761, %v754, %v758
  %v763 = vand.u32 2147483647, %v753
  %vm764 = vcmp.eq.f32.partialorder %v763, 8.507059e+37
  %v765 = vand.u32 %v753, 2147483648
  %v766 = vor.u32 1.1754944e-38, %v765
  %v767 = vsel %vm764, %v766, %v762
  %v768 = vmul.f32 1.0, %v767
  %v769 = vmul.f32 %v744, %v607
  %v770 = vmul.f32 %v722, %v747
  %v771 = vadd.f32 %v769, %v770
  %v772 = vtanh.pop %v771
  %v773 = vmul.f32 %v768, %v772
  %s774 = scalar_lea.vmem [#allocation2], 4
  %775 = vst.msk [vmem:[%s774] sm:$0x3] %vm446, %v773
  %776 = vmatpush.msra.mxu0 %v81
  %777 = vmatpush.msra.mxu0 %v77
  %778 = vmatpush.msra.mxu0 %v73
  %779 = vmatpush.msra.mxu0 %v69
  %780 = vmatpush.msra.mxu0 %v65
  %781 = vmatpush.msra.mxu0 %v61
  %782 = vmatpush.msra.mxu0 %v57
  %783 = vmatpush.msra.mxu0 %v53
  %784 = vmatpush.msra.mxu0 %v49
  %785 = vmatpush.msra.mxu0 %v45
  %786 = vmatpush.msra.mxu0 %v41
  %787 = vmatpush.msra.mxu0 %v37
  %788 = vmatpush.msra.mxu0 %v33
  %789 = vmatpush.msra.mxu0 %v29
  %790 = vmatpush.msra.mxu0 %v25
  %791 = vmatpush.msra.mxu0 %v21
  %792 = vmatmul.f32.gmra.mxu0 %v773
  %v793 = vpop.f32.mrf.mxu0
  %v794 = vadd.f32 0.0, %v793
  %795 = vdwg.mxu0
  %796 = vmatpush.msra.mxu0 %v82
  %797 = vmatpush.msra.mxu0 %v78
  %798 = vmatpush.msra.mxu0 %v74
  %799 = vmatpush.msra.mxu0 %v70
  %800 = vmatpush.msra.mxu0 %v66
  %801 = vmatpush.msra.mxu0 %v62
  %802 = vmatpush.msra.mxu0 %v58
  %803 = vmatpush.msra.mxu0 %v54
  %804 = vmatpush.msra.mxu0 %v50
  %805 = vmatpush.msra.mxu0 %v46
  %806 = vmatpush.msra.mxu0 %v42
  %807 = vmatpush.msra.mxu0 %v38
  %808 = vmatpush.msra.mxu0 %v34
  %809 = vmatpush.msra.mxu0 %v30
  %810 = vmatpush.msra.mxu0 %v26
  %811 = vmatpush.msra.mxu0 %v22
  %812 = vmatmul.f32.gmra.mxu0 %v773
  %v813 = vpop.f32.mrf.mxu0
  %v814 = vadd.f32 0.0, %v813
  %815 = vdwg.mxu0
  %816 = vmatpush.msra.mxu0 %v83
  %817 = vmatpush.msra.mxu0 %v79
  %818 = vmatpush.msra.mxu0 %v75
  %819 = vmatpush.msra.mxu0 %v71
  %820 = vmatpush.msra.mxu0 %v67
  %821 = vmatpush.msra.mxu0 %v63
  %822 = vmatpush.msra.mxu0 %v59
  %823 = vmatpush.msra.mxu0 %v55
  %824 = vmatpush.msra.mxu0 %v51
  %825 = vmatpush.msra.mxu0 %v47
  %826 = vmatpush.msra.mxu0 %v43
  %827 = vmatpush.msra.mxu0 %v39
  %828 = vmatpush.msra.mxu0 %v35
  %829 = vmatpush.msra.mxu0 %v31
  %830 = vmatpush.msra.mxu0 %v27
  %831 = vmatpush.msra.mxu0 %v23
  %832 = vmatmul.f32.gmra.mxu0 %v773
  %v833 = vpop.f32.mrf.mxu0
  %v834 = vadd.f32 0.0, %v833
  %835 = vdwg.mxu0
  %836 = vmatpush.msra.mxu0 %v84
  %837 = vmatpush.msra.mxu0 %v80
  %838 = vmatpush.msra.mxu0 %v76
  %839 = vmatpush.msra.mxu0 %v72
  %840 = vmatpush.msra.mxu0 %v68
  %841 = vmatpush.msra.mxu0 %v64
  %842 = vmatpush.msra.mxu0 %v60
  %843 = vmatpush.msra.mxu0 %v56
  %844 = vmatpush.msra.mxu0 %v52
  %845 = vmatpush.msra.mxu0 %v48
  %846 = vmatpush.msra.mxu0 %v44
  %847 = vmatpush.msra.mxu0 %v40
  %848 = vmatpush.msra.mxu0 %v36
  %849 = vmatpush.msra.mxu0 %v32
  %850 = vmatpush.msra.mxu0 %v28
  %851 = vmatpush.msra.mxu0 %v24
  %852 = vmatmul.f32.gmra.mxu0 %v773
  %v853 = vpop.f32.mrf.mxu0
  %v854 = vadd.f32 0.0, %v853
  %855 = vdwg.mxu0
  %v860 = vrot.slane %v814, 6
  %v861 = vrot.slane %v834, 4
  %v862 = vrot.slane %v854, 2
  %v863 = vsel %vm240, %v794, %v860
  %v864 = vsel %vm242, %v861, %v862
  %v865 = vsel %vm244, %v863, %v864
  %v867 = vadd.f32 %v260, %v865
  %v868 = vxor.u32 %v867, 2147483648
  %v869 = vmul.f32 %v868, 1.442695
  %v870 = vpow.pop %v869
  %v871 = vadd.f32 %v870, 1.0
  %v872 = vrcp.pop %v871
  %v873 = vmul.f32 %v871, %v872
  %v874 = vsub.f32 1.0, %v873
  %v875 = vmul.f32 %v872, %v874
  %v876 = vadd.f32 %v872, %v875
  %vm877 = vweird.f32 %v871
  %vm878 = vweird.f32 %v872
  %vm879 = vmor %vm877, %vm878
  %v880 = vsel %vm879, %v872, %v876
  %v881 = vand.u32 2147483647, %v871
  %vm882 = vcmp.eq.f32.partialorder %v881, 8.507059e+37
  %v883 = vand.u32 %v871, 2147483648
  %v884 = vor.u32 1.1754944e-38, %v883
  %v885 = vsel %vm882, %v884, %v880
  %v886 = vmul.f32 1.0, %v885
  %v888 = vrot.slane %v867, 2
  %v890 = vxor.u32 %v888, 2147483648
  %v891 = vmul.f32 %v890, 1.442695
  %v892 = vpow.pop %v891
  %v893 = vadd.f32 %v892, 1.0
  %v894 = vrcp.pop %v893
  %v895 = vmul.f32 %v893, %v894
  %v896 = vsub.f32 1.0, %v895
  %v897 = vmul.f32 %v894, %v896
  %v898 = vadd.f32 %v894, %v897
  %vm899 = vweird.f32 %v893
  %vm900 = vweird.f32 %v894
  %vm901 = vmor %vm899, %vm900
  %v902 = vsel %vm901, %v894, %v898
  %v903 = vand.u32 2147483647, %v893
  %vm904 = vcmp.eq.f32.partialorder %v903, 8.507059e+37
  %v905 = vand.u32 %v893, 2147483648
  %v906 = vor.u32 1.1754944e-38, %v905
  %v907 = vsel %vm904, %v906, %v902
  %v908 = vmul.f32 1.0, %v907
  %v909 = vrot.slane %v867, 4
  %v911 = vtanh.pop %v909
  %v912 = vrot.slane %v867, 6
  %v914 = vxor.u32 %v912, 2147483648
  %v915 = vmul.f32 %v914, 1.442695
  %v916 = vpow.pop %v915
  %v917 = vadd.f32 %v916, 1.0
  %v918 = vrcp.pop %v917
  %v919 = vmul.f32 %v917, %v918
  %v920 = vsub.f32 1.0, %v919
  %v921 = vmul.f32 %v918, %v920
  %v922 = vadd.f32 %v918, %v921
  %vm923 = vweird.f32 %v917
  %vm924 = vweird.f32 %v918
  %vm925 = vmor %vm923, %vm924
  %v926 = vsel %vm925, %v918, %v922
  %v927 = vand.u32 2147483647, %v917
  %vm928 = vcmp.eq.f32.partialorder %v927, 8.507059e+37
  %v929 = vand.u32 %v917, 2147483648
  %v930 = vor.u32 1.1754944e-38, %v929
  %v931 = vsel %vm928, %v930, %v926
  %v932 = vmul.f32 1.0, %v931
  %v933 = vmul.f32 %v908, %v771
  %v934 = vmul.f32 %v886, %v911
  %v935 = vadd.f32 %v933, %v934
  %v936 = vtanh.pop %v935
  %v937 = vmul.f32 %v932, %v936
  %s938 = scalar_lea.vmem [#allocation2], 6
  %939 = vst.msk [vmem:[%s938] sm:$0x3] %vm446, %v937
  %940 = vmatpush.msra.mxu0 %v81
  %941 = vmatpush.msra.mxu0 %v77
  %942 = vmatpush.msra.mxu0 %v73
  %943 = vmatpush.msra.mxu0 %v69
  %944 = vmatpush.msra.mxu0 %v65
  %945 = vmatpush.msra.mxu0 %v61
  %946 = vmatpush.msra.mxu0 %v57
  %947 = vmatpush.msra.mxu0 %v53
  %948 = vmatpush.msra.mxu0 %v49
  %949 = vmatpush.msra.mxu0 %v45
  %950 = vmatpush.msra.mxu0 %v41
  %951 = vmatpush.msra.mxu0 %v37
  %952 = vmatpush.msra.mxu0 %v33
  %953 = vmatpush.msra.mxu0 %v29
  %954 = vmatpush.msra.mxu0 %v25
  %955 = vmatpush.msra.mxu0 %v21
  %956 = vmatmul.f32.gmra.mxu0 %v937
  %v957 = vpop.f32.mrf.mxu0
  %v958 = vadd.f32 0.0, %v957
  %959 = vdwg.mxu0
  %960 = vmatpush.msra.mxu0 %v82
  %961 = vmatpush.msra.mxu0 %v78
  %962 = vmatpush.msra.mxu0 %v74
  %963 = vmatpush.msra.mxu0 %v70
  %964 = vmatpush.msra.mxu0 %v66
  %965 = vmatpush.msra.mxu0 %v62
  %966 = vmatpush.msra.mxu0 %v58
  %967 = vmatpush.msra.mxu0 %v54
  %968 = vmatpush.msra.mxu0 %v50
  %969 = vmatpush.msra.mxu0 %v46
  %970 = vmatpush.msra.mxu0 %v42
  %971 = vmatpush.msra.mxu0 %v38
  %972 = vmatpush.msra.mxu0 %v34
  %973 = vmatpush.msra.mxu0 %v30
  %974 = vmatpush.msra.mxu0 %v26
  %975 = vmatpush.msra.mxu0 %v22
  %976 = vmatmul.f32.gmra.mxu0 %v937
  %v977 = vpop.f32.mrf.mxu0
  %v978 = vadd.f32 0.0, %v977
  %979 = vdwg.mxu0
  %980 = vmatpush.msra.mxu0 %v83
  %981 = vmatpush.msra.mxu0 %v79
  %982 = vmatpush.msra.mxu0 %v75
  %983 = vmatpush.msra.mxu0 %v71
  %984 = vmatpush.msra.mxu0 %v67
  %985 = vmatpush.msra.mxu0 %v63
  %986 = vmatpush.msra.mxu0 %v59
  %987 = vmatpush.msra.mxu0 %v55
  %988 = vmatpush.msra.mxu0 %v51
  %989 = vmatpush.msra.mxu0 %v47
  %990 = vmatpush.msra.mxu0 %v43
  %991 = vmatpush.msra.mxu0 %v39
  %992 = vmatpush.msra.mxu0 %v35
  %993 = vmatpush.msra.mxu0 %v31
  %994 = vmatpush.msra.mxu0 %v27
  %995 = vmatpush.msra.mxu0 %v23
  %996 = vmatmul.f32.gmra.mxu0 %v937
  %v997 = vpop.f32.mrf.mxu0
  %v998 = vadd.f32 0.0, %v997
  %999 = vdwg.mxu0
  %1000 = vmatpush.msra.mxu0 %v84
  %1001 = vmatpush.msra.mxu0 %v80
  %1002 = vmatpush.msra.mxu0 %v76
  %1003 = vmatpush.msra.mxu0 %v72
  %1004 = vmatpush.msra.mxu0 %v68
  %1005 = vmatpush.msra.mxu0 %v64
  %1006 = vmatpush.msra.mxu0 %v60
  %1007 = vmatpush.msra.mxu0 %v56
  %1008 = vmatpush.msra.mxu0 %v52
  %1009 = vmatpush.msra.mxu0 %v48
  %1010 = vmatpush.msra.mxu0 %v44
  %1011 = vmatpush.msra.mxu0 %v40
  %1012 = vmatpush.msra.mxu0 %v36
  %1013 = vmatpush.msra.mxu0 %v32
  %1014 = vmatpush.msra.mxu0 %v28
  %1015 = vmatpush.msra.mxu0 %v24
  %1016 = vmatmul.f32.gmra.mxu0 %v937
  %v1017 = vpop.f32.mrf.mxu0
  %v1018 = vadd.f32 0.0, %v1017
  %1019 = vdwg.mxu0
  %v1024 = vrot.slane %v978, 6
  %v1025 = vrot.slane %v998, 4
  %v1026 = vrot.slane %v1018, 2
  %v1027 = vsel %vm240, %v958, %v1024
  %v1028 = vsel %vm242, %v1025, %v1026
  %v1029 = vsel %vm244, %v1027, %v1028
  %v1031 = vadd.f32 %v263, %v1029
  %v1032 = vxor.u32 %v1031, 2147483648
  %v1033 = vmul.f32 %v1032, 1.442695
  %v1034 = vpow.pop %v1033
  %v1035 = vadd.f32 %v1034, 1.0
  %v1036 = vrcp.pop %v1035
  %v1037 = vmul.f32 %v1035, %v1036
  %v1038 = vsub.f32 1.0, %v1037
  %v1039 = vmul.f32 %v1036, %v1038
  %v1040 = vadd.f32 %v1036, %v1039
  %vm1041 = vweird.f32 %v1035
  %vm1042 = vweird.f32 %v1036
  %vm1043 = vmor %vm1041, %vm1042
  %v1044 = vsel %vm1043, %v1036, %v1040
  %v1045 = vand.u32 2147483647, %v1035
  %vm1046 = vcmp.eq.f32.partialorder %v1045, 8.507059e+37
  %v1047 = vand.u32 %v1035, 2147483648
  %v1048 = vor.u32 1.1754944e-38, %v1047
  %v1049 = vsel %vm1046, %v1048, %v1044
  %v1050 = vmul.f32 1.0, %v1049
  %v1052 = vrot.slane %v1031, 2
  %v1054 = vxor.u32 %v1052, 2147483648
  %v1055 = vmul.f32 %v1054, 1.442695
  %v1056 = vpow.pop %v1055
  %v1057 = vadd.f32 %v1056, 1.0
  %v1058 = vrcp.pop %v1057
  %v1059 = vmul.f32 %v1057, %v1058
  %v1060 = vsub.f32 1.0, %v1059
  %v1061 = vmul.f32 %v1058, %v1060
  %v1062 = vadd.f32 %v1058, %v1061
  %vm1063 = vweird.f32 %v1057
  %vm1064 = vweird.f32 %v1058
  %vm1065 = vmor %vm1063, %vm1064
  %v1066 = vsel %vm1065, %v1058, %v1062
  %v1067 = vand.u32 2147483647, %v1057
  %vm1068 = vcmp.eq.f32.partialorder %v1067, 8.507059e+37
  %v1069 = vand.u32 %v1057, 2147483648
  %v1070 = vor.u32 1.1754944e-38, %v1069
  %v1071 = vsel %vm1068, %v1070, %v1066
  %v1072 = vmul.f32 1.0, %v1071
  %v1073 = vrot.slane %v1031, 4
  %v1075 = vtanh.pop %v1073
  %v1076 = vrot.slane %v1031, 6
  %v1078 = vxor.u32 %v1076, 2147483648
  %v1079 = vmul.f32 %v1078, 1.442695
  %v1080 = vpow.pop %v1079
  %v1081 = vadd.f32 %v1080, 1.0
  %v1082 = vrcp.pop %v1081
  %v1083 = vmul.f32 %v1081, %v1082
  %v1084 = vsub.f32 1.0, %v1083
  %v1085 = vmul.f32 %v1082, %v1084
  %v1086 = vadd.f32 %v1082, %v1085
  %vm1087 = vweird.f32 %v1081
  %vm1088 = vweird.f32 %v1082
  %vm1089 = vmor %vm1087, %vm1088
  %v1090 = vsel %vm1089, %v1082, %v1086
  %v1091 = vand.u32 2147483647, %v1081
  %vm1092 = vcmp.eq.f32.partialorder %v1091, 8.507059e+37
  %v1093 = vand.u32 %v1081, 2147483648
  %v1094 = vor.u32 1.1754944e-38, %v1093
  %v1095 = vsel %vm1092, %v1094, %v1090
  %v1096 = vmul.f32 1.0, %v1095
  %v1097 = vmul.f32 %v1072, %v935
  %v1098 = vmul.f32 %v1050, %v1075
  %v1099 = vadd.f32 %v1097, %v1098
  %v1100 = vtanh.pop %v1099
  %v1101 = vmul.f32 %v1096, %v1100
  %s1102 = scalar_lea.vmem [#allocation2], 8
  %1103 = vst.msk [vmem:[%s1102] sm:$0x3] %vm446, %v1101
  %1104 = vmatpush.msra.mxu0 %v81
  %1105 = vmatpush.msra.mxu0 %v77
  %1106 = vmatpush.msra.mxu0 %v73
  %1107 = vmatpush.msra.mxu0 %v69
  %1108 = vmatpush.msra.mxu0 %v65
  %1109 = vmatpush.msra.mxu0 %v61
  %1110 = vmatpush.msra.mxu0 %v57
  %1111 = vmatpush.msra.mxu0 %v53
  %1112 = vmatpush.msra.mxu0 %v49
  %1113 = vmatpush.msra.mxu0 %v45
  %1114 = vmatpush.msra.mxu0 %v41
  %1115 = vmatpush.msra.mxu0 %v37
  %1116 = vmatpush.msra.mxu0 %v33
  %1117 = vmatpush.msra.mxu0 %v29
  %1118 = vmatpush.msra.mxu0 %v25
  %1119 = vmatpush.msra.mxu0 %v21
  %1120 = vmatmul.f32.gmra.mxu0 %v1101
  %v1121 = vpop.f32.mrf.mxu0
  %v1122 = vadd.f32 0.0, %v1121
  %1123 = vdwg.mxu0
  %1124 = vmatpush.msra.mxu0 %v82
  %1125 = vmatpush.msra.mxu0 %v78
  %1126 = vmatpush.msra.mxu0 %v74
  %1127 = vmatpush.msra.mxu0 %v70
  %1128 = vmatpush.msra.mxu0 %v66
  %1129 = vmatpush.msra.mxu0 %v62
  %1130 = vmatpush.msra.mxu0 %v58
  %1131 = vmatpush.msra.mxu0 %v54
  %1132 = vmatpush.msra.mxu0 %v50
  %1133 = vmatpush.msra.mxu0 %v46
  %1134 = vmatpush.msra.mxu0 %v42
  %1135 = vmatpush.msra.mxu0 %v38
  %1136 = vmatpush.msra.mxu0 %v34
  %1137 = vmatpush.msra.mxu0 %v30
  %1138 = vmatpush.msra.mxu0 %v26
  %1139 = vmatpush.msra.mxu0 %v22
  %1140 = vmatmul.f32.gmra.mxu0 %v1101
  %v1141 = vpop.f32.mrf.mxu0
  %v1142 = vadd.f32 0.0, %v1141
  %1143 = vdwg.mxu0
  %1144 = vmatpush.msra.mxu0 %v83
  %1145 = vmatpush.msra.mxu0 %v79
  %1146 = vmatpush.msra.mxu0 %v75
  %1147 = vmatpush.msra.mxu0 %v71
  %1148 = vmatpush.msra.mxu0 %v67
  %1149 = vmatpush.msra.mxu0 %v63
  %1150 = vmatpush.msra.mxu0 %v59
  %1151 = vmatpush.msra.mxu0 %v55
  %1152 = vmatpush.msra.mxu0 %v51
  %1153 = vmatpush.msra.mxu0 %v47
  %1154 = vmatpush.msra.mxu0 %v43
  %1155 = vmatpush.msra.mxu0 %v39
  %1156 = vmatpush.msra.mxu0 %v35
  %1157 = vmatpush.msra.mxu0 %v31
  %1158 = vmatpush.msra.mxu0 %v27
  %1159 = vmatpush.msra.mxu0 %v23
  %1160 = vmatmul.f32.gmra.mxu0 %v1101
  %v1161 = vpop.f32.mrf.mxu0
  %v1162 = vadd.f32 0.0, %v1161
  %1163 = vdwg.mxu0
  %1164 = vmatpush.msra.mxu0 %v84
  %1165 = vmatpush.msra.mxu0 %v80
  %1166 = vmatpush.msra.mxu0 %v76
  %1167 = vmatpush.msra.mxu0 %v72
  %1168 = vmatpush.msra.mxu0 %v68
  %1169 = vmatpush.msra.mxu0 %v64
  %1170 = vmatpush.msra.mxu0 %v60
  %1171 = vmatpush.msra.mxu0 %v56
  %1172 = vmatpush.msra.mxu0 %v52
  %1173 = vmatpush.msra.mxu0 %v48
  %1174 = vmatpush.msra.mxu0 %v44
  %1175 = vmatpush.msra.mxu0 %v40
  %1176 = vmatpush.msra.mxu0 %v36
  %1177 = vmatpush.msra.mxu0 %v32
  %1178 = vmatpush.msra.mxu0 %v28
  %1179 = vmatpush.msra.mxu0 %v24
  %1180 = vmatmul.f32.gmra.mxu0 %v1101
  %v1181 = vpop.f32.mrf.mxu0
  %v1182 = vadd.f32 0.0, %v1181
  %1183 = vdwg.mxu0
  %v1188 = vrot.slane %v1142, 6
  %v1189 = vrot.slane %v1162, 4
  %v1190 = vrot.slane %v1182, 2
  %v1191 = vsel %vm240, %v1122, %v1188
  %v1192 = vsel %vm242, %v1189, %v1190
  %v1193 = vsel %vm244, %v1191, %v1192
  %v1195 = vadd.f32 %v267, %v1193
  %v1196 = vxor.u32 %v1195, 2147483648
  %v1197 = vmul.f32 %v1196, 1.442695
  %v1198 = vpow.pop %v1197
  %v1199 = vadd.f32 %v1198, 1.0
  %v1200 = vrcp.pop %v1199
  %v1201 = vmul.f32 %v1199, %v1200
  %v1202 = vsub.f32 1.0, %v1201
  %v1203 = vmul.f32 %v1200, %v1202
  %v1204 = vadd.f32 %v1200, %v1203
  %vm1205 = vweird.f32 %v1199
  %vm1206 = vweird.f32 %v1200
  %vm1207 = vmor %vm1205, %vm1206
  %v1208 = vsel %vm1207, %v1200, %v1204
  %v1209 = vand.u32 2147483647, %v1199
  %vm1210 = vcmp.eq.f32.partialorder %v1209, 8.507059e+37
  %v1211 = vand.u32 %v1199, 2147483648
  %v1212 = vor.u32 1.1754944e-38, %v1211
  %v1213 = vsel %vm1210, %v1212, %v1208
  %v1214 = vmul.f32 1.0, %v1213
  %v1216 = vrot.slane %v1195, 2
  %v1218 = vxor.u32 %v1216, 2147483648
  %v1219 = vmul.f32 %v1218, 1.442695
  %v1220 = vpow.pop %v1219
  %v1221 = vadd.f32 %v1220, 1.0
  %v1222 = vrcp.pop %v1221
  %v1223 = vmul.f32 %v1221, %v1222
  %v1224 = vsub.f32 1.0, %v1223
  %v1225 = vmul.f32 %v1222, %v1224
  %v1226 = vadd.f32 %v1222, %v1225
  %vm1227 = vweird.f32 %v1221
  %vm1228 = vweird.f32 %v1222
  %vm1229 = vmor %vm1227, %vm1228
  %v1230 = vsel %vm1229, %v1222, %v1226
  %v1231 = vand.u32 2147483647, %v1221
  %vm1232 = vcmp.eq.f32.partialorder %v1231, 8.507059e+37
  %v1233 = vand.u32 %v1221, 2147483648
  %v1234 = vor.u32 1.1754944e-38, %v1233
  %v1235 = vsel %vm1232, %v1234, %v1230
  %v1236 = vmul.f32 1.0, %v1235
  %v1237 = vrot.slane %v1195, 4
  %v1239 = vtanh.pop %v1237
  %v1240 = vrot.slane %v1195, 6
  %v1242 = vxor.u32 %v1240, 2147483648
  %v1243 = vmul.f32 %v1242, 1.442695
  %v1244 = vpow.pop %v1243
  %v1245 = vadd.f32 %v1244, 1.0
  %v1246 = vrcp.pop %v1245
  %v1247 = vmul.f32 %v1245, %v1246
  %v1248 = vsub.f32 1.0, %v1247
  %v1249 = vmul.f32 %v1246, %v1248
  %v1250 = vadd.f32 %v1246, %v1249
  %vm1251 = vweird.f32 %v1245
  %vm1252 = vweird.f32 %v1246
  %vm1253 = vmor %vm1251, %vm1252
  %v1254 = vsel %vm1253, %v1246, %v1250
  %v1255 = vand.u32 2147483647, %v1245
  %vm1256 = vcmp.eq.f32.partialorder %v1255, 8.507059e+37
  %v1257 = vand.u32 %v1245, 2147483648
  %v1258 = vor.u32 1.1754944e-38, %v1257
  %v1259 = vsel %vm1256, %v1258, %v1254
  %v1260 = vmul.f32 1.0, %v1259
  %v1261 = vmul.f32 %v1236, %v1099
  %v1262 = vmul.f32 %v1214, %v1239
  %v1263 = vadd.f32 %v1261, %v1262
  %v1264 = vtanh.pop %v1263
  %v1265 = vmul.f32 %v1260, %v1264
  %s1266 = scalar_lea.vmem [#allocation2], 10
  %1267 = vst.msk [vmem:[%s1266] sm:$0x3] %vm446, %v1265
  %1268 = vmatpush.msra.mxu0 %v81
  %1269 = vmatpush.msra.mxu0 %v77
  %1270 = vmatpush.msra.mxu0 %v73
  %1271 = vmatpush.msra.mxu0 %v69
  %1272 = vmatpush.msra.mxu0 %v65
  %1273 = vmatpush.msra.mxu0 %v61
  %1274 = vmatpush.msra.mxu0 %v57
  %1275 = vmatpush.msra.mxu0 %v53
  %1276 = vmatpush.msra.mxu0 %v49
  %1277 = vmatpush.msra.mxu0 %v45
  %1278 = vmatpush.msra.mxu0 %v41
  %1279 = vmatpush.msra.mxu0 %v37
  %1280 = vmatpush.msra.mxu0 %v33
  %1281 = vmatpush.msra.mxu0 %v29
  %1282 = vmatpush.msra.mxu0 %v25
  %1283 = vmatpush.msra.mxu0 %v21
  %1284 = vmatmul.f32.gmra.mxu0 %v1265
  %v1285 = vpop.f32.mrf.mxu0
  %v1286 = vadd.f32 0.0, %v1285
  %1287 = vdwg.mxu0
  %1288 = vmatpush.msra.mxu0 %v82
  %1289 = vmatpush.msra.mxu0 %v78
  %1290 = vmatpush.msra.mxu0 %v74
  %1291 = vmatpush.msra.mxu0 %v70
  %1292 = vmatpush.msra.mxu0 %v66
  %1293 = vmatpush.msra.mxu0 %v62
  %1294 = vmatpush.msra.mxu0 %v58
  %1295 = vmatpush.msra.mxu0 %v54
  %1296 = vmatpush.msra.mxu0 %v50
  %1297 = vmatpush.msra.mxu0 %v46
  %1298 = vmatpush.msra.mxu0 %v42
  %1299 = vmatpush.msra.mxu0 %v38
  %1300 = vmatpush.msra.mxu0 %v34
  %1301 = vmatpush.msra.mxu0 %v30
  %1302 = vmatpush.msra.mxu0 %v26
  %1303 = vmatpush.msra.mxu0 %v22
  %1304 = vmatmul.f32.gmra.mxu0 %v1265
  %v1305 = vpop.f32.mrf.mxu0
  %v1306 = vadd.f32 0.0, %v1305
  %1307 = vdwg.mxu0
  %1308 = vmatpush.msra.mxu0 %v83
  %1309 = vmatpush.msra.mxu0 %v79
  %1310 = vmatpush.msra.mxu0 %v75
  %1311 = vmatpush.msra.mxu0 %v71
  %1312 = vmatpush.msra.mxu0 %v67
  %1313 = vmatpush.msra.mxu0 %v63
  %1314 = vmatpush.msra.mxu0 %v59
  %1315 = vmatpush.msra.mxu0 %v55
  %1316 = vmatpush.msra.mxu0 %v51
  %1317 = vmatpush.msra.mxu0 %v47
  %1318 = vmatpush.msra.mxu0 %v43
  %1319 = vmatpush.msra.mxu0 %v39
  %1320 = vmatpush.msra.mxu0 %v35
  %1321 = vmatpush.msra.mxu0 %v31
  %1322 = vmatpush.msra.mxu0 %v27
  %1323 = vmatpush.msra.mxu0 %v23
  %1324 = vmatmul.f32.gmra.mxu0 %v1265
  %v1325 = vpop.f32.mrf.mxu0
  %v1326 = vadd.f32 0.0, %v1325
  %1327 = vdwg.mxu0
  %1328 = vmatpush.msra.mxu0 %v84
  %1329 = vmatpush.msra.mxu0 %v80
  %1330 = vmatpush.msra.mxu0 %v76
  %1331 = vmatpush.msra.mxu0 %v72
  %1332 = vmatpush.msra.mxu0 %v68
  %1333 = vmatpush.msra.mxu0 %v64
  %1334 = vmatpush.msra.mxu0 %v60
  %1335 = vmatpush.msra.mxu0 %v56
  %1336 = vmatpush.msra.mxu0 %v52
  %1337 = vmatpush.msra.mxu0 %v48
  %1338 = vmatpush.msra.mxu0 %v44
  %1339 = vmatpush.msra.mxu0 %v40
  %1340 = vmatpush.msra.mxu0 %v36
  %1341 = vmatpush.msra.mxu0 %v32
  %1342 = vmatpush.msra.mxu0 %v28
  %1343 = vmatpush.msra.mxu0 %v24
  %1344 = vmatmul.f32.gmra.mxu0 %v1265
  %v1345 = vpop.f32.mrf.mxu0
  %v1346 = vadd.f32 0.0, %v1345
  %1347 = vdwg.mxu0
  %v1352 = vrot.slane %v1306, 6
  %v1353 = vrot.slane %v1326, 4
  %v1354 = vrot.slane %v1346, 2
  %v1355 = vsel %vm240, %v1286, %v1352
  %v1356 = vsel %vm242, %v1353, %v1354
  %v1357 = vsel %vm244, %v1355, %v1356
  %v1359 = vadd.f32 %v271, %v1357
  %v1360 = vxor.u32 %v1359, 2147483648
  %v1361 = vmul.f32 %v1360, 1.442695
  %v1362 = vpow.pop %v1361
  %v1363 = vadd.f32 %v1362, 1.0
  %v1364 = vrcp.pop %v1363
  %v1365 = vmul.f32 %v1363, %v1364
  %v1366 = vsub.f32 1.0, %v1365
  %v1367 = vmul.f32 %v1364, %v1366
  %v1368 = vadd.f32 %v1364, %v1367
  %vm1369 = vweird.f32 %v1363
  %vm1370 = vweird.f32 %v1364
  %vm1371 = vmor %vm1369, %vm1370
  %v1372 = vsel %vm1371, %v1364, %v1368
  %v1373 = vand.u32 2147483647, %v1363
  %vm1374 = vcmp.eq.f32.partialorder %v1373, 8.507059e+37
  %v1375 = vand.u32 %v1363, 2147483648
  %v1376 = vor.u32 1.1754944e-38, %v1375
  %v1377 = vsel %vm1374, %v1376, %v1372
  %v1378 = vmul.f32 1.0, %v1377
  %v1380 = vrot.slane %v1359, 2
  %v1382 = vxor.u32 %v1380, 2147483648
  %v1383 = vmul.f32 %v1382, 1.442695
  %v1384 = vpow.pop %v1383
  %v1385 = vadd.f32 %v1384, 1.0
  %v1386 = vrcp.pop %v1385
  %v1387 = vmul.f32 %v1385, %v1386
  %v1388 = vsub.f32 1.0, %v1387
  %v1389 = vmul.f32 %v1386, %v1388
  %v1390 = vadd.f32 %v1386, %v1389
  %vm1391 = vweird.f32 %v1385
  %vm1392 = vweird.f32 %v1386
  %vm1393 = vmor %vm1391, %vm1392
  %v1394 = vsel %vm1393, %v1386, %v1390
  %v1395 = vand.u32 2147483647, %v1385
  %vm1396 = vcmp.eq.f32.partialorder %v1395, 8.507059e+37
  %v1397 = vand.u32 %v1385, 2147483648
  %v1398 = vor.u32 1.1754944e-38, %v1397
  %v1399 = vsel %vm1396, %v1398, %v1394
  %v1400 = vmul.f32 1.0, %v1399
  %v1401 = vrot.slane %v1359, 4
  %v1403 = vtanh.pop %v1401
  %v1404 = vrot.slane %v1359, 6
  %v1406 = vxor.u32 %v1404, 2147483648
  %v1407 = vmul.f32 %v1406, 1.442695
  %v1408 = vpow.pop %v1407
  %v1409 = vadd.f32 %v1408, 1.0
  %v1410 = vrcp.pop %v1409
  %v1411 = vmul.f32 %v1409, %v1410
  %v1412 = vsub.f32 1.0, %v1411
  %v1413 = vmul.f32 %v1410, %v1412
  %v1414 = vadd.f32 %v1410, %v1413
  %vm1415 = vweird.f32 %v1409
  %vm1416 = vweird.f32 %v1410
  %vm1417 = vmor %vm1415, %vm1416
  %v1418 = vsel %vm1417, %v1410, %v1414
  %v1419 = vand.u32 2147483647, %v1409
  %vm1420 = vcmp.eq.f32.partialorder %v1419, 8.507059e+37
  %v1421 = vand.u32 %v1409, 2147483648
  %v1422 = vor.u32 1.1754944e-38, %v1421
  %v1423 = vsel %vm1420, %v1422, %v1418
  %v1424 = vmul.f32 1.0, %v1423
  %v1425 = vmul.f32 %v1400, %v1263
  %v1426 = vmul.f32 %v1378, %v1403
  %v1427 = vadd.f32 %v1425, %v1426
  %v1428 = vtanh.pop %v1427
  %v1429 = vmul.f32 %v1424, %v1428
  %s1430 = scalar_lea.vmem [#allocation2], 12
  %1431 = vst.msk [vmem:[%s1430] sm:$0x3] %vm446, %v1429
  %1432 = vmatpush.msra.mxu0 %v81
  %1433 = vmatpush.msra.mxu0 %v77
  %1434 = vmatpush.msra.mxu0 %v73
  %1435 = vmatpush.msra.mxu0 %v69
  %1436 = vmatpush.msra.mxu0 %v65
  %1437 = vmatpush.msra.mxu0 %v61
  %1438 = vmatpush.msra.mxu0 %v57
  %1439 = vmatpush.msra.mxu0 %v53
  %1440 = vmatpush.msra.mxu0 %v49
  %1441 = vmatpush.msra.mxu0 %v45
  %1442 = vmatpush.msra.mxu0 %v41
  %1443 = vmatpush.msra.mxu0 %v37
  %1444 = vmatpush.msra.mxu0 %v33
  %1445 = vmatpush.msra.mxu0 %v29
  %1446 = vmatpush.msra.mxu0 %v25
  %1447 = vmatpush.msra.mxu0 %v21
  %1448 = vmatmul.f32.gmra.mxu0 %v1429
  %v1449 = vpop.f32.mrf.mxu0
  %v1450 = vadd.f32 0.0, %v1449
  %1451 = vdwg.mxu0
  %1452 = vmatpush.msra.mxu0 %v82
  %1453 = vmatpush.msra.mxu0 %v78
  %1454 = vmatpush.msra.mxu0 %v74
  %1455 = vmatpush.msra.mxu0 %v70
  %1456 = vmatpush.msra.mxu0 %v66
  %1457 = vmatpush.msra.mxu0 %v62
  %1458 = vmatpush.msra.mxu0 %v58
  %1459 = vmatpush.msra.mxu0 %v54
  %1460 = vmatpush.msra.mxu0 %v50
  %1461 = vmatpush.msra.mxu0 %v46
  %1462 = vmatpush.msra.mxu0 %v42
  %1463 = vmatpush.msra.mxu0 %v38
  %1464 = vmatpush.msra.mxu0 %v34
  %1465 = vmatpush.msra.mxu0 %v30
  %1466 = vmatpush.msra.mxu0 %v26
  %1467 = vmatpush.msra.mxu0 %v22
  %1468 = vmatmul.f32.gmra.mxu0 %v1429
  %v1469 = vpop.f32.mrf.mxu0
  %v1470 = vadd.f32 0.0, %v1469
  %1471 = vdwg.mxu0
  %1472 = vmatpush.msra.mxu0 %v83
  %1473 = vmatpush.msra.mxu0 %v79
  %1474 = vmatpush.msra.mxu0 %v75
  %1475 = vmatpush.msra.mxu0 %v71
  %1476 = vmatpush.msra.mxu0 %v67
  %1477 = vmatpush.msra.mxu0 %v63
  %1478 = vmatpush.msra.mxu0 %v59
  %1479 = vmatpush.msra.mxu0 %v55
  %1480 = vmatpush.msra.mxu0 %v51
  %1481 = vmatpush.msra.mxu0 %v47
  %1482 = vmatpush.msra.mxu0 %v43
  %1483 = vmatpush.msra.mxu0 %v39
  %1484 = vmatpush.msra.mxu0 %v35
  %1485 = vmatpush.msra.mxu0 %v31
  %1486 = vmatpush.msra.mxu0 %v27
  %1487 = vmatpush.msra.mxu0 %v23
  %1488 = vmatmul.f32.gmra.mxu0 %v1429
  %v1489 = vpop.f32.mrf.mxu0
  %v1490 = vadd.f32 0.0, %v1489
  %1491 = vdwg.mxu0
  %1492 = vmatpush.msra.mxu0 %v84
  %1493 = vmatpush.msra.mxu0 %v80
  %1494 = vmatpush.msra.mxu0 %v76
  %1495 = vmatpush.msra.mxu0 %v72
  %1496 = vmatpush.msra.mxu0 %v68
  %1497 = vmatpush.msra.mxu0 %v64
  %1498 = vmatpush.msra.mxu0 %v60
  %1499 = vmatpush.msra.mxu0 %v56
  %1500 = vmatpush.msra.mxu0 %v52
  %1501 = vmatpush.msra.mxu0 %v48
  %1502 = vmatpush.msra.mxu0 %v44
  %1503 = vmatpush.msra.mxu0 %v40
  %1504 = vmatpush.msra.mxu0 %v36
  %1505 = vmatpush.msra.mxu0 %v32
  %1506 = vmatpush.msra.mxu0 %v28
  %1507 = vmatpush.msra.mxu0 %v24
  %1508 = vmatmul.f32.gmra.mxu0 %v1429
  %v1509 = vpop.f32.mrf.mxu0
  %v1510 = vadd.f32 0.0, %v1509
  %1511 = vdwg.mxu0
  %v1516 = vrot.slane %v1470, 6
  %v1517 = vrot.slane %v1490, 4
  %v1518 = vrot.slane %v1510, 2
  %v1519 = vsel %vm240, %v1450, %v1516
  %v1520 = vsel %vm242, %v1517, %v1518
  %v1521 = vsel %vm244, %v1519, %v1520
  %v1523 = vadd.f32 %v275, %v1521
  %v1524 = vxor.u32 %v1523, 2147483648
  %v1525 = vmul.f32 %v1524, 1.442695
  %v1526 = vpow.pop %v1525
  %v1527 = vadd.f32 %v1526, 1.0
  %v1528 = vrcp.pop %v1527
  %v1529 = vmul.f32 %v1527, %v1528
  %v1530 = vsub.f32 1.0, %v1529
  %v1531 = vmul.f32 %v1528, %v1530
  %v1532 = vadd.f32 %v1528, %v1531
  %vm1533 = vweird.f32 %v1527
  %vm1534 = vweird.f32 %v1528
  %vm1535 = vmor %vm1533, %vm1534
  %v1536 = vsel %vm1535, %v1528, %v1532
  %v1537 = vand.u32 2147483647, %v1527
  %vm1538 = vcmp.eq.f32.partialorder %v1537, 8.507059e+37
  %v1539 = vand.u32 %v1527, 2147483648
  %v1540 = vor.u32 1.1754944e-38, %v1539
  %v1541 = vsel %vm1538, %v1540, %v1536
  %v1542 = vmul.f32 1.0, %v1541
  %v1544 = vrot.slane %v1523, 2
  %v1546 = vxor.u32 %v1544, 2147483648
  %v1547 = vmul.f32 %v1546, 1.442695
  %v1548 = vpow.pop %v1547
  %v1549 = vadd.f32 %v1548, 1.0
  %v1550 = vrcp.pop %v1549
  %v1551 = vmul.f32 %v1549, %v1550
  %v1552 = vsub.f32 1.0, %v1551
  %v1553 = vmul.f32 %v1550, %v1552
  %v1554 = vadd.f32 %v1550, %v1553
  %vm1555 = vweird.f32 %v1549
  %vm1556 = vweird.f32 %v1550
  %vm1557 = vmor %vm1555, %vm1556
  %v1558 = vsel %vm1557, %v1550, %v1554
  %v1559 = vand.u32 2147483647, %v1549
  %vm1560 = vcmp.eq.f32.partialorder %v1559, 8.507059e+37
  %v1561 = vand.u32 %v1549, 2147483648
  %v1562 = vor.u32 1.1754944e-38, %v1561
  %v1563 = vsel %vm1560, %v1562, %v1558
  %v1564 = vmul.f32 1.0, %v1563
  %v1565 = vrot.slane %v1523, 4
  %v1567 = vtanh.pop %v1565
  %v1568 = vrot.slane %v1523, 6
  %v1570 = vxor.u32 %v1568, 2147483648
  %v1571 = vmul.f32 %v1570, 1.442695
  %v1572 = vpow.pop %v1571
  %v1573 = vadd.f32 %v1572, 1.0
  %v1574 = vrcp.pop %v1573
  %v1575 = vmul.f32 %v1573, %v1574
  %v1576 = vsub.f32 1.0, %v1575
  %v1577 = vmul.f32 %v1574, %v1576
  %v1578 = vadd.f32 %v1574, %v1577
  %vm1579 = vweird.f32 %v1573
  %vm1580 = vweird.f32 %v1574
  %vm1581 = vmor %vm1579, %vm1580
  %v1582 = vsel %vm1581, %v1574, %v1578
  %v1583 = vand.u32 2147483647, %v1573
  %vm1584 = vcmp.eq.f32.partialorder %v1583, 8.507059e+37
  %v1585 = vand.u32 %v1573, 2147483648
  %v1586 = vor.u32 1.1754944e-38, %v1585
  %v1587 = vsel %vm1584, %v1586, %v1582
  %v1588 = vmul.f32 1.0, %v1587
  %v1589 = vmul.f32 %v1564, %v1427
  %v1590 = vmul.f32 %v1542, %v1567
  %v1591 = vadd.f32 %v1589, %v1590
  %v1592 = vtanh.pop %v1591
  %v1593 = vmul.f32 %v1588, %v1592
  %s1594 = scalar_lea.vmem [#allocation2], 14
  %1595 = vst.msk [vmem:[%s1594] sm:$0x3] %vm446, %v1593
  %v1596 = vld [vmem:[%s2] sm:$0xff]
  %v1597 = vld [vmem:[%s2 + $0x8] sm:$0xff]
  %v1598 = vld [vmem:[%s2 + $0x10] sm:$0xff]
  %v1599 = vld [vmem:[%s2 + $0x18] sm:$0xff]
  %v1600 = vld [vmem:[%s2 + $0x20] sm:$0xff]
  %v1601 = vld [vmem:[%s2 + $0x28] sm:$0xff]
  %v1602 = vld [vmem:[%s2 + $0x30] sm:$0xff]
  %v1603 = vld [vmem:[%s2 + $0x38] sm:$0xff]
  %v1604 = vld [vmem:[%s2 + $0x40] sm:$0xff]
  %v1605 = vld [vmem:[%s2 + $0x48] sm:$0xff]
  %v1606 = vld [vmem:[%s2 + $0x50] sm:$0xff]
  %v1607 = vld [vmem:[%s2 + $0x58] sm:$0xff]
  %v1608 = vld [vmem:[%s2 + $0x60] sm:$0xff]
  %v1609 = vld [vmem:[%s2 + $0x68] sm:$0xff]
  %v1610 = vld [vmem:[%s2 + $0x70] sm:$0xff]
  %v1611 = vld [vmem:[%s2 + $0x78] sm:$0xff]
  %v1612 = vld [vmem:[%s2 + $0x80] sm:$0xff]
  %v1613 = vld [vmem:[%s2 + $0x88] sm:$0xff]
  %v1614 = vld [vmem:[%s2 + $0x90] sm:$0xff]
  %v1615 = vld [vmem:[%s2 + $0x98] sm:$0xff]
  %v1616 = vld [vmem:[%s2 + $0xa0] sm:$0xff]
  %v1617 = vld [vmem:[%s2 + $0xa8] sm:$0xff]
  %v1618 = vld [vmem:[%s2 + $0xb0] sm:$0xff]
  %v1619 = vld [vmem:[%s2 + $0xb8] sm:$0xff]
  %v1620 = vld [vmem:[%s2 + $0xc0] sm:$0xff]
  %v1621 = vld [vmem:[%s2 + $0xc8] sm:$0xff]
  %v1622 = vld [vmem:[%s2 + $0xd0] sm:$0xff]
  %v1623 = vld [vmem:[%s2 + $0xd8] sm:$0xff]
  %v1624 = vld [vmem:[%s2 + $0xe0] sm:$0xff]
  %v1625 = vld [vmem:[%s2 + $0xe8] sm:$0xff]
  %v1626 = vld [vmem:[%s2 + $0xf0] sm:$0xff]
  %v1627 = vld [vmem:[%s2 + $0xf8] sm:$0xff]
  %v1628 = vld [vmem:[%s2 + $0x100] sm:$0xff]
  %v1629 = vld [vmem:[%s2 + $0x108] sm:$0xff]
  %v1630 = vld [vmem:[%s2 + $0x110] sm:$0xff]
  %v1631 = vld [vmem:[%s2 + $0x118] sm:$0xff]
  %v1632 = vld [vmem:[%s2 + $0x120] sm:$0xff]
  %v1633 = vld [vmem:[%s2 + $0x128] sm:$0xff]
  %v1634 = vld [vmem:[%s2 + $0x130] sm:$0xff]
  %v1635 = vld [vmem:[%s2 + $0x138] sm:$0xff]
  %v1636 = vld [vmem:[%s2 + $0x140] sm:$0xff]
  %v1637 = vld [vmem:[%s2 + $0x148] sm:$0xff]
  %v1638 = vld [vmem:[%s2 + $0x150] sm:$0xff]
  %v1639 = vld [vmem:[%s2 + $0x158] sm:$0xff]
  %v1640 = vld [vmem:[%s2 + $0x160] sm:$0xff]
  %v1641 = vld [vmem:[%s2 + $0x168] sm:$0xff]
  %v1642 = vld [vmem:[%s2 + $0x170] sm:$0xff]
  %v1643 = vld [vmem:[%s2 + $0x178] sm:$0xff]
  %v1644 = vld [vmem:[%s2 + $0x180] sm:$0xff]
  %v1645 = vld [vmem:[%s2 + $0x188] sm:$0xff]
  %v1646 = vld [vmem:[%s2 + $0x190] sm:$0xff]
  %v1647 = vld [vmem:[%s2 + $0x198] sm:$0xff]
  %v1648 = vld [vmem:[%s2 + $0x1a0] sm:$0xff]
  %v1649 = vld [vmem:[%s2 + $0x1a8] sm:$0xff]
  %v1650 = vld [vmem:[%s2 + $0x1b0] sm:$0xff]
  %v1651 = vld [vmem:[%s2 + $0x1b8] sm:$0xff]
  %v1652 = vld [vmem:[%s2 + $0x1c0] sm:$0xff]
  %v1653 = vld [vmem:[%s2 + $0x1c8] sm:$0xff]
  %v1654 = vld [vmem:[%s2 + $0x1d0] sm:$0xff]
  %v1655 = vld [vmem:[%s2 + $0x1d8] sm:$0xff]
  %v1656 = vld [vmem:[%s2 + $0x1e0] sm:$0xff]
  %v1657 = vld [vmem:[%s2 + $0x1e8] sm:$0xff]
  %v1658 = vld [vmem:[%s2 + $0x1f0] sm:$0xff]
  %v1659 = vld [vmem:[%s2 + $0x1f8] sm:$0xff]
  %v1660 = vld [vmem:[%s2 + $0x200] sm:$0xff]
  %v1661 = vld [vmem:[%s2 + $0x208] sm:$0xff]
  %v1662 = vld [vmem:[%s2 + $0x210] sm:$0xff]
  %v1663 = vld [vmem:[%s2 + $0x218] sm:$0xff]
  %v1664 = vld [vmem:[%s2 + $0x220] sm:$0xff]
  %v1665 = vld [vmem:[%s2 + $0x228] sm:$0xff]
  %v1666 = vld [vmem:[%s2 + $0x230] sm:$0xff]
  %v1667 = vld [vmem:[%s2 + $0x238] sm:$0xff]
  %v1668 = vld [vmem:[%s2 + $0x240] sm:$0xff]
  %v1669 = vld [vmem:[%s2 + $0x248] sm:$0xff]
  %v1670 = vld [vmem:[%s2 + $0x250] sm:$0xff]
  %v1671 = vld [vmem:[%s2 + $0x258] sm:$0xff]
  %v1672 = vld [vmem:[%s2 + $0x260] sm:$0xff]
  %v1673 = vld [vmem:[%s2 + $0x268] sm:$0xff]
  %v1674 = vld [vmem:[%s2 + $0x270] sm:$0xff]
  %v1675 = vld [vmem:[%s2 + $0x278] sm:$0xff]
  %s1676 = scalar_lea.vmem %s2, 640
  %v1677 = vld [vmem:[%s1676] ss:$8 sm:$0xf]
  %v1678 = vld [vmem:[#allocation2] sm:$0x3]
  %v1679 = vld [vmem:[#allocation2 + $0x2] sm:$0x3]
  %v1680 = vld [vmem:[#allocation2 + $0x4] sm:$0x3]
  %v1681 = vld [vmem:[#allocation2 + $0x6] sm:$0x3]
  %v1682 = vld [vmem:[#allocation2 + $0x8] sm:$0x3]
  %v1683 = vld [vmem:[#allocation2 + $0xa] sm:$0x3]
  %v1684 = vld [vmem:[#allocation2 + $0xc] sm:$0x3]
  %v1685 = vld [vmem:[#allocation2 + $0xe] sm:$0x3]
  %v1687 = vperm.slane %v1677, 0
  %v1688 = vperm.slane %v1677, 1
  %v1689 = vperm.slane %v1677, 2
  %v1690 = vperm.slane %v1677, 3
  %1703 = vst [vmem:[#allocation1] ss:$4 sm:$0xff] %v1678
  %s1704 = scalar_lea.vmem [#allocation1], 1
  %1705 = vst [vmem:[%s1704] ss:$4 sm:$0xff] %v1679
  %s1706 = scalar_lea.vmem [#allocation1], 2
  %1707 = vst [vmem:[%s1706] ss:$4 sm:$0xff] %v1680
  %s1708 = scalar_lea.vmem [#allocation1], 3
  %1709 = vst [vmem:[%s1708] ss:$4 sm:$0xff] %v1681
  %s1710 = scalar_lea.vmem [#allocation1], 32
  %1711 = vst [vmem:[%s1710] ss:$4 sm:$0xff] %v1682
  %s1712 = scalar_lea.vmem [#allocation1], 33
  %1713 = vst [vmem:[%s1712] ss:$4 sm:$0xff] %v1683
  %s1714 = scalar_lea.vmem [#allocation1], 34
  %1715 = vst [vmem:[%s1714] ss:$4 sm:$0xff] %v1684
  %s1716 = scalar_lea.vmem [#allocation1], 35
  %1717 = vst [vmem:[%s1716] ss:$4 sm:$0xff] %v1685
  %v1718 = vld.sshfl [vmem:[#allocation1] sm:$0xff pattern:$0x73625140]
  %v1719 = vld.sshfl [vmem:[#allocation1 + $0x20] sm:$0xff pattern:$0x73625140]
  %vm1720 = vcmask 261120
  %v1721 = vsel %vm1720, %v1718, 0
  %v1723 = vsel %vm1720, %v1719, 0
  %1725 = vmatpush.msra.mxu0 0.0
  %1726 = vmatpush.msra.mxu0 0.0
  %1727 = vmatpush.msra.mxu0 0.0
  %1728 = vmatpush.msra.mxu0 0.0
  %1729 = vmatpush.msra.mxu0 0.0
  %1730 = vmatpush.msra.mxu0 0.0
  %1731 = vmatpush.msra.mxu0 0.0
  %1732 = vmatpush.msra.mxu0 0.0
  %1733 = vmatpush.msra.mxu0 0.0
  %1734 = vmatpush.msra.mxu0 0.0
  %1735 = vmatpush.msra.mxu0 0.0
  %1736 = vmatpush.msra.mxu0 0.0
  %1737 = vmatpush.msra.mxu0 %v1608
  %1738 = vmatpush.msra.mxu0 %v1604
  %1739 = vmatpush.msra.mxu0 %v1600
  %1740 = vmatpush.msra.mxu0 %v1596
  %1741 = vmatmul.f32.gmra.mxu0 %v1721
  %v1742 = vpop.f32.mrf.mxu0
  %v1743 = vadd.f32 %v1687, %v1742
  %1744 = vmatmul.f32.gmra.mxu0 %v1723
  %v1745 = vpop.f32.mrf.mxu0
  %v1746 = vadd.f32 %v1687, %v1745
  %1747 = vdwg.mxu0
  %1748 = vmatpush.msra.mxu0 0.0
  %1749 = vmatpush.msra.mxu0 0.0
  %1750 = vmatpush.msra.mxu0 0.0
  %1751 = vmatpush.msra.mxu0 0.0
  %1752 = vmatpush.msra.mxu0 0.0
  %1753 = vmatpush.msra.mxu0 0.0
  %1754 = vmatpush.msra.mxu0 0.0
  %1755 = vmatpush.msra.mxu0 0.0
  %1756 = vmatpush.msra.mxu0 0.0
  %1757 = vmatpush.msra.mxu0 0.0
  %1758 = vmatpush.msra.mxu0 0.0
  %1759 = vmatpush.msra.mxu0 0.0
  %1760 = vmatpush.msra.mxu0 %v1609
  %1761 = vmatpush.msra.mxu0 %v1605
  %1762 = vmatpush.msra.mxu0 %v1601
  %1763 = vmatpush.msra.mxu0 %v1597
  %1764 = vmatmul.f32.gmra.mxu0 %v1721
  %v1765 = vpop.f32.mrf.mxu0
  %v1766 = vadd.f32 %v1688, %v1765
  %1767 = vmatmul.f32.gmra.mxu0 %v1723
  %v1768 = vpop.f32.mrf.mxu0
  %v1769 = vadd.f32 %v1688, %v1768
  %1770 = vdwg.mxu0
  %1771 = vmatpush.msra.mxu0 0.0
  %1772 = vmatpush.msra.mxu0 0.0
  %1773 = vmatpush.msra.mxu0 0.0
  %1774 = vmatpush.msra.mxu0 0.0
  %1775 = vmatpush.msra.mxu0 0.0
  %1776 = vmatpush.msra.mxu0 0.0
  %1777 = vmatpush.msra.mxu0 0.0
  %1778 = vmatpush.msra.mxu0 0.0
  %1779 = vmatpush.msra.mxu0 0.0
  %1780 = vmatpush.msra.mxu0 0.0
  %1781 = vmatpush.msra.mxu0 0.0
  %1782 = vmatpush.msra.mxu0 0.0
  %1783 = vmatpush.msra.mxu0 %v1610
  %1784 = vmatpush.msra.mxu0 %v1606
  %1785 = vmatpush.msra.mxu0 %v1602
  %1786 = vmatpush.msra.mxu0 %v1598
  %1787 = vmatmul.f32.gmra.mxu0 %v1721
  %v1788 = vpop.f32.mrf.mxu0
  %v1789 = vadd.f32 %v1689, %v1788
  %1790 = vmatmul.f32.gmra.mxu0 %v1723
  %v1791 = vpop.f32.mrf.mxu0
  %v1792 = vadd.f32 %v1689, %v1791
  %1793 = vdwg.mxu0
  %1794 = vmatpush.msra.mxu0 0.0
  %1795 = vmatpush.msra.mxu0 0.0
  %1796 = vmatpush.msra.mxu0 0.0
  %1797 = vmatpush.msra.mxu0 0.0
  %1798 = vmatpush.msra.mxu0 0.0
  %1799 = vmatpush.msra.mxu0 0.0
  %1800 = vmatpush.msra.mxu0 0.0
  %1801 = vmatpush.msra.mxu0 0.0
  %1802 = vmatpush.msra.mxu0 0.0
  %1803 = vmatpush.msra.mxu0 0.0
  %1804 = vmatpush.msra.mxu0 0.0
  %1805 = vmatpush.msra.mxu0 0.0
  %1806 = vmatpush.msra.mxu0 %v1611
  %1807 = vmatpush.msra.mxu0 %v1607
  %1808 = vmatpush.msra.mxu0 %v1603
  %1809 = vmatpush.msra.mxu0 %v1599
  %1810 = vmatmul.f32.gmra.mxu0 %v1721
  %v1811 = vpop.f32.mrf.mxu0
  %v1812 = vadd.f32 %v1690, %v1811
  %1813 = vmatmul.f32.gmra.mxu0 %v1723
  %v1814 = vpop.f32.mrf.mxu0
  %v1815 = vadd.f32 %v1690, %v1814
  %1816 = vdwg.mxu0
  %v1825 = vrot.slane %v1766, 6
  %v1826 = vrot.slane %v1789, 4
  %v1827 = vrot.slane %v1812, 2
  %v1828 = vrot.slane %v1769, 6
  %v1829 = vrot.slane %v1792, 4
  %v1830 = vrot.slane %v1815, 2
  %v1831 = vsel %vm240, %v1743, %v1825
  %v1832 = vsel %vm242, %v1826, %v1827
  %v1833 = vsel %vm244, %v1831, %v1832
  %v1834 = vsel %vm246, %v1743, %v1825
  %v1835 = vsel %vm248, %v1827, %v1826
  %v1836 = vsel %vm250, %v1834, %v1835
  %v1837 = vrot.slane %v1836, 2
  %v1838 = vsel %vm242, %v1743, %v1825
  %v1839 = vsel %vm240, %v1826, %v1827
  %v1840 = vsel %vm244, %v1839, %v1838
  %v1841 = vrot.slane %v1840, 4
  %v1842 = vsel %vm248, %v1825, %v1743
  %v1843 = vsel %vm246, %v1826, %v1827
  %v1844 = vsel %vm250, %v1843, %v1842
  %v1845 = vrot.slane %v1844, 6
  %v1846 = vsel %vm240, %v1746, %v1828
  %v1847 = vsel %vm242, %v1829, %v1830
  %v1848 = vsel %vm244, %v1846, %v1847
  %v1849 = vsel %vm246, %v1746, %v1828
  %v1850 = vsel %vm248, %v1830, %v1829
  %v1851 = vsel %vm250, %v1849, %v1850
  %v1852 = vrot.slane %v1851, 2
  %v1853 = vsel %vm242, %v1746, %v1828
  %v1854 = vsel %vm240, %v1829, %v1830
  %v1855 = vsel %vm244, %v1854, %v1853
  %v1856 = vrot.slane %v1855, 4
  %v1857 = vsel %vm248, %v1828, %v1746
  %v1858 = vsel %vm246, %v1829, %v1830
  %v1859 = vsel %vm250, %v1858, %v1857
  %v1860 = vrot.slane %v1859, 6
  %1869 = vmatpush.msra.mxu0 %v1672
  %1870 = vmatpush.msra.mxu0 %v1668
  %1871 = vmatpush.msra.mxu0 %v1664
  %1872 = vmatpush.msra.mxu0 %v1660
  %1873 = vmatpush.msra.mxu0 %v1656
  %1874 = vmatpush.msra.mxu0 %v1652
  %1875 = vmatpush.msra.mxu0 %v1648
  %1876 = vmatpush.msra.mxu0 %v1644
  %1877 = vmatpush.msra.mxu0 %v1640
  %1878 = vmatpush.msra.mxu0 %v1636
  %1879 = vmatpush.msra.mxu0 %v1632
  %1880 = vmatpush.msra.mxu0 %v1628
  %1881 = vmatpush.msra.mxu0 %v1624
  %1882 = vmatpush.msra.mxu0 %v1620
  %1883 = vmatpush.msra.mxu0 %v1616
  %1884 = vmatpush.msra.mxu0 %v1612
  %1885 = vmatmul.f32.gmra.mxu0 0.0
  %v1886 = vpop.f32.mrf.mxu0
  %v1887 = vadd.f32 0.0, %v1886
  %1888 = vdwg.mxu0
  %1889 = vmatpush.msra.mxu0 %v1673
  %1890 = vmatpush.msra.mxu0 %v1669
  %1891 = vmatpush.msra.mxu0 %v1665
  %1892 = vmatpush.msra.mxu0 %v1661
  %1893 = vmatpush.msra.mxu0 %v1657
  %1894 = vmatpush.msra.mxu0 %v1653
  %1895 = vmatpush.msra.mxu0 %v1649
  %1896 = vmatpush.msra.mxu0 %v1645
  %1897 = vmatpush.msra.mxu0 %v1641
  %1898 = vmatpush.msra.mxu0 %v1637
  %1899 = vmatpush.msra.mxu0 %v1633
  %1900 = vmatpush.msra.mxu0 %v1629
  %1901 = vmatpush.msra.mxu0 %v1625
  %1902 = vmatpush.msra.mxu0 %v1621
  %1903 = vmatpush.msra.mxu0 %v1617
  %1904 = vmatpush.msra.mxu0 %v1613
  %1905 = vmatmul.f32.gmra.mxu0 0.0
  %v1906 = vpop.f32.mrf.mxu0
  %v1907 = vadd.f32 0.0, %v1906
  %1908 = vdwg.mxu0
  %1909 = vmatpush.msra.mxu0 %v1674
  %1910 = vmatpush.msra.mxu0 %v1670
  %1911 = vmatpush.msra.mxu0 %v1666
  %1912 = vmatpush.msra.mxu0 %v1662
  %1913 = vmatpush.msra.mxu0 %v1658
  %1914 = vmatpush.msra.mxu0 %v1654
  %1915 = vmatpush.msra.mxu0 %v1650
  %1916 = vmatpush.msra.mxu0 %v1646
  %1917 = vmatpush.msra.mxu0 %v1642
  %1918 = vmatpush.msra.mxu0 %v1638
  %1919 = vmatpush.msra.mxu0 %v1634
  %1920 = vmatpush.msra.mxu0 %v1630
  %1921 = vmatpush.msra.mxu0 %v1626
  %1922 = vmatpush.msra.mxu0 %v1622
  %1923 = vmatpush.msra.mxu0 %v1618
  %1924 = vmatpush.msra.mxu0 %v1614
  %1925 = vmatmul.f32.gmra.mxu0 0.0
  %v1926 = vpop.f32.mrf.mxu0
  %v1927 = vadd.f32 0.0, %v1926
  %1928 = vdwg.mxu0
  %1929 = vmatpush.msra.mxu0 %v1675
  %1930 = vmatpush.msra.mxu0 %v1671
  %1931 = vmatpush.msra.mxu0 %v1667
  %1932 = vmatpush.msra.mxu0 %v1663
  %1933 = vmatpush.msra.mxu0 %v1659
  %1934 = vmatpush.msra.mxu0 %v1655
  %1935 = vmatpush.msra.mxu0 %v1651
  %1936 = vmatpush.msra.mxu0 %v1647
  %1937 = vmatpush.msra.mxu0 %v1643
  %1938 = vmatpush.msra.mxu0 %v1639
  %1939 = vmatpush.msra.mxu0 %v1635
  %1940 = vmatpush.msra.mxu0 %v1631
  %1941 = vmatpush.msra.mxu0 %v1627
  %1942 = vmatpush.msra.mxu0 %v1623
  %1943 = vmatpush.msra.mxu0 %v1619
  %1944 = vmatpush.msra.mxu0 %v1615
  %1945 = vmatmul.f32.gmra.mxu0 0.0
  %v1946 = vpop.f32.mrf.mxu0
  %v1947 = vadd.f32 0.0, %v1946
  %1948 = vdwg.mxu0
  %v1953 = vrot.slane %v1907, 6
  %v1954 = vrot.slane %v1927, 4
  %v1955 = vrot.slane %v1947, 2
  %v1956 = vsel %vm240, %v1887, %v1953
  %v1957 = vsel %vm242, %v1954, %v1955
  %v1958 = vsel %vm244, %v1956, %v1957
  %v1960 = vadd.f32 %v1833, %v1958
  %v1961 = vxor.u32 %v1960, 2147483648
  %v1962 = vmul.f32 %v1961, 1.442695
  %v1963 = vpow.pop %v1962
  %v1964 = vadd.f32 %v1963, 1.0
  %v1965 = vrcp.pop %v1964
  %v1966 = vmul.f32 %v1964, %v1965
  %v1967 = vsub.f32 1.0, %v1966
  %v1968 = vmul.f32 %v1965, %v1967
  %v1969 = vadd.f32 %v1965, %v1968
  %vm1970 = vweird.f32 %v1964
  %vm1971 = vweird.f32 %v1965
  %vm1972 = vmor %vm1970, %vm1971
  %v1973 = vsel %vm1972, %v1965, %v1969
  %v1974 = vand.u32 2147483647, %v1964
  %vm1975 = vcmp.eq.f32.partialorder %v1974, 8.507059e+37
  %v1976 = vand.u32 %v1964, 2147483648
  %v1977 = vor.u32 1.1754944e-38, %v1976
  %v1978 = vsel %vm1975, %v1977, %v1973
  %v1979 = vmul.f32 1.0, %v1978
  %v1981 = vrot.slane %v1960, 2
  %v1983 = vxor.u32 %v1981, 2147483648
  %v1984 = vmul.f32 %v1983, 1.442695
  %v1985 = vpow.pop %v1984
  %v1986 = vadd.f32 %v1985, 1.0
  %v1987 = vrcp.pop %v1986
  %v1988 = vmul.f32 %v1986, %v1987
  %v1989 = vsub.f32 1.0, %v1988
  %v1990 = vmul.f32 %v1987, %v1989
  %v1991 = vadd.f32 %v1987, %v1990
  %vm1992 = vweird.f32 %v1986
  %vm1993 = vweird.f32 %v1987
  %vm1994 = vmor %vm1992, %vm1993
  %v1995 = vsel %vm1994, %v1987, %v1991
  %v1996 = vand.u32 2147483647, %v1986
  %vm1997 = vcmp.eq.f32.partialorder %v1996, 8.507059e+37
  %v1998 = vand.u32 %v1986, 2147483648
  %v1999 = vor.u32 1.1754944e-38, %v1998
  %v2000 = vsel %vm1997, %v1999, %v1995
  %v2001 = vmul.f32 1.0, %v2000
  %v2002 = vrot.slane %v1960, 4
  %v2004 = vtanh.pop %v2002
  %v2005 = vrot.slane %v1960, 6
  %v2007 = vxor.u32 %v2005, 2147483648
  %v2008 = vmul.f32 %v2007, 1.442695
  %v2009 = vpow.pop %v2008
  %v2010 = vadd.f32 %v2009, 1.0
  %v2011 = vrcp.pop %v2010
  %v2012 = vmul.f32 %v2010, %v2011
  %v2013 = vsub.f32 1.0, %v2012
  %v2014 = vmul.f32 %v2011, %v2013
  %v2015 = vadd.f32 %v2011, %v2014
  %vm2016 = vweird.f32 %v2010
  %vm2017 = vweird.f32 %v2011
  %vm2018 = vmor %vm2016, %vm2017
  %v2019 = vsel %vm2018, %v2011, %v2015
  %v2020 = vand.u32 2147483647, %v2010
  %vm2021 = vcmp.eq.f32.partialorder %v2020, 8.507059e+37
  %v2022 = vand.u32 %v2010, 2147483648
  %v2023 = vor.u32 1.1754944e-38, %v2022
  %v2024 = vsel %vm2021, %v2023, %v2019
  %v2025 = vmul.f32 1.0, %v2024
  %v2026 = vmul.f32 %v2001, 0.0
  %v2027 = vmul.f32 %v1979, %v2004
  %v2028 = vadd.f32 %v2026, %v2027
  %v2029 = vtanh.pop %v2028
  %v2030 = vmul.f32 %v2025, %v2029
  %2031 = vst.msk [vmem:[#allocation2] sm:$0x3] %vm446, %v2030
  %2032 = vmatpush.msra.mxu0 %v1672
  %2033 = vmatpush.msra.mxu0 %v1668
  %2034 = vmatpush.msra.mxu0 %v1664
  %2035 = vmatpush.msra.mxu0 %v1660
  %2036 = vmatpush.msra.mxu0 %v1656
  %2037 = vmatpush.msra.mxu0 %v1652
  %2038 = vmatpush.msra.mxu0 %v1648
  %2039 = vmatpush.msra.mxu0 %v1644
  %2040 = vmatpush.msra.mxu0 %v1640
  %2041 = vmatpush.msra.mxu0 %v1636
  %2042 = vmatpush.msra.mxu0 %v1632
  %2043 = vmatpush.msra.mxu0 %v1628
  %2044 = vmatpush.msra.mxu0 %v1624
  %2045 = vmatpush.msra.mxu0 %v1620
  %2046 = vmatpush.msra.mxu0 %v1616
  %2047 = vmatpush.msra.mxu0 %v1612
  %2048 = vmatmul.f32.gmra.mxu0 %v2030
  %v2049 = vpop.f32.mrf.mxu0
  %v2050 = vadd.f32 0.0, %v2049
  %2051 = vdwg.mxu0
  %2052 = vmatpush.msra.mxu0 %v1673
  %2053 = vmatpush.msra.mxu0 %v1669
  %2054 = vmatpush.msra.mxu0 %v1665
  %2055 = vmatpush.msra.mxu0 %v1661
  %2056 = vmatpush.msra.mxu0 %v1657
  %2057 = vmatpush.msra.mxu0 %v1653
  %2058 = vmatpush.msra.mxu0 %v1649
  %2059 = vmatpush.msra.mxu0 %v1645
  %2060 = vmatpush.msra.mxu0 %v1641
  %2061 = vmatpush.msra.mxu0 %v1637
  %2062 = vmatpush.msra.mxu0 %v1633
  %2063 = vmatpush.msra.mxu0 %v1629
  %2064 = vmatpush.msra.mxu0 %v1625
  %2065 = vmatpush.msra.mxu0 %v1621
  %2066 = vmatpush.msra.mxu0 %v1617
  %2067 = vmatpush.msra.mxu0 %v1613
  %2068 = vmatmul.f32.gmra.mxu0 %v2030
  %v2069 = vpop.f32.mrf.mxu0
  %v2070 = vadd.f32 0.0, %v2069
  %2071 = vdwg.mxu0
  %2072 = vmatpush.msra.mxu0 %v1674
  %2073 = vmatpush.msra.mxu0 %v1670
  %2074 = vmatpush.msra.mxu0 %v1666
  %2075 = vmatpush.msra.mxu0 %v1662
  %2076 = vmatpush.msra.mxu0 %v1658
  %2077 = vmatpush.msra.mxu0 %v1654
  %2078 = vmatpush.msra.mxu0 %v1650
  %2079 = vmatpush.msra.mxu0 %v1646
  %2080 = vmatpush.msra.mxu0 %v1642
  %2081 = vmatpush.msra.mxu0 %v1638
  %2082 = vmatpush.msra.mxu0 %v1634
  %2083 = vmatpush.msra.mxu0 %v1630
  %2084 = vmatpush.msra.mxu0 %v1626
  %2085 = vmatpush.msra.mxu0 %v1622
  %2086 = vmatpush.msra.mxu0 %v1618
  %2087 = vmatpush.msra.mxu0 %v1614
  %2088 = vmatmul.f32.gmra.mxu0 %v2030
  %v2089 = vpop.f32.mrf.mxu0
  %v2090 = vadd.f32 0.0, %v2089
  %2091 = vdwg.mxu0
  %2092 = vmatpush.msra.mxu0 %v1675
  %2093 = vmatpush.msra.mxu0 %v1671
  %2094 = vmatpush.msra.mxu0 %v1667
  %2095 = vmatpush.msra.mxu0 %v1663
  %2096 = vmatpush.msra.mxu0 %v1659
  %2097 = vmatpush.msra.mxu0 %v1655
  %2098 = vmatpush.msra.mxu0 %v1651
  %2099 = vmatpush.msra.mxu0 %v1647
  %2100 = vmatpush.msra.mxu0 %v1643
  %2101 = vmatpush.msra.mxu0 %v1639
  %2102 = vmatpush.msra.mxu0 %v1635
  %2103 = vmatpush.msra.mxu0 %v1631
  %2104 = vmatpush.msra.mxu0 %v1627
  %2105 = vmatpush.msra.mxu0 %v1623
  %2106 = vmatpush.msra.mxu0 %v1619
  %2107 = vmatpush.msra.mxu0 %v1615
  %2108 = vmatmul.f32.gmra.mxu0 %v2030
  %v2109 = vpop.f32.mrf.mxu0
  %v2110 = vadd.f32 0.0, %v2109
  %2111 = vdwg.mxu0
  %v2116 = vrot.slane %v2070, 6
  %v2117 = vrot.slane %v2090, 4
  %v2118 = vrot.slane %v2110, 2
  %v2119 = vsel %vm240, %v2050, %v2116
  %v2120 = vsel %vm242, %v2117, %v2118
  %v2121 = vsel %vm244, %v2119, %v2120
  %v2123 = vadd.f32 %v1837, %v2121
  %v2124 = vxor.u32 %v2123, 2147483648
  %v2125 = vmul.f32 %v2124, 1.442695
  %v2126 = vpow.pop %v2125
  %v2127 = vadd.f32 %v2126, 1.0
  %v2128 = vrcp.pop %v2127
  %v2129 = vmul.f32 %v2127, %v2128
  %v2130 = vsub.f32 1.0, %v2129
  %v2131 = vmul.f32 %v2128, %v2130
  %v2132 = vadd.f32 %v2128, %v2131
  %vm2133 = vweird.f32 %v2127
  %vm2134 = vweird.f32 %v2128
  %vm2135 = vmor %vm2133, %vm2134
  %v2136 = vsel %vm2135, %v2128, %v2132
  %v2137 = vand.u32 2147483647, %v2127
  %vm2138 = vcmp.eq.f32.partialorder %v2137, 8.507059e+37
  %v2139 = vand.u32 %v2127, 2147483648
  %v2140 = vor.u32 1.1754944e-38, %v2139
  %v2141 = vsel %vm2138, %v2140, %v2136
  %v2142 = vmul.f32 1.0, %v2141
  %v2144 = vrot.slane %v2123, 2
  %v2146 = vxor.u32 %v2144, 2147483648
  %v2147 = vmul.f32 %v2146, 1.442695
  %v2148 = vpow.pop %v2147
  %v2149 = vadd.f32 %v2148, 1.0
  %v2150 = vrcp.pop %v2149
  %v2151 = vmul.f32 %v2149, %v2150
  %v2152 = vsub.f32 1.0, %v2151
  %v2153 = vmul.f32 %v2150, %v2152
  %v2154 = vadd.f32 %v2150, %v2153
  %vm2155 = vweird.f32 %v2149
  %vm2156 = vweird.f32 %v2150
  %vm2157 = vmor %vm2155, %vm2156
  %v2158 = vsel %vm2157, %v2150, %v2154
  %v2159 = vand.u32 2147483647, %v2149
  %vm2160 = vcmp.eq.f32.partialorder %v2159, 8.507059e+37
  %v2161 = vand.u32 %v2149, 2147483648
  %v2162 = vor.u32 1.1754944e-38, %v2161
  %v2163 = vsel %vm2160, %v2162, %v2158
  %v2164 = vmul.f32 1.0, %v2163
  %v2165 = vrot.slane %v2123, 4
  %v2167 = vtanh.pop %v2165
  %v2168 = vrot.slane %v2123, 6
  %v2170 = vxor.u32 %v2168, 2147483648
  %v2171 = vmul.f32 %v2170, 1.442695
  %v2172 = vpow.pop %v2171
  %v2173 = vadd.f32 %v2172, 1.0
  %v2174 = vrcp.pop %v2173
  %v2175 = vmul.f32 %v2173, %v2174
  %v2176 = vsub.f32 1.0, %v2175
  %v2177 = vmul.f32 %v2174, %v2176
  %v2178 = vadd.f32 %v2174, %v2177
  %vm2179 = vweird.f32 %v2173
  %vm2180 = vweird.f32 %v2174
  %vm2181 = vmor %vm2179, %vm2180
  %v2182 = vsel %vm2181, %v2174, %v2178
  %v2183 = vand.u32 2147483647, %v2173
  %vm2184 = vcmp.eq.f32.partialorder %v2183, 8.507059e+37
  %v2185 = vand.u32 %v2173, 2147483648
  %v2186 = vor.u32 1.1754944e-38, %v2185
  %v2187 = vsel %vm2184, %v2186, %v2182
  %v2188 = vmul.f32 1.0, %v2187
  %v2189 = vmul.f32 %v2164, %v2028
  %v2190 = vmul.f32 %v2142, %v2167
  %v2191 = vadd.f32 %v2189, %v2190
  %v2192 = vtanh.pop %v2191
  %v2193 = vmul.f32 %v2188, %v2192
  %2194 = vst.msk [vmem:[%s610] sm:$0x3] %vm446, %v2193
  %2195 = vmatpush.msra.mxu0 %v1672
  %2196 = vmatpush.msra.mxu0 %v1668
  %2197 = vmatpush.msra.mxu0 %v1664
  %2198 = vmatpush.msra.mxu0 %v1660
  %2199 = vmatpush.msra.mxu0 %v1656
  %2200 = vmatpush.msra.mxu0 %v1652
  %2201 = vmatpush.msra.mxu0 %v1648
  %2202 = vmatpush.msra.mxu0 %v1644
  %2203 = vmatpush.msra.mxu0 %v1640
  %2204 = vmatpush.msra.mxu0 %v1636
  %2205 = vmatpush.msra.mxu0 %v1632
  %2206 = vmatpush.msra.mxu0 %v1628
  %2207 = vmatpush.msra.mxu0 %v1624
  %2208 = vmatpush.msra.mxu0 %v1620
  %2209 = vmatpush.msra.mxu0 %v1616
  %2210 = vmatpush.msra.mxu0 %v1612
  %2211 = vmatmul.f32.gmra.mxu0 %v2193
  %v2212 = vpop.f32.mrf.mxu0
  %v2213 = vadd.f32 0.0, %v2212
  %2214 = vdwg.mxu0
  %2215 = vmatpush.msra.mxu0 %v1673
  %2216 = vmatpush.msra.mxu0 %v1669
  %2217 = vmatpush.msra.mxu0 %v1665
  %2218 = vmatpush.msra.mxu0 %v1661
  %2219 = vmatpush.msra.mxu0 %v1657
  %2220 = vmatpush.msra.mxu0 %v1653
  %2221 = vmatpush.msra.mxu0 %v1649
  %2222 = vmatpush.msra.mxu0 %v1645
  %2223 = vmatpush.msra.mxu0 %v1641
  %2224 = vmatpush.msra.mxu0 %v1637
  %2225 = vmatpush.msra.mxu0 %v1633
  %2226 = vmatpush.msra.mxu0 %v1629
  %2227 = vmatpush.msra.mxu0 %v1625
  %2228 = vmatpush.msra.mxu0 %v1621
  %2229 = vmatpush.msra.mxu0 %v1617
  %2230 = vmatpush.msra.mxu0 %v1613
  %2231 = vmatmul.f32.gmra.mxu0 %v2193
  %v2232 = vpop.f32.mrf.mxu0
  %v2233 = vadd.f32 0.0, %v2232
  %2234 = vdwg.mxu0
  %2235 = vmatpush.msra.mxu0 %v1674
  %2236 = vmatpush.msra.mxu0 %v1670
  %2237 = vmatpush.msra.mxu0 %v1666
  %2238 = vmatpush.msra.mxu0 %v1662
  %2239 = vmatpush.msra.mxu0 %v1658
  %2240 = vmatpush.msra.mxu0 %v1654
  %2241 = vmatpush.msra.mxu0 %v1650
  %2242 = vmatpush.msra.mxu0 %v1646
  %2243 = vmatpush.msra.mxu0 %v1642
  %2244 = vmatpush.msra.mxu0 %v1638
  %2245 = vmatpush.msra.mxu0 %v1634
  %2246 = vmatpush.msra.mxu0 %v1630
  %2247 = vmatpush.msra.mxu0 %v1626
  %2248 = vmatpush.msra.mxu0 %v1622
  %2249 = vmatpush.msra.mxu0 %v1618
  %2250 = vmatpush.msra.mxu0 %v1614
  %2251 = vmatmul.f32.gmra.mxu0 %v2193
  %v2252 = vpop.f32.mrf.mxu0
  %v2253 = vadd.f32 0.0, %v2252
  %2254 = vdwg.mxu0
  %2255 = vmatpush.msra.mxu0 %v1675
  %2256 = vmatpush.msra.mxu0 %v1671
  %2257 = vmatpush.msra.mxu0 %v1667
  %2258 = vmatpush.msra.mxu0 %v1663
  %2259 = vmatpush.msra.mxu0 %v1659
  %2260 = vmatpush.msra.mxu0 %v1655
  %2261 = vmatpush.msra.mxu0 %v1651
  %2262 = vmatpush.msra.mxu0 %v1647
  %2263 = vmatpush.msra.mxu0 %v1643
  %2264 = vmatpush.msra.mxu0 %v1639
  %2265 = vmatpush.msra.mxu0 %v1635
  %2266 = vmatpush.msra.mxu0 %v1631
  %2267 = vmatpush.msra.mxu0 %v1627
  %2268 = vmatpush.msra.mxu0 %v1623
  %2269 = vmatpush.msra.mxu0 %v1619
  %2270 = vmatpush.msra.mxu0 %v1615
  %2271 = vmatmul.f32.gmra.mxu0 %v2193
  %v2272 = vpop.f32.mrf.mxu0
  %v2273 = vadd.f32 0.0, %v2272
  %2274 = vdwg.mxu0
  %v2279 = vrot.slane %v2233, 6
  %v2280 = vrot.slane %v2253, 4
  %v2281 = vrot.slane %v2273, 2
  %v2282 = vsel %vm240, %v2213, %v2279
  %v2283 = vsel %vm242, %v2280, %v2281
  %v2284 = vsel %vm244, %v2282, %v2283
  %v2286 = vadd.f32 %v1841, %v2284
  %v2287 = vxor.u32 %v2286, 2147483648
  %v2288 = vmul.f32 %v2287, 1.442695
  %v2289 = vpow.pop %v2288
  %v2290 = vadd.f32 %v2289, 1.0
  %v2291 = vrcp.pop %v2290
  %v2292 = vmul.f32 %v2290, %v2291
  %v2293 = vsub.f32 1.0, %v2292
  %v2294 = vmul.f32 %v2291, %v2293
  %v2295 = vadd.f32 %v2291, %v2294
  %vm2296 = vweird.f32 %v2290
  %vm2297 = vweird.f32 %v2291
  %vm2298 = vmor %vm2296, %vm2297
  %v2299 = vsel %vm2298, %v2291, %v2295
  %v2300 = vand.u32 2147483647, %v2290
  %vm2301 = vcmp.eq.f32.partialorder %v2300, 8.507059e+37
  %v2302 = vand.u32 %v2290, 2147483648
  %v2303 = vor.u32 1.1754944e-38, %v2302
  %v2304 = vsel %vm2301, %v2303, %v2299
  %v2305 = vmul.f32 1.0, %v2304
  %v2307 = vrot.slane %v2286, 2
  %v2309 = vxor.u32 %v2307, 2147483648
  %v2310 = vmul.f32 %v2309, 1.442695
  %v2311 = vpow.pop %v2310
  %v2312 = vadd.f32 %v2311, 1.0
  %v2313 = vrcp.pop %v2312
  %v2314 = vmul.f32 %v2312, %v2313
  %v2315 = vsub.f32 1.0, %v2314
  %v2316 = vmul.f32 %v2313, %v2315
  %v2317 = vadd.f32 %v2313, %v2316
  %vm2318 = vweird.f32 %v2312
  %vm2319 = vweird.f32 %v2313
  %vm2320 = vmor %vm2318, %vm2319
  %v2321 = vsel %vm2320, %v2313, %v2317
  %v2322 = vand.u32 2147483647, %v2312
  %vm2323 = vcmp.eq.f32.partialorder %v2322, 8.507059e+37
  %v2324 = vand.u32 %v2312, 2147483648
  %v2325 = vor.u32 1.1754944e-38, %v2324
  %v2326 = vsel %vm2323, %v2325, %v2321
  %v2327 = vmul.f32 1.0, %v2326
  %v2328 = vrot.slane %v2286, 4
  %v2330 = vtanh.pop %v2328
  %v2331 = vrot.slane %v2286, 6
  %v2333 = vxor.u32 %v2331, 2147483648
  %v2334 = vmul.f32 %v2333, 1.442695
  %v2335 = vpow.pop %v2334
  %v2336 = vadd.f32 %v2335, 1.0
  %v2337 = vrcp.pop %v2336
  %v2338 = vmul.f32 %v2336, %v2337
  %v2339 = vsub.f32 1.0, %v2338
  %v2340 = vmul.f32 %v2337, %v2339
  %v2341 = vadd.f32 %v2337, %v2340
  %vm2342 = vweird.f32 %v2336
  %vm2343 = vweird.f32 %v2337
  %vm2344 = vmor %vm2342, %vm2343
  %v2345 = vsel %vm2344, %v2337, %v2341
  %v2346 = vand.u32 2147483647, %v2336
  %vm2347 = vcmp.eq.f32.partialorder %v2346, 8.507059e+37
  %v2348 = vand.u32 %v2336, 2147483648
  %v2349 = vor.u32 1.1754944e-38, %v2348
  %v2350 = vsel %vm2347, %v2349, %v2345
  %v2351 = vmul.f32 1.0, %v2350
  %v2352 = vmul.f32 %v2327, %v2191
  %v2353 = vmul.f32 %v2305, %v2330
  %v2354 = vadd.f32 %v2352, %v2353
  %v2355 = vtanh.pop %v2354
  %v2356 = vmul.f32 %v2351, %v2355
  %2357 = vst.msk [vmem:[%s774] sm:$0x3] %vm446, %v2356
  %2358 = vmatpush.msra.mxu0 %v1672
  %2359 = vmatpush.msra.mxu0 %v1668
  %2360 = vmatpush.msra.mxu0 %v1664
  %2361 = vmatpush.msra.mxu0 %v1660
  %2362 = vmatpush.msra.mxu0 %v1656
  %2363 = vmatpush.msra.mxu0 %v1652
  %2364 = vmatpush.msra.mxu0 %v1648
  %2365 = vmatpush.msra.mxu0 %v1644
  %2366 = vmatpush.msra.mxu0 %v1640
  %2367 = vmatpush.msra.mxu0 %v1636
  %2368 = vmatpush.msra.mxu0 %v1632
  %2369 = vmatpush.msra.mxu0 %v1628
  %2370 = vmatpush.msra.mxu0 %v1624
  %2371 = vmatpush.msra.mxu0 %v1620
  %2372 = vmatpush.msra.mxu0 %v1616
  %2373 = vmatpush.msra.mxu0 %v1612
  %2374 = vmatmul.f32.gmra.mxu0 %v2356
  %v2375 = vpop.f32.mrf.mxu0
  %v2376 = vadd.f32 0.0, %v2375
  %2377 = vdwg.mxu0
  %2378 = vmatpush.msra.mxu0 %v1673
  %2379 = vmatpush.msra.mxu0 %v1669
  %2380 = vmatpush.msra.mxu0 %v1665
  %2381 = vmatpush.msra.mxu0 %v1661
  %2382 = vmatpush.msra.mxu0 %v1657
  %2383 = vmatpush.msra.mxu0 %v1653
  %2384 = vmatpush.msra.mxu0 %v1649
  %2385 = vmatpush.msra.mxu0 %v1645
  %2386 = vmatpush.msra.mxu0 %v1641
  %2387 = vmatpush.msra.mxu0 %v1637
  %2388 = vmatpush.msra.mxu0 %v1633
  %2389 = vmatpush.msra.mxu0 %v1629
  %2390 = vmatpush.msra.mxu0 %v1625
  %2391 = vmatpush.msra.mxu0 %v1621
  %2392 = vmatpush.msra.mxu0 %v1617
  %2393 = vmatpush.msra.mxu0 %v1613
  %2394 = vmatmul.f32.gmra.mxu0 %v2356
  %v2395 = vpop.f32.mrf.mxu0
  %v2396 = vadd.f32 0.0, %v2395
  %2397 = vdwg.mxu0
  %2398 = vmatpush.msra.mxu0 %v1674
  %2399 = vmatpush.msra.mxu0 %v1670
  %2400 = vmatpush.msra.mxu0 %v1666
  %2401 = vmatpush.msra.mxu0 %v1662
  %2402 = vmatpush.msra.mxu0 %v1658
  %2403 = vmatpush.msra.mxu0 %v1654
  %2404 = vmatpush.msra.mxu0 %v1650
  %2405 = vmatpush.msra.mxu0 %v1646
  %2406 = vmatpush.msra.mxu0 %v1642
  %2407 = vmatpush.msra.mxu0 %v1638
  %2408 = vmatpush.msra.mxu0 %v1634
  %2409 = vmatpush.msra.mxu0 %v1630
  %2410 = vmatpush.msra.mxu0 %v1626
  %2411 = vmatpush.msra.mxu0 %v1622
  %2412 = vmatpush.msra.mxu0 %v1618
  %2413 = vmatpush.msra.mxu0 %v1614
  %2414 = vmatmul.f32.gmra.mxu0 %v2356
  %v2415 = vpop.f32.mrf.mxu0
  %v2416 = vadd.f32 0.0, %v2415
  %2417 = vdwg.mxu0
  %2418 = vmatpush.msra.mxu0 %v1675
  %2419 = vmatpush.msra.mxu0 %v1671
  %2420 = vmatpush.msra.mxu0 %v1667
  %2421 = vmatpush.msra.mxu0 %v1663
  %2422 = vmatpush.msra.mxu0 %v1659
  %2423 = vmatpush.msra.mxu0 %v1655
  %2424 = vmatpush.msra.mxu0 %v1651
  %2425 = vmatpush.msra.mxu0 %v1647
  %2426 = vmatpush.msra.mxu0 %v1643
  %2427 = vmatpush.msra.mxu0 %v1639
  %2428 = vmatpush.msra.mxu0 %v1635
  %2429 = vmatpush.msra.mxu0 %v1631
  %2430 = vmatpush.msra.mxu0 %v1627
  %2431 = vmatpush.msra.mxu0 %v1623
  %2432 = vmatpush.msra.mxu0 %v1619
  %2433 = vmatpush.msra.mxu0 %v1615
  %2434 = vmatmul.f32.gmra.mxu0 %v2356
  %v2435 = vpop.f32.mrf.mxu0
  %v2436 = vadd.f32 0.0, %v2435
  %2437 = vdwg.mxu0
  %v2442 = vrot.slane %v2396, 6
  %v2443 = vrot.slane %v2416, 4
  %v2444 = vrot.slane %v2436, 2
  %v2445 = vsel %vm240, %v2376, %v2442
  %v2446 = vsel %vm242, %v2443, %v2444
  %v2447 = vsel %vm244, %v2445, %v2446
  %v2449 = vadd.f32 %v1845, %v2447
  %v2450 = vxor.u32 %v2449, 2147483648
  %v2451 = vmul.f32 %v2450, 1.442695
  %v2452 = vpow.pop %v2451
  %v2453 = vadd.f32 %v2452, 1.0
  %v2454 = vrcp.pop %v2453
  %v2455 = vmul.f32 %v2453, %v2454
  %v2456 = vsub.f32 1.0, %v2455
  %v2457 = vmul.f32 %v2454, %v2456
  %v2458 = vadd.f32 %v2454, %v2457
  %vm2459 = vweird.f32 %v2453
  %vm2460 = vweird.f32 %v2454
  %vm2461 = vmor %vm2459, %vm2460
  %v2462 = vsel %vm2461, %v2454, %v2458
  %v2463 = vand.u32 2147483647, %v2453
  %vm2464 = vcmp.eq.f32.partialorder %v2463, 8.507059e+37
  %v2465 = vand.u32 %v2453, 2147483648
  %v2466 = vor.u32 1.1754944e-38, %v2465
  %v2467 = vsel %vm2464, %v2466, %v2462
  %v2468 = vmul.f32 1.0, %v2467
  %v2470 = vrot.slane %v2449, 2
  %v2472 = vxor.u32 %v2470, 2147483648
  %v2473 = vmul.f32 %v2472, 1.442695
  %v2474 = vpow.pop %v2473
  %v2475 = vadd.f32 %v2474, 1.0
  %v2476 = vrcp.pop %v2475
  %v2477 = vmul.f32 %v2475, %v2476
  %v2478 = vsub.f32 1.0, %v2477
  %v2479 = vmul.f32 %v2476, %v2478
  %v2480 = vadd.f32 %v2476, %v2479
  %vm2481 = vweird.f32 %v2475
  %vm2482 = vweird.f32 %v2476
  %vm2483 = vmor %vm2481, %vm2482
  %v2484 = vsel %vm2483, %v2476, %v2480
  %v2485 = vand.u32 2147483647, %v2475
  %vm2486 = vcmp.eq.f32.partialorder %v2485, 8.507059e+37
  %v2487 = vand.u32 %v2475, 2147483648
  %v2488 = vor.u32 1.1754944e-38, %v2487
  %v2489 = vsel %vm2486, %v2488, %v2484
  %v2490 = vmul.f32 1.0, %v2489
  %v2491 = vrot.slane %v2449, 4
  %v2493 = vtanh.pop %v2491
  %v2494 = vrot.slane %v2449, 6
  %v2496 = vxor.u32 %v2494, 2147483648
  %v2497 = vmul.f32 %v2496, 1.442695
  %v2498 = vpow.pop %v2497
  %v2499 = vadd.f32 %v2498, 1.0
  %v2500 = vrcp.pop %v2499
  %v2501 = vmul.f32 %v2499, %v2500
  %v2502 = vsub.f32 1.0, %v2501
  %v2503 = vmul.f32 %v2500, %v2502
  %v2504 = vadd.f32 %v2500, %v2503
  %vm2505 = vweird.f32 %v2499
  %vm2506 = vweird.f32 %v2500
  %vm2507 = vmor %vm2505, %vm2506
  %v2508 = vsel %vm2507, %v2500, %v2504
  %v2509 = vand.u32 2147483647, %v2499
  %vm2510 = vcmp.eq.f32.partialorder %v2509, 8.507059e+37
  %v2511 = vand.u32 %v2499, 2147483648
  %v2512 = vor.u32 1.1754944e-38, %v2511
  %v2513 = vsel %vm2510, %v2512, %v2508
  %v2514 = vmul.f32 1.0, %v2513
  %v2515 = vmul.f32 %v2490, %v2354
  %v2516 = vmul.f32 %v2468, %v2493
  %v2517 = vadd.f32 %v2515, %v2516
  %v2518 = vtanh.pop %v2517
  %v2519 = vmul.f32 %v2514, %v2518
  %2520 = vst.msk [vmem:[%s938] sm:$0x3] %vm446, %v2519
  %2521 = vmatpush.msra.mxu0 %v1672
  %2522 = vmatpush.msra.mxu0 %v1668
  %2523 = vmatpush.msra.mxu0 %v1664
  %2524 = vmatpush.msra.mxu0 %v1660
  %2525 = vmatpush.msra.mxu0 %v1656
  %2526 = vmatpush.msra.mxu0 %v1652
  %2527 = vmatpush.msra.mxu0 %v1648
  %2528 = vmatpush.msra.mxu0 %v1644
  %2529 = vmatpush.msra.mxu0 %v1640
  %2530 = vmatpush.msra.mxu0 %v1636
  %2531 = vmatpush.msra.mxu0 %v1632
  %2532 = vmatpush.msra.mxu0 %v1628
  %2533 = vmatpush.msra.mxu0 %v1624
  %2534 = vmatpush.msra.mxu0 %v1620
  %2535 = vmatpush.msra.mxu0 %v1616
  %2536 = vmatpush.msra.mxu0 %v1612
  %2537 = vmatmul.f32.gmra.mxu0 %v2519
  %v2538 = vpop.f32.mrf.mxu0
  %v2539 = vadd.f32 0.0, %v2538
  %2540 = vdwg.mxu0
  %2541 = vmatpush.msra.mxu0 %v1673
  %2542 = vmatpush.msra.mxu0 %v1669
  %2543 = vmatpush.msra.mxu0 %v1665
  %2544 = vmatpush.msra.mxu0 %v1661
  %2545 = vmatpush.msra.mxu0 %v1657
  %2546 = vmatpush.msra.mxu0 %v1653
  %2547 = vmatpush.msra.mxu0 %v1649
  %2548 = vmatpush.msra.mxu0 %v1645
  %2549 = vmatpush.msra.mxu0 %v1641
  %2550 = vmatpush.msra.mxu0 %v1637
  %2551 = vmatpush.msra.mxu0 %v1633
  %2552 = vmatpush.msra.mxu0 %v1629
  %2553 = vmatpush.msra.mxu0 %v1625
  %2554 = vmatpush.msra.mxu0 %v1621
  %2555 = vmatpush.msra.mxu0 %v1617
  %2556 = vmatpush.msra.mxu0 %v1613
  %2557 = vmatmul.f32.gmra.mxu0 %v2519
  %v2558 = vpop.f32.mrf.mxu0
  %v2559 = vadd.f32 0.0, %v2558
  %2560 = vdwg.mxu0
  %2561 = vmatpush.msra.mxu0 %v1674
  %2562 = vmatpush.msra.mxu0 %v1670
  %2563 = vmatpush.msra.mxu0 %v1666
  %2564 = vmatpush.msra.mxu0 %v1662
  %2565 = vmatpush.msra.mxu0 %v1658
  %2566 = vmatpush.msra.mxu0 %v1654
  %2567 = vmatpush.msra.mxu0 %v1650
  %2568 = vmatpush.msra.mxu0 %v1646
  %2569 = vmatpush.msra.mxu0 %v1642
  %2570 = vmatpush.msra.mxu0 %v1638
  %2571 = vmatpush.msra.mxu0 %v1634
  %2572 = vmatpush.msra.mxu0 %v1630
  %2573 = vmatpush.msra.mxu0 %v1626
  %2574 = vmatpush.msra.mxu0 %v1622
  %2575 = vmatpush.msra.mxu0 %v1618
  %2576 = vmatpush.msra.mxu0 %v1614
  %2577 = vmatmul.f32.gmra.mxu0 %v2519
  %v2578 = vpop.f32.mrf.mxu0
  %v2579 = vadd.f32 0.0, %v2578
  %2580 = vdwg.mxu0
  %2581 = vmatpush.msra.mxu0 %v1675
  %2582 = vmatpush.msra.mxu0 %v1671
  %2583 = vmatpush.msra.mxu0 %v1667
  %2584 = vmatpush.msra.mxu0 %v1663
  %2585 = vmatpush.msra.mxu0 %v1659
  %2586 = vmatpush.msra.mxu0 %v1655
  %2587 = vmatpush.msra.mxu0 %v1651
  %2588 = vmatpush.msra.mxu0 %v1647
  %2589 = vmatpush.msra.mxu0 %v1643
  %2590 = vmatpush.msra.mxu0 %v1639
  %2591 = vmatpush.msra.mxu0 %v1635
  %2592 = vmatpush.msra.mxu0 %v1631
  %2593 = vmatpush.msra.mxu0 %v1627
  %2594 = vmatpush.msra.mxu0 %v1623
  %2595 = vmatpush.msra.mxu0 %v1619
  %2596 = vmatpush.msra.mxu0 %v1615
  %2597 = vmatmul.f32.gmra.mxu0 %v2519
  %v2598 = vpop.f32.mrf.mxu0
  %v2599 = vadd.f32 0.0, %v2598
  %2600 = vdwg.mxu0
  %v2605 = vrot.slane %v2559, 6
  %v2606 = vrot.slane %v2579, 4
  %v2607 = vrot.slane %v2599, 2
  %v2608 = vsel %vm240, %v2539, %v2605
  %v2609 = vsel %vm242, %v2606, %v2607
  %v2610 = vsel %vm244, %v2608, %v2609
  %v2612 = vadd.f32 %v1848, %v2610
  %v2613 = vxor.u32 %v2612, 2147483648
  %v2614 = vmul.f32 %v2613, 1.442695
  %v2615 = vpow.pop %v2614
  %v2616 = vadd.f32 %v2615, 1.0
  %v2617 = vrcp.pop %v2616
  %v2618 = vmul.f32 %v2616, %v2617
  %v2619 = vsub.f32 1.0, %v2618
  %v2620 = vmul.f32 %v2617, %v2619
  %v2621 = vadd.f32 %v2617, %v2620
  %vm2622 = vweird.f32 %v2616
  %vm2623 = vweird.f32 %v2617
  %vm2624 = vmor %vm2622, %vm2623
  %v2625 = vsel %vm2624, %v2617, %v2621
  %v2626 = vand.u32 2147483647, %v2616
  %vm2627 = vcmp.eq.f32.partialorder %v2626, 8.507059e+37
  %v2628 = vand.u32 %v2616, 2147483648
  %v2629 = vor.u32 1.1754944e-38, %v2628
  %v2630 = vsel %vm2627, %v2629, %v2625
  %v2631 = vmul.f32 1.0, %v2630
  %v2633 = vrot.slane %v2612, 2
  %v2635 = vxor.u32 %v2633, 2147483648
  %v2636 = vmul.f32 %v2635, 1.442695
  %v2637 = vpow.pop %v2636
  %v2638 = vadd.f32 %v2637, 1.0
  %v2639 = vrcp.pop %v2638
  %v2640 = vmul.f32 %v2638, %v2639
  %v2641 = vsub.f32 1.0, %v2640
  %v2642 = vmul.f32 %v2639, %v2641
  %v2643 = vadd.f32 %v2639, %v2642
  %vm2644 = vweird.f32 %v2638
  %vm2645 = vweird.f32 %v2639
  %vm2646 = vmor %vm2644, %vm2645
  %v2647 = vsel %vm2646, %v2639, %v2643
  %v2648 = vand.u32 2147483647, %v2638
  %vm2649 = vcmp.eq.f32.partialorder %v2648, 8.507059e+37
  %v2650 = vand.u32 %v2638, 2147483648
  %v2651 = vor.u32 1.1754944e-38, %v2650
  %v2652 = vsel %vm2649, %v2651, %v2647
  %v2653 = vmul.f32 1.0, %v2652
  %v2654 = vrot.slane %v2612, 4
  %v2656 = vtanh.pop %v2654
  %v2657 = vrot.slane %v2612, 6
  %v2659 = vxor.u32 %v2657, 2147483648
  %v2660 = vmul.f32 %v2659, 1.442695
  %v2661 = vpow.pop %v2660
  %v2662 = vadd.f32 %v2661, 1.0
  %v2663 = vrcp.pop %v2662
  %v2664 = vmul.f32 %v2662, %v2663
  %v2665 = vsub.f32 1.0, %v2664
  %v2666 = vmul.f32 %v2663, %v2665
  %v2667 = vadd.f32 %v2663, %v2666
  %vm2668 = vweird.f32 %v2662
  %vm2669 = vweird.f32 %v2663
  %vm2670 = vmor %vm2668, %vm2669
  %v2671 = vsel %vm2670, %v2663, %v2667
  %v2672 = vand.u32 2147483647, %v2662
  %vm2673 = vcmp.eq.f32.partialorder %v2672, 8.507059e+37
  %v2674 = vand.u32 %v2662, 2147483648
  %v2675 = vor.u32 1.1754944e-38, %v2674
  %v2676 = vsel %vm2673, %v2675, %v2671
  %v2677 = vmul.f32 1.0, %v2676
  %v2678 = vmul.f32 %v2653, %v2517
  %v2679 = vmul.f32 %v2631, %v2656
  %v2680 = vadd.f32 %v2678, %v2679
  %v2681 = vtanh.pop %v2680
  %v2682 = vmul.f32 %v2677, %v2681
  %2683 = vst.msk [vmem:[%s1102] sm:$0x3] %vm446, %v2682
  %2684 = vmatpush.msra.mxu0 %v1672
  %2685 = vmatpush.msra.mxu0 %v1668
  %2686 = vmatpush.msra.mxu0 %v1664
  %2687 = vmatpush.msra.mxu0 %v1660
  %2688 = vmatpush.msra.mxu0 %v1656
  %2689 = vmatpush.msra.mxu0 %v1652
  %2690 = vmatpush.msra.mxu0 %v1648
  %2691 = vmatpush.msra.mxu0 %v1644
  %2692 = vmatpush.msra.mxu0 %v1640
  %2693 = vmatpush.msra.mxu0 %v1636
  %2694 = vmatpush.msra.mxu0 %v1632
  %2695 = vmatpush.msra.mxu0 %v1628
  %2696 = vmatpush.msra.mxu0 %v1624
  %2697 = vmatpush.msra.mxu0 %v1620
  %2698 = vmatpush.msra.mxu0 %v1616
  %2699 = vmatpush.msra.mxu0 %v1612
  %2700 = vmatmul.f32.gmra.mxu0 %v2682
  %v2701 = vpop.f32.mrf.mxu0
  %v2702 = vadd.f32 0.0, %v2701
  %2703 = vdwg.mxu0
  %2704 = vmatpush.msra.mxu0 %v1673
  %2705 = vmatpush.msra.mxu0 %v1669
  %2706 = vmatpush.msra.mxu0 %v1665
  %2707 = vmatpush.msra.mxu0 %v1661
  %2708 = vmatpush.msra.mxu0 %v1657
  %2709 = vmatpush.msra.mxu0 %v1653
  %2710 = vmatpush.msra.mxu0 %v1649
  %2711 = vmatpush.msra.mxu0 %v1645
  %2712 = vmatpush.msra.mxu0 %v1641
  %2713 = vmatpush.msra.mxu0 %v1637
  %2714 = vmatpush.msra.mxu0 %v1633
  %2715 = vmatpush.msra.mxu0 %v1629
  %2716 = vmatpush.msra.mxu0 %v1625
  %2717 = vmatpush.msra.mxu0 %v1621
  %2718 = vmatpush.msra.mxu0 %v1617
  %2719 = vmatpush.msra.mxu0 %v1613
  %2720 = vmatmul.f32.gmra.mxu0 %v2682
  %v2721 = vpop.f32.mrf.mxu0
  %v2722 = vadd.f32 0.0, %v2721
  %2723 = vdwg.mxu0
  %2724 = vmatpush.msra.mxu0 %v1674
  %2725 = vmatpush.msra.mxu0 %v1670
  %2726 = vmatpush.msra.mxu0 %v1666
  %2727 = vmatpush.msra.mxu0 %v1662
  %2728 = vmatpush.msra.mxu0 %v1658
  %2729 = vmatpush.msra.mxu0 %v1654
  %2730 = vmatpush.msra.mxu0 %v1650
  %2731 = vmatpush.msra.mxu0 %v1646
  %2732 = vmatpush.msra.mxu0 %v1642
  %2733 = vmatpush.msra.mxu0 %v1638
  %2734 = vmatpush.msra.mxu0 %v1634
  %2735 = vmatpush.msra.mxu0 %v1630
  %2736 = vmatpush.msra.mxu0 %v1626
  %2737 = vmatpush.msra.mxu0 %v1622
  %2738 = vmatpush.msra.mxu0 %v1618
  %2739 = vmatpush.msra.mxu0 %v1614
  %2740 = vmatmul.f32.gmra.mxu0 %v2682
  %v2741 = vpop.f32.mrf.mxu0
  %v2742 = vadd.f32 0.0, %v2741
  %2743 = vdwg.mxu0
  %2744 = vmatpush.msra.mxu0 %v1675
  %2745 = vmatpush.msra.mxu0 %v1671
  %2746 = vmatpush.msra.mxu0 %v1667
  %2747 = vmatpush.msra.mxu0 %v1663
  %2748 = vmatpush.msra.mxu0 %v1659
  %2749 = vmatpush.msra.mxu0 %v1655
  %2750 = vmatpush.msra.mxu0 %v1651
  %2751 = vmatpush.msra.mxu0 %v1647
  %2752 = vmatpush.msra.mxu0 %v1643
  %2753 = vmatpush.msra.mxu0 %v1639
  %2754 = vmatpush.msra.mxu0 %v1635
  %2755 = vmatpush.msra.mxu0 %v1631
  %2756 = vmatpush.msra.mxu0 %v1627
  %2757 = vmatpush.msra.mxu0 %v1623
  %2758 = vmatpush.msra.mxu0 %v1619
  %2759 = vmatpush.msra.mxu0 %v1615
  %2760 = vmatmul.f32.gmra.mxu0 %v2682
  %v2761 = vpop.f32.mrf.mxu0
  %v2762 = vadd.f32 0.0, %v2761
  %2763 = vdwg.mxu0
  %v2768 = vrot.slane %v2722, 6
  %v2769 = vrot.slane %v2742, 4
  %v2770 = vrot.slane %v2762, 2
  %v2771 = vsel %vm240, %v2702, %v2768
  %v2772 = vsel %vm242, %v2769, %v2770
  %v2773 = vsel %vm244, %v2771, %v2772
  %v2775 = vadd.f32 %v1852, %v2773
  %v2776 = vxor.u32 %v2775, 2147483648
  %v2777 = vmul.f32 %v2776, 1.442695
  %v2778 = vpow.pop %v2777
  %v2779 = vadd.f32 %v2778, 1.0
  %v2780 = vrcp.pop %v2779
  %v2781 = vmul.f32 %v2779, %v2780
  %v2782 = vsub.f32 1.0, %v2781
  %v2783 = vmul.f32 %v2780, %v2782
  %v2784 = vadd.f32 %v2780, %v2783
  %vm2785 = vweird.f32 %v2779
  %vm2786 = vweird.f32 %v2780
  %vm2787 = vmor %vm2785, %vm2786
  %v2788 = vsel %vm2787, %v2780, %v2784
  %v2789 = vand.u32 2147483647, %v2779
  %vm2790 = vcmp.eq.f32.partialorder %v2789, 8.507059e+37
  %v2791 = vand.u32 %v2779, 2147483648
  %v2792 = vor.u32 1.1754944e-38, %v2791
  %v2793 = vsel %vm2790, %v2792, %v2788
  %v2794 = vmul.f32 1.0, %v2793
  %v2796 = vrot.slane %v2775, 2
  %v2798 = vxor.u32 %v2796, 2147483648
  %v2799 = vmul.f32 %v2798, 1.442695
  %v2800 = vpow.pop %v2799
  %v2801 = vadd.f32 %v2800, 1.0
  %v2802 = vrcp.pop %v2801
  %v2803 = vmul.f32 %v2801, %v2802
  %v2804 = vsub.f32 1.0, %v2803
  %v2805 = vmul.f32 %v2802, %v2804
  %v2806 = vadd.f32 %v2802, %v2805
  %vm2807 = vweird.f32 %v2801
  %vm2808 = vweird.f32 %v2802
  %vm2809 = vmor %vm2807, %vm2808
  %v2810 = vsel %vm2809, %v2802, %v2806
  %v2811 = vand.u32 2147483647, %v2801
  %vm2812 = vcmp.eq.f32.partialorder %v2811, 8.507059e+37
  %v2813 = vand.u32 %v2801, 2147483648
  %v2814 = vor.u32 1.1754944e-38, %v2813
  %v2815 = vsel %vm2812, %v2814, %v2810
  %v2816 = vmul.f32 1.0, %v2815
  %v2817 = vrot.slane %v2775, 4
  %v2819 = vtanh.pop %v2817
  %v2820 = vrot.slane %v2775, 6
  %v2822 = vxor.u32 %v2820, 2147483648
  %v2823 = vmul.f32 %v2822, 1.442695
  %v2824 = vpow.pop %v2823
  %v2825 = vadd.f32 %v2824, 1.0
  %v2826 = vrcp.pop %v2825
  %v2827 = vmul.f32 %v2825, %v2826
  %v2828 = vsub.f32 1.0, %v2827
  %v2829 = vmul.f32 %v2826, %v2828
  %v2830 = vadd.f32 %v2826, %v2829
  %vm2831 = vweird.f32 %v2825
  %vm2832 = vweird.f32 %v2826
  %vm2833 = vmor %vm2831, %vm2832
  %v2834 = vsel %vm2833, %v2826, %v2830
  %v2835 = vand.u32 2147483647, %v2825
  %vm2836 = vcmp.eq.f32.partialorder %v2835, 8.507059e+37
  %v2837 = vand.u32 %v2825, 2147483648
  %v2838 = vor.u32 1.1754944e-38, %v2837
  %v2839 = vsel %vm2836, %v2838, %v2834
  %v2840 = vmul.f32 1.0, %v2839
  %v2841 = vmul.f32 %v2816, %v2680
  %v2842 = vmul.f32 %v2794, %v2819
  %v2843 = vadd.f32 %v2841, %v2842
  %v2844 = vtanh.pop %v2843
  %v2845 = vmul.f32 %v2840, %v2844
  %2846 = vst.msk [vmem:[%s1266] sm:$0x3] %vm446, %v2845
  %2847 = vmatpush.msra.mxu0 %v1672
  %2848 = vmatpush.msra.mxu0 %v1668
  %2849 = vmatpush.msra.mxu0 %v1664
  %2850 = vmatpush.msra.mxu0 %v1660
  %2851 = vmatpush.msra.mxu0 %v1656
  %2852 = vmatpush.msra.mxu0 %v1652
  %2853 = vmatpush.msra.mxu0 %v1648
  %2854 = vmatpush.msra.mxu0 %v1644
  %2855 = vmatpush.msra.mxu0 %v1640
  %2856 = vmatpush.msra.mxu0 %v1636
  %2857 = vmatpush.msra.mxu0 %v1632
  %2858 = vmatpush.msra.mxu0 %v1628
  %2859 = vmatpush.msra.mxu0 %v1624
  %2860 = vmatpush.msra.mxu0 %v1620
  %2861 = vmatpush.msra.mxu0 %v1616
  %2862 = vmatpush.msra.mxu0 %v1612
  %2863 = vmatmul.f32.gmra.mxu0 %v2845
  %v2864 = vpop.f32.mrf.mxu0
  %v2865 = vadd.f32 0.0, %v2864
  %2866 = vdwg.mxu0
  %2867 = vmatpush.msra.mxu0 %v1673
  %2868 = vmatpush.msra.mxu0 %v1669
  %2869 = vmatpush.msra.mxu0 %v1665
  %2870 = vmatpush.msra.mxu0 %v1661
  %2871 = vmatpush.msra.mxu0 %v1657
  %2872 = vmatpush.msra.mxu0 %v1653
  %2873 = vmatpush.msra.mxu0 %v1649
  %2874 = vmatpush.msra.mxu0 %v1645
  %2875 = vmatpush.msra.mxu0 %v1641
  %2876 = vmatpush.msra.mxu0 %v1637
  %2877 = vmatpush.msra.mxu0 %v1633
  %2878 = vmatpush.msra.mxu0 %v1629
  %2879 = vmatpush.msra.mxu0 %v1625
  %2880 = vmatpush.msra.mxu0 %v1621
  %2881 = vmatpush.msra.mxu0 %v1617
  %2882 = vmatpush.msra.mxu0 %v1613
  %2883 = vmatmul.f32.gmra.mxu0 %v2845
  %v2884 = vpop.f32.mrf.mxu0
  %v2885 = vadd.f32 0.0, %v2884
  %2886 = vdwg.mxu0
  %2887 = vmatpush.msra.mxu0 %v1674
  %2888 = vmatpush.msra.mxu0 %v1670
  %2889 = vmatpush.msra.mxu0 %v1666
  %2890 = vmatpush.msra.mxu0 %v1662
  %2891 = vmatpush.msra.mxu0 %v1658
  %2892 = vmatpush.msra.mxu0 %v1654
  %2893 = vmatpush.msra.mxu0 %v1650
  %2894 = vmatpush.msra.mxu0 %v1646
  %2895 = vmatpush.msra.mxu0 %v1642
  %2896 = vmatpush.msra.mxu0 %v1638
  %2897 = vmatpush.msra.mxu0 %v1634
  %2898 = vmatpush.msra.mxu0 %v1630
  %2899 = vmatpush.msra.mxu0 %v1626
  %2900 = vmatpush.msra.mxu0 %v1622
  %2901 = vmatpush.msra.mxu0 %v1618
  %2902 = vmatpush.msra.mxu0 %v1614
  %2903 = vmatmul.f32.gmra.mxu0 %v2845
  %v2904 = vpop.f32.mrf.mxu0
  %v2905 = vadd.f32 0.0, %v2904
  %2906 = vdwg.mxu0
  %2907 = vmatpush.msra.mxu0 %v1675
  %2908 = vmatpush.msra.mxu0 %v1671
  %2909 = vmatpush.msra.mxu0 %v1667
  %2910 = vmatpush.msra.mxu0 %v1663
  %2911 = vmatpush.msra.mxu0 %v1659
  %2912 = vmatpush.msra.mxu0 %v1655
  %2913 = vmatpush.msra.mxu0 %v1651
  %2914 = vmatpush.msra.mxu0 %v1647
  %2915 = vmatpush.msra.mxu0 %v1643
  %2916 = vmatpush.msra.mxu0 %v1639
  %2917 = vmatpush.msra.mxu0 %v1635
  %2918 = vmatpush.msra.mxu0 %v1631
  %2919 = vmatpush.msra.mxu0 %v1627
  %2920 = vmatpush.msra.mxu0 %v1623
  %2921 = vmatpush.msra.mxu0 %v1619
  %2922 = vmatpush.msra.mxu0 %v1615
  %2923 = vmatmul.f32.gmra.mxu0 %v2845
  %v2924 = vpop.f32.mrf.mxu0
  %v2925 = vadd.f32 0.0, %v2924
  %2926 = vdwg.mxu0
  %v2931 = vrot.slane %v2885, 6
  %v2932 = vrot.slane %v2905, 4
  %v2933 = vrot.slane %v2925, 2
  %v2934 = vsel %vm240, %v2865, %v2931
  %v2935 = vsel %vm242, %v2932, %v2933
  %v2936 = vsel %vm244, %v2934, %v2935
  %v2938 = vadd.f32 %v1856, %v2936
  %v2939 = vxor.u32 %v2938, 2147483648
  %v2940 = vmul.f32 %v2939, 1.442695
  %v2941 = vpow.pop %v2940
  %v2942 = vadd.f32 %v2941, 1.0
  %v2943 = vrcp.pop %v2942
  %v2944 = vmul.f32 %v2942, %v2943
  %v2945 = vsub.f32 1.0, %v2944
  %v2946 = vmul.f32 %v2943, %v2945
  %v2947 = vadd.f32 %v2943, %v2946
  %vm2948 = vweird.f32 %v2942
  %vm2949 = vweird.f32 %v2943
  %vm2950 = vmor %vm2948, %vm2949
  %v2951 = vsel %vm2950, %v2943, %v2947
  %v2952 = vand.u32 2147483647, %v2942
  %vm2953 = vcmp.eq.f32.partialorder %v2952, 8.507059e+37
  %v2954 = vand.u32 %v2942, 2147483648
  %v2955 = vor.u32 1.1754944e-38, %v2954
  %v2956 = vsel %vm2953, %v2955, %v2951
  %v2957 = vmul.f32 1.0, %v2956
  %v2959 = vrot.slane %v2938, 2
  %v2961 = vxor.u32 %v2959, 2147483648
  %v2962 = vmul.f32 %v2961, 1.442695
  %v2963 = vpow.pop %v2962
  %v2964 = vadd.f32 %v2963, 1.0
  %v2965 = vrcp.pop %v2964
  %v2966 = vmul.f32 %v2964, %v2965
  %v2967 = vsub.f32 1.0, %v2966
  %v2968 = vmul.f32 %v2965, %v2967
  %v2969 = vadd.f32 %v2965, %v2968
  %vm2970 = vweird.f32 %v2964
  %vm2971 = vweird.f32 %v2965
  %vm2972 = vmor %vm2970, %vm2971
  %v2973 = vsel %vm2972, %v2965, %v2969
  %v2974 = vand.u32 2147483647, %v2964
  %vm2975 = vcmp.eq.f32.partialorder %v2974, 8.507059e+37
  %v2976 = vand.u32 %v2964, 2147483648
  %v2977 = vor.u32 1.1754944e-38, %v2976
  %v2978 = vsel %vm2975, %v2977, %v2973
  %v2979 = vmul.f32 1.0, %v2978
  %v2980 = vrot.slane %v2938, 4
  %v2982 = vtanh.pop %v2980
  %v2983 = vrot.slane %v2938, 6
  %v2985 = vxor.u32 %v2983, 2147483648
  %v2986 = vmul.f32 %v2985, 1.442695
  %v2987 = vpow.pop %v2986
  %v2988 = vadd.f32 %v2987, 1.0
  %v2989 = vrcp.pop %v2988
  %v2990 = vmul.f32 %v2988, %v2989
  %v2991 = vsub.f32 1.0, %v2990
  %v2992 = vmul.f32 %v2989, %v2991
  %v2993 = vadd.f32 %v2989, %v2992
  %vm2994 = vweird.f32 %v2988
  %vm2995 = vweird.f32 %v2989
  %vm2996 = vmor %vm2994, %vm2995
  %v2997 = vsel %vm2996, %v2989, %v2993
  %v2998 = vand.u32 2147483647, %v2988
  %vm2999 = vcmp.eq.f32.partialorder %v2998, 8.507059e+37
  %v3000 = vand.u32 %v2988, 2147483648
  %v3001 = vor.u32 1.1754944e-38, %v3000
  %v3002 = vsel %vm2999, %v3001, %v2997
  %v3003 = vmul.f32 1.0, %v3002
  %v3004 = vmul.f32 %v2979, %v2843
  %v3005 = vmul.f32 %v2957, %v2982
  %v3006 = vadd.f32 %v3004, %v3005
  %v3007 = vtanh.pop %v3006
  %v3008 = vmul.f32 %v3003, %v3007
  %3009 = vst.msk [vmem:[%s1430] sm:$0x3] %vm446, %v3008
  %3010 = vmatpush.msra.mxu0 %v1672
  %3011 = vmatpush.msra.mxu0 %v1668
  %3012 = vmatpush.msra.mxu0 %v1664
  %3013 = vmatpush.msra.mxu0 %v1660
  %3014 = vmatpush.msra.mxu0 %v1656
  %3015 = vmatpush.msra.mxu0 %v1652
  %3016 = vmatpush.msra.mxu0 %v1648
  %3017 = vmatpush.msra.mxu0 %v1644
  %3018 = vmatpush.msra.mxu0 %v1640
  %3019 = vmatpush.msra.mxu0 %v1636
  %3020 = vmatpush.msra.mxu0 %v1632
  %3021 = vmatpush.msra.mxu0 %v1628
  %3022 = vmatpush.msra.mxu0 %v1624
  %3023 = vmatpush.msra.mxu0 %v1620
  %3024 = vmatpush.msra.mxu0 %v1616
  %3025 = vmatpush.msra.mxu0 %v1612
  %3026 = vmatmul.f32.gmra.mxu0 %v3008
  %v3027 = vpop.f32.mrf.mxu0
  %v3028 = vadd.f32 0.0, %v3027
  %3029 = vdwg.mxu0
  %3030 = vmatpush.msra.mxu0 %v1673
  %3031 = vmatpush.msra.mxu0 %v1669
  %3032 = vmatpush.msra.mxu0 %v1665
  %3033 = vmatpush.msra.mxu0 %v1661
  %3034 = vmatpush.msra.mxu0 %v1657
  %3035 = vmatpush.msra.mxu0 %v1653
  %3036 = vmatpush.msra.mxu0 %v1649
  %3037 = vmatpush.msra.mxu0 %v1645
  %3038 = vmatpush.msra.mxu0 %v1641
  %3039 = vmatpush.msra.mxu0 %v1637
  %3040 = vmatpush.msra.mxu0 %v1633
  %3041 = vmatpush.msra.mxu0 %v1629
  %3042 = vmatpush.msra.mxu0 %v1625
  %3043 = vmatpush.msra.mxu0 %v1621
  %3044 = vmatpush.msra.mxu0 %v1617
  %3045 = vmatpush.msra.mxu0 %v1613
  %3046 = vmatmul.f32.gmra.mxu0 %v3008
  %v3047 = vpop.f32.mrf.mxu0
  %v3048 = vadd.f32 0.0, %v3047
  %3049 = vdwg.mxu0
  %3050 = vmatpush.msra.mxu0 %v1674
  %3051 = vmatpush.msra.mxu0 %v1670
  %3052 = vmatpush.msra.mxu0 %v1666
  %3053 = vmatpush.msra.mxu0 %v1662
  %3054 = vmatpush.msra.mxu0 %v1658
  %3055 = vmatpush.msra.mxu0 %v1654
  %3056 = vmatpush.msra.mxu0 %v1650
  %3057 = vmatpush.msra.mxu0 %v1646
  %3058 = vmatpush.msra.mxu0 %v1642
  %3059 = vmatpush.msra.mxu0 %v1638
  %3060 = vmatpush.msra.mxu0 %v1634
  %3061 = vmatpush.msra.mxu0 %v1630
  %3062 = vmatpush.msra.mxu0 %v1626
  %3063 = vmatpush.msra.mxu0 %v1622
  %3064 = vmatpush.msra.mxu0 %v1618
  %3065 = vmatpush.msra.mxu0 %v1614
  %3066 = vmatmul.f32.gmra.mxu0 %v3008
  %v3067 = vpop.f32.mrf.mxu0
  %v3068 = vadd.f32 0.0, %v3067
  %3069 = vdwg.mxu0
  %3070 = vmatpush.msra.mxu0 %v1675
  %3071 = vmatpush.msra.mxu0 %v1671
  %3072 = vmatpush.msra.mxu0 %v1667
  %3073 = vmatpush.msra.mxu0 %v1663
  %3074 = vmatpush.msra.mxu0 %v1659
  %3075 = vmatpush.msra.mxu0 %v1655
  %3076 = vmatpush.msra.mxu0 %v1651
  %3077 = vmatpush.msra.mxu0 %v1647
  %3078 = vmatpush.msra.mxu0 %v1643
  %3079 = vmatpush.msra.mxu0 %v1639
  %3080 = vmatpush.msra.mxu0 %v1635
  %3081 = vmatpush.msra.mxu0 %v1631
  %3082 = vmatpush.msra.mxu0 %v1627
  %3083 = vmatpush.msra.mxu0 %v1623
  %3084 = vmatpush.msra.mxu0 %v1619
  %3085 = vmatpush.msra.mxu0 %v1615
  %3086 = vmatmul.f32.gmra.mxu0 %v3008
  %v3087 = vpop.f32.mrf.mxu0
  %v3088 = vadd.f32 0.0, %v3087
  %3089 = vdwg.mxu0
  %v3094 = vrot.slane %v3048, 6
  %v3095 = vrot.slane %v3068, 4
  %v3096 = vrot.slane %v3088, 2
  %v3097 = vsel %vm240, %v3028, %v3094
  %v3098 = vsel %vm242, %v3095, %v3096
  %v3099 = vsel %vm244, %v3097, %v3098
  %v3101 = vadd.f32 %v1860, %v3099
  %v3102 = vxor.u32 %v3101, 2147483648
  %v3103 = vmul.f32 %v3102, 1.442695
  %v3104 = vpow.pop %v3103
  %v3105 = vadd.f32 %v3104, 1.0
  %v3106 = vrcp.pop %v3105
  %v3107 = vmul.f32 %v3105, %v3106
  %v3108 = vsub.f32 1.0, %v3107
  %v3109 = vmul.f32 %v3106, %v3108
  %v3110 = vadd.f32 %v3106, %v3109
  %vm3111 = vweird.f32 %v3105
  %vm3112 = vweird.f32 %v3106
  %vm3113 = vmor %vm3111, %vm3112
  %v3114 = vsel %vm3113, %v3106, %v3110
  %v3115 = vand.u32 2147483647, %v3105
  %vm3116 = vcmp.eq.f32.partialorder %v3115, 8.507059e+37
  %v3117 = vand.u32 %v3105, 2147483648
  %v3118 = vor.u32 1.1754944e-38, %v3117
  %v3119 = vsel %vm3116, %v3118, %v3114
  %v3120 = vmul.f32 1.0, %v3119
  %v3122 = vrot.slane %v3101, 2
  %v3124 = vxor.u32 %v3122, 2147483648
  %v3125 = vmul.f32 %v3124, 1.442695
  %v3126 = vpow.pop %v3125
  %v3127 = vadd.f32 %v3126, 1.0
  %v3128 = vrcp.pop %v3127
  %v3129 = vmul.f32 %v3127, %v3128
  %v3130 = vsub.f32 1.0, %v3129
  %v3131 = vmul.f32 %v3128, %v3130
  %v3132 = vadd.f32 %v3128, %v3131
  %vm3133 = vweird.f32 %v3127
  %vm3134 = vweird.f32 %v3128
  %vm3135 = vmor %vm3133, %vm3134
  %v3136 = vsel %vm3135, %v3128, %v3132
  %v3137 = vand.u32 2147483647, %v3127
  %vm3138 = vcmp.eq.f32.partialorder %v3137, 8.507059e+37
  %v3139 = vand.u32 %v3127, 2147483648
  %v3140 = vor.u32 1.1754944e-38, %v3139
  %v3141 = vsel %vm3138, %v3140, %v3136
  %v3142 = vmul.f32 1.0, %v3141
  %v3143 = vrot.slane %v3101, 4
  %v3145 = vtanh.pop %v3143
  %v3146 = vrot.slane %v3101, 6
  %v3148 = vxor.u32 %v3146, 2147483648
  %v3149 = vmul.f32 %v3148, 1.442695
  %v3150 = vpow.pop %v3149
  %v3151 = vadd.f32 %v3150, 1.0
  %v3152 = vrcp.pop %v3151
  %v3153 = vmul.f32 %v3151, %v3152
  %v3154 = vsub.f32 1.0, %v3153
  %v3155 = vmul.f32 %v3152, %v3154
  %v3156 = vadd.f32 %v3152, %v3155
  %vm3157 = vweird.f32 %v3151
  %vm3158 = vweird.f32 %v3152
  %vm3159 = vmor %vm3157, %vm3158
  %v3160 = vsel %vm3159, %v3152, %v3156
  %v3161 = vand.u32 2147483647, %v3151
  %vm3162 = vcmp.eq.f32.partialorder %v3161, 8.507059e+37
  %v3163 = vand.u32 %v3151, 2147483648
  %v3164 = vor.u32 1.1754944e-38, %v3163
  %v3165 = vsel %vm3162, %v3164, %v3160
  %v3166 = vmul.f32 1.0, %v3165
  %v3167 = vmul.f32 %v3142, %v3006
  %v3168 = vmul.f32 %v3120, %v3145
  %v3169 = vadd.f32 %v3167, %v3168
  %v3170 = vtanh.pop %v3169
  %v3171 = vmul.f32 %v3166, %v3170
  %3172 = vst.msk [vmem:[%s1594] sm:$0x3] %vm446, %v3171
  %v3173 = vld [vmem:[#allocation2] sm:$0x3]
  %v3174 = vld [vmem:[%s610] sm:$0x3]
  %v3175 = vld [vmem:[%s774] sm:$0x3]
  %v3176 = vld [vmem:[%s938] sm:$0x3]
  %v3177 = vld [vmem:[%s1102] sm:$0x3]
  %v3178 = vld [vmem:[%s1266] sm:$0x3]
  %v3179 = vld [vmem:[%s1430] sm:$0x3]
  %v3180 = vld [vmem:[%s1594] sm:$0x3]
  %v3182 = vrot.slane %v3173, 1
  %v3185 = vrot.slane %v3174, 1
  %v3187 = vrot.slane %v3175, 1
  %v3189 = vrot.slane %v3176, 1
  %v3191 = vrot.slane %v3177, 1
  %v3193 = vrot.slane %v3178, 1
  %v3195 = vrot.slane %v3179, 1
  %v3197 = vrot.slane %v3180, 1
  %v3198 = vperm.slane %v3174, 0
  %v3199 = vperm.slane %v3185, 0
  %v3202 = vperm.slane %v3175, 0
  %v3203 = vperm.slane %v3187, 0
  %v3206 = vperm.slane %v3176, 0
  %v3207 = vperm.slane %v3189, 0
  %v3210 = vperm.slane %v3177, 0
  %v3211 = vperm.slane %v3191, 0
  %v3214 = vperm.slane %v3178, 0
  %v3215 = vperm.slane %v3193, 0
  %v3218 = vperm.slane %v3179, 0
  %v3219 = vperm.slane %v3195, 0
  %v3222 = vperm.slane %v3180, 0
  %v3223 = vperm.slane %v3197, 0
  %vm3226 = vcmask 1040384
  %v3227 = vsel %vm3226, %v3173, %v3198
  %v3228 = vsel %vm3226, %v3182, %v3199
  %v3229 = vsel %vm240, %v3227, %v3202
  %v3230 = vsel %vm240, %v3228, %v3203
  %vm3231 = vcmask 1042432
  %v3232 = vsel %vm3231, %v3229, %v3206
  %v3233 = vsel %vm3231, %v3230, %v3207
  %v3234 = vsel %vm244, %v3232, %v3210
  %v3235 = vsel %vm244, %v3233, %v3211
  %vm3236 = vcmask 1044480
  %v3237 = vsel %vm3236, %v3234, %v3214
  %v3238 = vsel %vm3236, %v3235, %v3215
  %v3239 = vsel %vm248, %v3237, %v3218
  %v3240 = vsel %vm248, %v3238, %v3219
  %vm3241 = vcmask 1046528
  %v3242 = vsel %vm3241, %v3239, %v3222
  %v3243 = vsel %vm3241, %v3240, %v3223
  %v3244 = vld [vmem:[%s3] sm:$0xff]
  %v3245 = vld [vmem:[%s3 + $0x8] sm:$0xff]
  %v3246 = vld [vmem:[%s3 + $0x10] sm:$0xff]
  %v3247 = vld [vmem:[%s3 + $0x18] sm:$0xff]
  %v3248 = vld [vmem:[%s3 + $0x20] sm:$0x1]
  %v3249 = vmax.f32 %v3242, 0.0
  %v3250 = vmax.f32 %v3243, 0.0
  %v3251 = vperm.slane %v3248, 0
  %v3253 = vsel %vm1720, %v3249, 0
  %v3256 = vsel %vm1720, %v3250, 0
  %3258 = vmatpush.msra.mxu0 0.0
  %3259 = vmatpush.msra.mxu0 0.0
  %3260 = vmatpush.msra.mxu0 0.0
  %3261 = vmatpush.msra.mxu0 0.0
  %3262 = vmatpush.msra.mxu0 0.0
  %3263 = vmatpush.msra.mxu0 0.0
  %3264 = vmatpush.msra.mxu0 0.0
  %3265 = vmatpush.msra.mxu0 0.0
  %3266 = vmatpush.msra.mxu0 0.0
  %3267 = vmatpush.msra.mxu0 0.0
  %3268 = vmatpush.msra.mxu0 0.0
  %3269 = vmatpush.msra.mxu0 0.0
  %3270 = vmatpush.msra.mxu0 %v3247
  %3271 = vmatpush.msra.mxu0 %v3246
  %3272 = vmatpush.msra.mxu0 %v3245
  %3273 = vmatpush.msra.mxu0 %v3244
  %3274 = vmatmul.f32.gmra.mxu0 %v3253
  %v3275 = vpop.f32.mrf.mxu0
  %v3276 = vadd.f32 %v3251, %v3275
  %3277 = vmatmul.f32.gmra.mxu0 %v3256
  %v3278 = vpop.f32.mrf.mxu0
  %v3279 = vadd.f32 %v3251, %v3278
  %3280 = vdwg.mxu0
  %v3281 = vld [vmem:[%s3 + $0x28] sm:$0xff]
  %v3282 = vld [vmem:[%s3 + $0x30] sm:$0xff]
  %v3283 = vld [vmem:[%s3 + $0x38] sm:$0x1]
  %v3284 = vmax.f32 %v3276, 0.0
  %v3285 = vmax.f32 %v3279, 0.0
  %v3286 = vperm.slane %v3283, 0
  %vm3287 = vcmask 130048
  %v3289 = vsel %vm3287, %v3284, 0
  %v3292 = vsel %vm3287, %v3285, 0
  %3294 = vmatpush.msra.mxu0 0.0
  %3295 = vmatpush.msra.mxu0 0.0
  %3296 = vmatpush.msra.mxu0 0.0
  %3297 = vmatpush.msra.mxu0 0.0
  %3298 = vmatpush.msra.mxu0 0.0
  %3299 = vmatpush.msra.mxu0 0.0
  %3300 = vmatpush.msra.mxu0 0.0
  %3301 = vmatpush.msra.mxu0 0.0
  %3302 = vmatpush.msra.mxu0 0.0
  %3303 = vmatpush.msra.mxu0 0.0
  %3304 = vmatpush.msra.mxu0 0.0
  %3305 = vmatpush.msra.mxu0 0.0
  %3306 = vmatpush.msra.mxu0 0.0
  %3307 = vmatpush.msra.mxu0 0.0
  %3308 = vmatpush.msra.mxu0 %v3282
  %3309 = vmatpush.msra.mxu0 %v3281
  %3310 = vmatmul.f32.gmra.mxu0 %v3289
  %v3311 = vpop.f32.mrf.mxu0
  %v3312 = vadd.f32 %v3286, %v3311
  %3313 = vmatmul.f32.gmra.mxu0 %v3292
  %v3314 = vpop.f32.mrf.mxu0
  %v3315 = vadd.f32 %v3286, %v3314
  %3316 = vdwg.mxu0
  %v3317 = vmul.f32 %v3312, 1.442695
  %v3318 = vpow.pop %v3317
  %v3319 = vmul.f32 %v3315, 1.442695
  %v3320 = vpow.pop %v3319
  %3323 = vrot.lane.b32.xlu0 %v3318, 127
  %v3324 = vpop.permute.xlu0 %3323
  %3325 = vrot.lane.b32.xlu0 %v3320, 127
  %v3326 = vpop.permute.xlu0 %3325
  %v3329 = vmul.f32 %v3312, %v3324
  %v3330 = vmul.f32 %v3315, %v3326
  %vm3331 = vcmask 7168
  %3332 = vst.msk [vmem:[%s4] sm:$0xff] %vm3331, %v3329
  %3333 = vst.msk [vmem:[%s4 + $0x8] sm:$0xff] %vm3331, %v3330
  // Predicated region
  $region18: #{forward_pallas.1} parent=0 // pred_check
    _
  $region19: #{forward_pallas.1} parent=0 // pred_check_branch
    %3335 = sbr.rel (0) target = $region21
  $region20: #{forward_pallas.1} parent=0 // pred_region
    _
  $region21: #{forward_pallas.1} parent=0 // pred_fallthru
    _
  // Predicated region
  $region22: #{forward_pallas.1} parent=0 // pred_check
    _
  $region23: #{forward_pallas.1} parent=0 // pred_check_branch
    %3337 = sbr.rel (0) target = $region25
  $region24: #{forward_pallas.1} parent=0 // pred_region
    _
  $region25: #{forward_pallas.1} parent=0 // pred_fallthru
    _

</llo_original>
